<compile_context>
chip_gen: v6e
topology: v6e:2x2x1
jax: 0.10.0
libtpu: 0.0.40
codegen_flags: <defaults>
</compile_context>

<pallas_src>
import functools

import jax
import jax.numpy as jnp
from jax.experimental import pallas as pl
from jax.experimental.pallas import tpu as pltpu

_LANE = 128


# ---------------------------------------------------------------------------
# helpers
# ---------------------------------------------------------------------------

def _round_up(x, m):
    return (x + m - 1) // m * m


def _pad_axis(a, size, axis):
    if size == a.shape[axis]:
        return a
    pad = [(0, 0)] * a.ndim
    pad[axis] = (0, size - a.shape[axis])
    return jnp.pad(a, pad)


def bn_fold(gamma, beta, mean, var, eps=1e-5):
    scale = gamma / jnp.sqrt(var + eps)
    bias = beta - mean * scale
    return scale, bias


def _pad_bn(vec, size):
    return _pad_axis(vec.astype(jnp.float32), size, 0).reshape(1, size)


def _vmem_limit_bytes():
    """Generation-aware scoped-VMEM budget (~75% of physical, capped)."""
    cap = None
    try:
        cap = getattr(pltpu.get_tpu_info(), "vmem_capacity_bytes", None)
    except Exception:
        cap = None
    if not cap:
        cap = 64 * 1024 * 1024          # conservative fallback (v7x-sized)
    return int(min(cap * 3 // 4, 112 * 1024 * 1024))


_BUFFERED_OK = None


def _buffered_supported():
    """Probe once whether pipeline_mode=pl.Buffered(1) is accepted on this JAX/TPU."""
    global _BUFFERED_OK
    if _BUFFERED_OK is None:
        try:
            def _k(c_ref, x_ref, o_ref):
                o_ref[...] = x_ref[...] + c_ref[...]

            out = pl.pallas_call(
                _k,
                out_shape=jax.ShapeDtypeStruct((8, 128), jnp.float32),
                grid=(1,),
                in_specs=[
                    pl.BlockSpec((8, 128), lambda i: (0, 0),
                                 pipeline_mode=pl.Buffered(1)),
                    pl.BlockSpec((8, 128), lambda i: (0, 0)),
                ],
                out_specs=pl.BlockSpec((8, 128), lambda i: (0, 0)),
            )(jnp.ones((8, 128), jnp.float32), jnp.ones((8, 128), jnp.float32))
            jax.block_until_ready(out)
            _BUFFERED_OK = bool(jnp.all(out == 2.0))
        except Exception:
            _BUFFERED_OK = False
    return _BUFFERED_OK


def _const_spec(shape):
    """BlockSpec for a block whose index never changes (single-buffered if possible)."""
    index_map = lambda *_: (0,) * len(shape)
    if _buffered_supported():
        return pl.BlockSpec(shape, index_map, pipeline_mode=pl.Buffered(1))
    return pl.BlockSpec(shape, index_map)


# ---------------------------------------------------------------------------
# Pallas kernels
# ---------------------------------------------------------------------------

def _pw_res_kernel(h_ref, r_ref, w3_ref, s3_ref, b3_ref, o_ref):
    """conv3 (1x1) + bn3 + identity-residual add + relu."""
    acc = jnp.dot(h_ref[...], w3_ref[...], preferred_element_type=jnp.float32)
    acc = acc * s3_ref[...] + b3_ref[...] + r_ref[...].astype(jnp.float32)
    o_ref[...] = jnp.maximum(acc, 0.0).astype(o_ref.dtype)


def _pw_ds_kernel(h_ref, x_ref, w3_ref, s3_ref, b3_ref, wd_ref, sd_ref, bd_ref, o_ref):
    """conv3 (1x1) + bn3 + fused downsample shortcut (1x1 conv + bn) + relu."""
    acc = jnp.dot(h_ref[...], w3_ref[...], preferred_element_type=jnp.float32)
    acc = acc * s3_ref[...] + b3_ref[...]
    sc = jnp.dot(x_ref[...], wd_ref[...], preferred_element_type=jnp.float32)
    acc = acc + sc * sd_ref[...] + bd_ref[...]
    o_ref[...] = jnp.maximum(acc, 0.0).astype(o_ref.dtype)


def _conv12_kernel(x_hbm, w1_ref, s1_ref, b1_ref, w2_ref, s2_ref, b2_ref,
                   o_ref, xbuf, h1buf, col_ref, sem, *, H, W, stride, TR, Wo):
    """Fused 1x1 conv + BN + ReLU  ->  3x3 conv (pad=1, stride) + BN + ReLU.

    Grid = (N, row_tiles).  The overlapping (halo) input row window is fetched with a
    manual, double-buffered DMA: at tile ti the window for tile ti+1 (same batch n) is
    started before waiting on / computing tile ti.
    """
    n = pl.program_id(0)
    ti = pl.program_id(1)
    n_rowtiles = pl.num_programs(1)

    rows_in = xbuf.shape[1]            # (TR - 1) * stride + 3 (halo window)
    Wp = xbuf.shape[2]
    cin_p = xbuf.shape[3]
    hidden_p = w1_ref.shape[1]

    r0 = ti * (TR * stride)
    slot = ti & 1

    def window_copy(tile_idx, s):
        r = tile_idx * (TR * stride)
        return pltpu.make_async_copy(
            x_hbm.at[n, pl.ds(r, rows_in)], xbuf.at[s], sem.at[s])

    # Prime the pipeline for this batch element, prefetch the next tile, wait current.
    @pl.when(ti == 0)
    def _():
        window_copy(0, 0).start()

    @pl.when(ti + 1 < n_rowtiles)
    def _():
        window_copy(ti + 1, 1 - slot).start()

    window_copy(ti, slot).wait()

    # conv1 (1x1) + bn1 + relu on the halo tile (bf16 MXU, f32 accumulate/epilogue).
    x2d = xbuf[slot].reshape(rows_in * Wp, cin_p)
    h1 = jnp.dot(x2d, w1_ref[...], preferred_element_type=jnp.float32)
    h1 = jnp.maximum(h1 * s1_ref[...] + b1_ref[...], 0.0)
    h1buf[...] = h1.reshape(rows_in, Wp, hidden_p).astype(h1buf.dtype)

    # Targeted zeroing of the conv-padding border (conv1 of a zero pixel = relu(b1)!=0).
    # Only columns 0 and W+1 and (at most) the first/last window row are ever read by
    # the 3x3 im2col, so slice stores replace the old full-tile mask multiply.
    zcol = jnp.zeros((rows_in, 1, hidden_p), h1buf.dtype)
    h1buf[:, 0:1, :] = zcol                       # left pad column
    h1buf[:, W + 1:W + 2, :] = zcol               # right pad column
    zrow = jnp.zeros((Wp, hidden_p), h1buf.dtype)

    @pl.when(r0 == 0)
    def _():
        h1buf[0] = zrow                            # top pad row (first tile only)

    @pl.when(r0 + rows_in - 1 > H)
    def _():
        h1buf[rows_in - 1] = zrow                  # bottom pad row (last tile only)

    # im2col: stage the 9 shifted patches contiguously -> one K = 9*hidden_p matmul.
    h1v = h1buf[...]
    for tap in range(9):
        dy, dx = tap // 3, tap % 3
        if stride == 1:
            patch = h1v[dy:dy + TR, dx:dx + Wo, :]
        else:
            patch = h1v[dy:dy + (TR - 1) * stride + 1:stride,
                        dx:dx + (Wo - 1) * stride + 1:stride, :]
        col_ref[:, tap * hidden_p:(tap + 1) * hidden_p] = patch.reshape(TR * Wo, hidden_p)

    h2 = jnp.dot(col_ref[...], w2_ref[...], preferred_element_type=jnp.float32)
    h2 = jnp.maximum(h2 * s2_ref[...] + b2_ref[...], 0.0)
    o_ref[0] = h2.reshape(TR, Wo, hidden_p).astype(o_ref.dtype)


# ---------------------------------------------------------------------------
# tile-size heuristics
# ---------------------------------------------------------------------------

def _pick_row_tile(Ho, Wo, Wp_e, cin_p, hidden_p, stride, vmem_limit):
    """Largest divisor of Ho whose conv12 working set fits the VMEM budget."""
    budget = int(vmem_limit * 0.55)
    const_bytes = (cin_p * hidden_p + 9 * hidden_p * hidden_p + 4 * hidden_p) * 2 * 2
    best = 1
    for tr in range(1, Ho + 1):
        if Ho % tr:
            continue
        rows_in = (tr - 1) * stride + 3
        m_out = tr * Wo
        dyn = (2 * rows_in * Wp_e * cin_p * 2       # xbuf (double buffer, bf16)
               + rows_in * Wp_e * hidden_p * 2      # h1buf (bf16)
               + rows_in * Wp_e * hidden_p * 4      # h1 f32 value
               + m_out * 9 * hidden_p * 2           # col_ref (bf16)
               + m_out * hidden_p * 4               # h2 f32 value
               + 2 * m_out * hidden_p * 2)          # output block (double buffer, bf16)
        if const_bytes + dyn <= budget and m_out <= 8192:
            best = tr
    return best


def _pick_tm(M, target):
    """Row tile for the 1x1 stage: divides M (no padding copy), >=2 tiles when possible."""
    cap = min(target, M)
    if M >= 16:
        cap = min(cap, -(-M // 2))
    cap = max(8, cap - cap % 8)
    for cand in range(cap, 7, -8):
        if M % cand == 0:
            return cand
    return min(target, _round_up(M, 8))


# ---------------------------------------------------------------------------
# Pallas wrappers
# ---------------------------------------------------------------------------

def conv12_fused(x_nhwc, w1, s1, b1, w2_flat, s2, b2, *, stride, vmem_limit):
    """Fused conv1(1x1)+bn1+relu -> conv2(3x3,pad=1,stride)+bn2+relu.

    x_nhwc: (N, H, W, cin_p) bf16 (cin_p % 128 == 0).  Returns (N, Ho, Wo, hidden_p) bf16.
    """
    N, H, W, cin_p = x_nhwc.shape
    hidden_p = w1.shape[1]
    Ho = (H + 2 - 3) // stride + 1
    Wo = (W + 2 - 3) // stride + 1
    Wp_e = _round_up(W + 2, 8)                   # sublane-friendly padded width

    TR = _pick_row_tile(Ho, Wo, Wp_e, cin_p, hidden_p, stride, vmem_limit)
    n_tiles = Ho // TR
    rows_in = (TR - 1) * stride + 3
    Hp_total = max(H + 2, (Ho - 1) * stride + 3)
    x_pad = jnp.pad(x_nhwc,
                    ((0, 0), (1, Hp_total - H - 1), (1, Wp_e - W - 1), (0, 0)))

    kernel = functools.partial(_conv12_kernel, H=H, W=W, stride=stride, TR=TR, Wo=Wo)
    out = pl.pallas_call(
        kernel,
        out_shape=jax.ShapeDtypeStruct((N, Ho, Wo, hidden_p), jnp.bfloat16),
        grid=(N, n_tiles),                       # batch parallel (megacore), tiles arbitrary
        in_specs=[
            pl.BlockSpec(memory_space=pl.ANY),   # x stays in HBM; manual halo DMA
            _const_spec((cin_p, hidden_p)),
            _const_spec((1, hidden_p)),
            _const_spec((1, hidden_p)),
            _const_spec((9 * hidden_p, hidden_p)),
            _const_spec((1, hidden_p)),
            _const_spec((1, hidden_p)),
        ],
        out_specs=pl.BlockSpec((1, TR, Wo, hidden_p), lambda n, t: (n, t, 0, 0)),
        scratch_shapes=[
            pltpu.VMEM((2, rows_in, Wp_e, cin_p), jnp.bfloat16),   # halo double buffer
            pltpu.VMEM((rows_in, Wp_e, hidden_p), jnp.bfloat16),   # h1 staging
            pltpu.VMEM((TR * Wo, 9 * hidden_p), jnp.bfloat16),     # im2col staging
            pltpu.SemaphoreType.DMA((2,)),
        ],
        compiler_params=pltpu.CompilerParams(
            dimension_semantics=("parallel", "arbitrary"),
            vmem_limit_bytes=vmem_limit),
    )(x_pad, w1, s1, b1, w2_flat, s2, b2)
    return out


def conv3_residual(h2d, res2d, w3, s3, b3, *, w_ds=None, sd=None, bd=None,
                   out_dtype=jnp.float32, vmem_limit):
    """y = relu(h2d @ w3 * s3 + b3 + shortcut), shortcut fused in-kernel.

    If w_ds is given: shortcut = res2d @ w_ds * sd + bd (downsample branch).
    Otherwise:        shortcut = res2d (identity branch).
    """
    M, hidden_p = h2d.shape
    res_c = res2d.shape[1]
    out_c_p = w3.shape[1]
    tm = _pick_tm(M, 1024 if vmem_limit >= (80 << 20) else 512)
    M_p = _round_up(M, tm)
    if M_p != M:
        h2d = jnp.pad(h2d, ((0, M_p - M), (0, 0)))
        res2d = jnp.pad(res2d, ((0, M_p - M), (0, 0)))

    row = lambda i: (i, 0)
    if w_ds is not None:
        kernel = _pw_ds_kernel
        in_specs = [pl.BlockSpec((tm, hidden_p), row),
                    pl.BlockSpec((tm, res_c), row),
                    _const_spec((hidden_p, out_c_p)),
                    _const_spec((1, out_c_p)),
                    _const_spec((1, out_c_p)),
                    _const_spec((res_c, out_c_p)),
                    _const_spec((1, out_c_p)),
                    _const_spec((1, out_c_p))]
        args = (h2d, res2d, w3, s3, b3, w_ds, sd, bd)
    else:
        kernel = _pw_res_kernel
        in_specs = [pl.BlockSpec((tm, hidden_p), row),
                    pl.BlockSpec((tm, res_c), row),
                    _const_spec((hidden_p, out_c_p)),
                    _const_spec((1, out_c_p)),
                    _const_spec((1, out_c_p))]
        args = (h2d, res2d, w3, s3, b3)

    out = pl.pallas_call(
        kernel,
        out_shape=jax.ShapeDtypeStruct((M_p, out_c_p), out_dtype),
        grid=(M_p // tm,),
        in_specs=in_specs,
        out_specs=pl.BlockSpec((tm, out_c_p), row),
        compiler_params=pltpu.CompilerParams(
            dimension_semantics=("parallel",),
            vmem_limit_bytes=vmem_limit),
    )(*args)
    return out[:M] if M_p != M else out


# ---------------------------------------------------------------------------
# Module forward
# ---------------------------------------------------------------------------

def wide_bottleneck_forward(x_nchw, params, *, stride=1, downsample=True):
    # NCHW (PyTorch API parity) <-> NHWC at the boundary.
    x = jnp.transpose(x_nchw, (0, 2, 3, 1))
    N, H, W, cin = x.shape
    hidden = params["w1"].shape[1]
    out_c = params["w3"].shape[1]
    cin_p = _round_up(cin, _LANE)
    hidden_p = _round_up(hidden, _LANE)
    out_c_p = _round_up(out_c, _LANE)
    bf16 = jnp.bfloat16
    vmem_limit = _vmem_limit_bytes()

    xb = _pad_axis(x, cin_p, 3).astype(bf16)

    w1 = _pad_axis(_pad_axis(params["w1"], cin_p, 0), hidden_p, 1).astype(bf16)
    w2 = _pad_axis(_pad_axis(params["w2"], hidden_p, 2), hidden_p, 3)
    w2 = w2.reshape(9 * hidden_p, hidden_p).astype(bf16)
    w3 = _pad_axis(_pad_axis(params["w3"], hidden_p, 0), out_c_p, 1).astype(bf16)

    s1, b1 = bn_fold(*params["bn1"]); s1, b1 = _pad_bn(s1, hidden_p), _pad_bn(b1, hidden_p)
    s2, b2 = bn_fold(*params["bn2"]); s2, b2 = _pad_bn(s2, hidden_p), _pad_bn(b2, hidden_p)
    s3, b3 = bn_fold(*params["bn3"]); s3, b3 = _pad_bn(s3, out_c_p), _pad_bn(b3, out_c_p)

    # conv1 + bn1 + relu + conv2 + bn2 + relu (fused, no h1 HBM round-trip)
    h2 = conv12_fused(xb, w1, s1, b1, w2, s2, b2, stride=stride, vmem_limit=vmem_limit)
    _, Ho, Wo, _ = h2.shape
    M = N * Ho * Wo
    h2d = h2.reshape(M, hidden_p)

    # conv3 (1x1) + bn3 + shortcut + relu, all fused in one kernel
    if downsample:
        w_ds = _pad_axis(_pad_axis(params["w_ds"], cin_p, 0), out_c_p, 1).astype(bf16)
        sd, bd = bn_fold(*params["bn_ds"])
        sd, bd = _pad_bn(sd, out_c_p), _pad_bn(bd, out_c_p)
        # TODO(synk): for stride != 1 fold the shortcut subsample into the kernel's
        # index_map instead of this wrapper-side strided slice.
        xs = xb if stride == 1 else xb[:, ::stride, ::stride, :]
        out2d = conv3_residual(h2d, xs.reshape(M, cin_p), w3, s3, b3,
                               w_ds=w_ds, sd=sd, bd=bd, vmem_limit=vmem_limit)
    else:
        assert stride == 1 and cin == out_c, (
            "downsample=False requires stride == 1 and input_dim == output_dim * 4")
        out2d = conv3_residual(h2d, xb.reshape(M, cin_p), w3, s3, b3,
                               vmem_limit=vmem_limit)

    out = out2d.reshape(N, Ho, Wo, out_c_p)[..., :out_c]
    return jnp.transpose(out, (0, 3, 1, 2))


# ---------------------------------------------------------------------------
# Pure-JAX reference (mirrors the kernels' bf16 casts so tolerances stay tight)
# ---------------------------------------------------------------------------

def reference_forward(x_nchw, params, *, stride=1, downsample=True):
    f32 = jnp.float32
    q = lambda a: a.astype(jnp.bfloat16).astype(f32)

    def bn(v, p):
        s, b = bn_fold(*p)
        return v * s + b

    x = q(jnp.transpose(x_nchw, (0, 2, 3, 1)))
    h = jax.nn.relu(bn(jnp.einsum("nhwc,cd->nhwd", x, q(params["w1"])), params["bn1"]))
    h = q(h)
    h = jax.lax.conv_general_dilated(h, q(params["w2"]), (stride, stride),
                                     ((1, 1), (1, 1)),
                                     dimension_numbers=("NHWC", "HWIO", "NHWC"))
    h = jax.nn.relu(bn(h, params["bn2"]))
    h = q(h)
    h = bn(jnp.einsum("nhwc,cd->nhwd", h, q(params["w3"])), params["bn3"])
    if downsample:
        sc = bn(jnp.einsum("nhwc,cd->nhwd", x[:, ::stride, ::stride, :],
                           q(params["w_ds"])), params["bn_ds"])
    else:
        sc = x
    out = jax.nn.relu(h + sc)
    return jnp.transpose(out, (0, 3, 1, 2))


# ---------------------------------------------------------------------------
# Deterministic parameter init + run
# ---------------------------------------------------------------------------

def init_params(key, input_dim, output_dim):
    hidden = output_dim * 2
    out_c = output_dim * 4
    ks = jax.random.split(key, 20)

    def conv_w(k, shape, fan_in):
        return jax.random.normal(k, shape, jnp.float32) / jnp.sqrt(float(fan_in))

    def bn_p(k, c):
        k1, k2, k3, k4 = jax.random.split(k, 4)
        gamma = jax.random.uniform(k1, (c,), jnp.float32, 0.8, 1.2)
        beta = 0.1 * jax.random.normal(k2, (c,), jnp.float32)
        mean = 0.1 * jax.random.normal(k3, (c,), jnp.float32)
        var = jax.random.uniform(k4, (c,), jnp.float32, 0.5, 1.5)
        return (gamma, beta, mean, var)

    return {
        "w1": conv_w(ks[0], (input_dim, hidden), input_dim),
        "bn1": bn_p(ks[1], hidden),
        "w2": conv_w(ks[2], (3, 3, hidden, hidden), 9 * hidden),
        "bn2": bn_p(ks[3], hidden),
        "w3": conv_w(ks[4], (hidden, out_c), hidden),
        "bn3": bn_p(ks[5], out_c),
        "w_ds": conv_w(ks[6], (input_dim, out_c), input_dim),
        "bn_ds": bn_p(ks[7], out_c),
    }


if __name__ == "__main__":
    key = jax.random.PRNGKey(0)
    k_x, k_p = jax.random.split(key)

    batch, input_dim, output_dim, spatial = 2, 4, 4, 16
    stride, downsample = 1, True

    x = jax.random.normal(k_x, (batch, input_dim, spatial, spatial), jnp.float32)
    params = init_params(k_p, input_dim, output_dim)

    out = wide_bottleneck_forward(x, params, stride=stride, downsample=downsample)
    out = jax.block_until_ready(out)

    ref = reference_forward(x, params, stride=stride, downsample=downsample)
    ref = jax.block_until_ready(ref)

    assert out.shape == (batch, output_dim * 4, spatial // stride, spatial // stride)
    max_err = float(jnp.max(jnp.abs(out - ref)))
    assert jnp.allclose(out, ref, atol=1e-2, rtol=1e-2), (
        "mismatch vs reference: max abs err = %s" % max_err)

    print("KERNEL_OK")
</pallas_src>

<mosaic_0001>
module attributes {stable_mosaic.version = 11 : i64} {
  func.func @_k(%arg0: i32, %arg1: memref<8x128xf32, #tpu.memory_space<vmem>>, %arg2: memref<8x128xf32, #tpu.memory_space<vmem>>, %arg3: memref<8x128xf32, #tpu.memory_space<vmem>>) attributes {dimension_semantics = [#tpu.dimension_semantics<arbitrary>], iteration_bounds = array<i64: 1>, scalar_prefetch = 0 : i64, scratch_operands = 0 : i64, tpu.core_type = #tpu.core_type<tc>, window_params = [{pipeline_mode = #tpu.pipeline_mode<synchronous>, transform_indices = @transform_0, window_bounds = array<i64: 8, 128>}, {pipeline_mode = #tpu.pipeline_mode<synchronous>, transform_indices = @transform_1, window_bounds = array<i64: 8, 128>}, {pipeline_mode = #tpu.pipeline_mode<synchronous>, transform_indices = @transform_2, window_bounds = array<i64: 8, 128>}]} {
    %c0 = arith.constant 0 : index
    %c0_0 = arith.constant 0 : index
    %0 = vector.load %arg2[%c0, %c0_0] : memref<8x128xf32, #tpu.memory_space<vmem>>, vector<8x128xf32>
    %c0_1 = arith.constant 0 : index
    %c0_2 = arith.constant 0 : index
    %1 = vector.load %arg1[%c0_1, %c0_2] : memref<8x128xf32, #tpu.memory_space<vmem>>, vector<8x128xf32>
    %2 = arith.addf %0, %1 : vector<8x128xf32>
    %c0_3 = arith.constant 0 : index
    %c0_4 = arith.constant 0 : index
    %3 = vector.load %arg3[%c0_3, %c0_4] : memref<8x128xf32, #tpu.memory_space<vmem>>, vector<8x128xf32>
    tpu.vector_store %arg3[%c0_3, %c0_4], %2 {strides = array<i32>} : memref<8x128xf32, #tpu.memory_space<vmem>>, vector<8x128xf32>,
    return
  }
  func.func @transform_0(%arg0: i32) -> (i32, i32) {
    %c0_i32 = arith.constant 0 : i32
    %c0_i32_0 = arith.constant 0 : i32
    %c0_i32_1 = arith.constant 0 : i32
    return %c0_i32, %c0_i32_0 : i32, i32
  }
  func.func @transform_1(%arg0: i32) -> (i32, i32) {
    %c0_i32 = arith.constant 0 : i32
    %c0_i32_0 = arith.constant 0 : i32
    %c0_i32_1 = arith.constant 0 : i32
    return %c0_i32, %c0_i32_0 : i32, i32
  }
  func.func @transform_2(%arg0: i32) -> (i32, i32) {
    %c0_i32 = arith.constant 0 : i32
    %c0_i32_0 = arith.constant 0 : i32
    %c0_i32_1 = arith.constant 0 : i32
    return %c0_i32, %c0_i32_0 : i32, i32
  }
}

module attributes {stable_mosaic.version = 11 : i64} {
  func.func @_conv12_kernel(%arg0: i32, %arg1: i32, %arg2: memref<2x18x24x128xbf16, #tpu.memory_space<any>>, %arg3: memref<128x128xbf16, #tpu.memory_space<vmem>>, %arg4: memref<1x128xf32, #tpu.memory_space<vmem>>, %arg5: memref<1x128xf32, #tpu.memory_space<vmem>>, %arg6: memref<1152x128xbf16, #tpu.memory_space<vmem>>, %arg7: memref<1x128xf32, #tpu.memory_space<vmem>>, %arg8: memref<1x128xf32, #tpu.memory_space<vmem>>, %arg9: memref<1x16x16x128xbf16, #tpu.memory_space<vmem>>, %arg10: memref<2x18x24x128xbf16, #tpu.memory_space<vmem>>, %arg11: memref<18x24x128xbf16, #tpu.memory_space<vmem>>, %arg12: memref<256x1152xbf16, #tpu.memory_space<vmem>>, %arg13: memref<2x!tpu.dma_semaphore, #tpu.memory_space<semaphore_mem>>) attributes {dimension_semantics = [#tpu.dimension_semantics<parallel>, #tpu.dimension_semantics<arbitrary>], iteration_bounds = array<i64: 2, 1>, scalar_prefetch = 0 : i64, scratch_operands = 4 : i64, tpu.core_type = #tpu.core_type<tc>, window_params = [{}, {pipeline_mode = #tpu.pipeline_mode<synchronous>, transform_indices = @transform_1, window_bounds = array<i64: 128, 128>}, {pipeline_mode = #tpu.pipeline_mode<synchronous>, transform_indices = @transform_2, window_bounds = array<i64: 1, 128>}, {pipeline_mode = #tpu.pipeline_mode<synchronous>, transform_indices = @transform_3, window_bounds = array<i64: 1, 128>}, {pipeline_mode = #tpu.pipeline_mode<synchronous>, transform_indices = @transform_4, window_bounds = array<i64: 1152, 128>}, {pipeline_mode = #tpu.pipeline_mode<synchronous>, transform_indices = @transform_5, window_bounds = array<i64: 1, 128>}, {pipeline_mode = #tpu.pipeline_mode<synchronous>, transform_indices = @transform_6, window_bounds = array<i64: 1, 128>}, {transform_indices = @transform_7, window_bounds = array<i64: 1, 16, 16, 128>}]} {
    %c16_i32 = arith.constant 16 : i32
    %0 = arith.muli %arg1, %c16_i32 : i32
    %c1_i32 = arith.constant 1 : i32
    %1 = arith.andi %arg1, %c1_i32 : i32
    %c0_i32 = arith.constant 0 : i32
    %2 = arith.cmpi eq, %arg1, %c0_i32 : i32
    %3 = arith.extui %2 : i1 to i32
    %c0_i32_0 = arith.constant 0 : i32
    %4 = arith.cmpi ne, %3, %c0_i32_0 : i32
    scf.if %4 {
      %c0_i32_61 = arith.constant 0 : i32
      %c0_i32_62 = arith.constant 0 : i32
      %c0_i32_63 = arith.constant 0 : i32
      %c0_i32_64 = arith.constant 0 : i32
      %c0_i32_65 = arith.constant 0 : i32
      %89 = tpu.memref_slice %arg2[%arg0, %c0_i32_63, %c0_i32_64, %c0_i32_65] : memref<2x18x24x128xbf16, #tpu.memory_space<any>> -> memref<1x18x24x128xbf16, #tpu.memory_space<any>>
      %90 = tpu.memref_squeeze %89 : memref<1x18x24x128xbf16, #tpu.memory_space<any>> -> memref<18x24x128xbf16, #tpu.memory_space<any>>
      %c0_i32_66 = arith.constant 0 : i32
      %c0_i32_67 = arith.constant 0 : i32
      %c0_i32_68 = arith.constant 0 : i32
      %91 = tpu.memref_slice %arg10[%c0_i32_61, %c0_i32_66, %c0_i32_67, %c0_i32_68] : memref<2x18x24x128xbf16, #tpu.memory_space<vmem>> -> memref<1x18x24x128xbf16, #tpu.memory_space<vmem>>
      %92 = tpu.memref_squeeze %91 : memref<1x18x24x128xbf16, #tpu.memory_space<vmem>> -> memref<18x24x128xbf16, #tpu.memory_space<vmem>>
      %93 = tpu.memref_slice %arg13[%c0_i32_62] : memref<2x!tpu.dma_semaphore, #tpu.memory_space<semaphore_mem>> -> memref<1x!tpu.dma_semaphore, #tpu.memory_space<semaphore_mem>>
      %94 = tpu.memref_squeeze %93 : memref<1x!tpu.dma_semaphore, #tpu.memory_space<semaphore_mem>> -> memref<!tpu.dma_semaphore, #tpu.memory_space<semaphore_mem>>
      tpu.enqueue_dma source(%90 : memref<18x24x128xbf16, #tpu.memory_space<any>>) target(%92 : memref<18x24x128xbf16, #tpu.memory_space<vmem>>) target_semaphore(%94 : memref<!tpu.dma_semaphore, #tpu.memory_space<semaphore_mem>>)
    } else {
    }
    %c1_i32_1 = arith.constant 1 : i32
    %5 = arith.addi %arg1, %c1_i32_1 : i32
    %c1_i32_2 = arith.constant 1 : i32
    %6 = arith.cmpi slt, %5, %c1_i32_2 : i32
    %7 = arith.extui %6 : i1 to i32
    %c0_i32_3 = arith.constant 0 : i32
    %8 = arith.cmpi ne, %7, %c0_i32_3 : i32
    scf.if %8 {
      %c1_i32_61 = arith.constant 1 : i32
      %89 = arith.addi %arg1, %c1_i32_61 : i32
      %c1_i32_62 = arith.constant 1 : i32
      %90 = arith.subi %c1_i32_62, %1 : i32
      %c16_i32_63 = arith.constant 16 : i32
      %91 = arith.muli %89, %c16_i32_63 : i32
      %c0_i32_64 = arith.constant 0 : i32
      %c0_i32_65 = arith.constant 0 : i32
      %92 = tpu.memref_slice %arg2[%arg0, %91, %c0_i32_64, %c0_i32_65] : memref<2x18x24x128xbf16, #tpu.memory_space<any>> -> memref<1x18x24x128xbf16, #tpu.memory_space<any>>
      %93 = tpu.memref_squeeze %92 : memref<1x18x24x128xbf16, #tpu.memory_space<any>> -> memref<18x24x128xbf16, #tpu.memory_space<any>>
      %c0_i32_66 = arith.constant 0 : i32
      %c0_i32_67 = arith.constant 0 : i32
      %c0_i32_68 = arith.constant 0 : i32
      %94 = tpu.memref_slice %arg10[%90, %c0_i32_66, %c0_i32_67, %c0_i32_68] : memref<2x18x24x128xbf16, #tpu.memory_space<vmem>> -> memref<1x18x24x128xbf16, #tpu.memory_space<vmem>>
      %95 = tpu.memref_squeeze %94 : memref<1x18x24x128xbf16, #tpu.memory_space<vmem>> -> memref<18x24x128xbf16, #tpu.memory_space<vmem>>
      %96 = tpu.memref_slice %arg13[%90] : memref<2x!tpu.dma_semaphore, #tpu.memory_space<semaphore_mem>> -> memref<1x!tpu.dma_semaphore, #tpu.memory_space<semaphore_mem>>
      %97 = tpu.memref_squeeze %96 : memref<1x!tpu.dma_semaphore, #tpu.memory_space<semaphore_mem>> -> memref<!tpu.dma_semaphore, #tpu.memory_space<semaphore_mem>>
      tpu.enqueue_dma source(%93 : memref<18x24x128xbf16, #tpu.memory_space<any>>) target(%95 : memref<18x24x128xbf16, #tpu.memory_space<vmem>>) target_semaphore(%97 : memref<!tpu.dma_semaphore, #tpu.memory_space<semaphore_mem>>)
    } else {
    }
    %c16_i32_4 = arith.constant 16 : i32
    %9 = arith.muli %arg1, %c16_i32_4 : i32
    %c0_i32_5 = arith.constant 0 : i32
    %c0_i32_6 = arith.constant 0 : i32
    %10 = tpu.memref_slice %arg2[%arg0, %9, %c0_i32_5, %c0_i32_6] : memref<2x18x24x128xbf16, #tpu.memory_space<any>> -> memref<1x18x24x128xbf16, #tpu.memory_space<any>>
    %11 = tpu.memref_squeeze %10 : memref<1x18x24x128xbf16, #tpu.memory_space<any>> -> memref<18x24x128xbf16, #tpu.memory_space<any>>
    %c0_i32_7 = arith.constant 0 : i32
    %c0_i32_8 = arith.constant 0 : i32
    %c0_i32_9 = arith.constant 0 : i32
    %12 = tpu.memref_slice %arg10[%1, %c0_i32_7, %c0_i32_8, %c0_i32_9] : memref<2x18x24x128xbf16, #tpu.memory_space<vmem>> -> memref<1x18x24x128xbf16, #tpu.memory_space<vmem>>
    %13 = tpu.memref_squeeze %12 : memref<1x18x24x128xbf16, #tpu.memory_space<vmem>> -> memref<18x24x128xbf16, #tpu.memory_space<vmem>>
    %14 = tpu.memref_slice %arg13[%1] : memref<2x!tpu.dma_semaphore, #tpu.memory_space<semaphore_mem>> -> memref<1x!tpu.dma_semaphore, #tpu.memory_space<semaphore_mem>>
    %15 = tpu.memref_squeeze %14 : memref<1x!tpu.dma_semaphore, #tpu.memory_space<semaphore_mem>> -> memref<!tpu.dma_semaphore, #tpu.memory_space<semaphore_mem>>
    tpu.wait_dma2 semaphore(%15 : memref<!tpu.dma_semaphore, #tpu.memory_space<semaphore_mem>>) src(%11 : memref<18x24x128xbf16, #tpu.memory_space<any>>) dst(%13 : memref<18x24x128xbf16, #tpu.memory_space<vmem>>)
    %16 = arith.index_cast %1 : i32 to index
    %c0 = arith.constant 0 : index
    %c0_10 = arith.constant 0 : index
    %c0_11 = arith.constant 0 : index
    %17 = vector.load %arg10[%16, %c0, %c0_10, %c0_11] : memref<2x18x24x128xbf16, #tpu.memory_space<vmem>>, vector<1x18x24x128xbf16>
    %18 = vector.shape_cast %17 : vector<1x18x24x128xbf16> to vector<18x24x128xbf16>
    %19 = vector.shape_cast %18 : vector<18x24x128xbf16> to vector<432x128xbf16>
    %c0_12 = arith.constant 0 : index
    %c0_13 = arith.constant 0 : index
    %20 = vector.load %arg3[%c0_12, %c0_13] : memref<128x128xbf16, #tpu.memory_space<vmem>>, vector<128x128xbf16>
    %cst = arith.constant dense<0.000000e+00> : vector<432x128xf32>
    %21 = tpu.matmul %19, %20, %cst {dimension_numbers = #tpu.dot_dimension_numbers<[1], [0], [0], [1], [0, 0, 1, 1], [], []>} : vector<432x128xbf16>, vector<128x128xbf16>, vector<432x128xf32> -> vector<432x128xf32>
    %c0_14 = arith.constant 0 : index
    %c0_15 = arith.constant 0 : index
    %22 = vector.load %arg4[%c0_14, %c0_15] : memref<1x128xf32, #tpu.memory_space<vmem>>, vector<1x128xf32>
    %23 = vector.broadcast %22 : vector<1x128xf32> to vector<432x128xf32>
    %24 = arith.mulf %21, %23 : vector<432x128xf32>
    %c0_16 = arith.constant 0 : index
    %c0_17 = arith.constant 0 : index
    %25 = vector.load %arg5[%c0_16, %c0_17] : memref<1x128xf32, #tpu.memory_space<vmem>>, vector<1x128xf32>
    %26 = vector.broadcast %25 : vector<1x128xf32> to vector<432x128xf32>
    %27 = arith.addf %24, %26 : vector<432x128xf32>
    %cst_18 = arith.constant 0.000000e+00 : f32
    %28 = vector.broadcast %cst_18 : f32 to vector<432x128xf32>
    %29 = arith.maximumf %27, %28 : vector<432x128xf32>
    %30 = vector.shape_cast %29 : vector<432x128xf32> to vector<18x24x128xf32>
    %31 = arith.truncf %30 : vector<18x24x128xf32> to vector<18x24x128xbf16>
    %c0_19 = arith.constant 0 : index
    %c0_20 = arith.constant 0 : index
    %c0_21 = arith.constant 0 : index
    %32 = vector.load %arg11[%c0_19, %c0_20, %c0_21] : memref<18x24x128xbf16, #tpu.memory_space<vmem>>, vector<18x24x128xbf16>
    tpu.vector_store %arg11[%c0_19, %c0_20, %c0_21], %31 {strides = array<i32>} : memref<18x24x128xbf16, #tpu.memory_space<vmem>>, vector<18x24x128xbf16>,
    %cst_22 = arith.constant 0.000000e+00 : bf16
    %33 = vector.broadcast %cst_22 : bf16 to vector<18x1x128xbf16>
    %c0_23 = arith.constant 0 : index
    %c0_24 = arith.constant 0 : index
    %c0_25 = arith.constant 0 : index
    %34 = vector.load %arg11[%c0_23, %c0_24, %c0_25] : memref<18x24x128xbf16, #tpu.memory_space<vmem>>, vector<18x1x128xbf16>
    tpu.vector_store %arg11[%c0_23, %c0_24, %c0_25], %33 {strides = array<i32>} : memref<18x24x128xbf16, #tpu.memory_space<vmem>>, vector<18x1x128xbf16>,
    %c0_26 = arith.constant 0 : index
    %c17 = arith.constant 17 : index
    %c0_27 = arith.constant 0 : index
    %35 = vector.load %arg11[%c0_26, %c17, %c0_27] : memref<18x24x128xbf16, #tpu.memory_space<vmem>>, vector<18x1x128xbf16>
    tpu.vector_store %arg11[%c0_26, %c17, %c0_27], %33 {strides = array<i32>} : memref<18x24x128xbf16, #tpu.memory_space<vmem>>, vector<18x1x128xbf16>,
    %cst_28 = arith.constant 0.000000e+00 : bf16
    %36 = vector.broadcast %cst_28 : bf16 to vector<24x128xbf16>
    %c0_i32_29 = arith.constant 0 : i32
    %37 = arith.cmpi eq, %0, %c0_i32_29 : i32
    %38 = arith.extui %37 : i1 to i32
    %c0_i32_30 = arith.constant 0 : i32
    %39 = arith.cmpi ne, %38, %c0_i32_30 : i32
    scf.if %39 {
      %c0_61 = arith.constant 0 : index
      %c0_62 = arith.constant 0 : index
      %c0_63 = arith.constant 0 : index
      %89 = vector.load %arg11[%c0_61, %c0_62, %c0_63] : memref<18x24x128xbf16, #tpu.memory_space<vmem>>, vector<1x24x128xbf16>
      %90 = vector.shape_cast %89 : vector<1x24x128xbf16> to vector<24x128xbf16>
      %91 = vector.shape_cast %36 : vector<24x128xbf16> to vector<1x24x128xbf16>
      tpu.vector_store %arg11[%c0_61, %c0_62, %c0_63], %91 {strides = array<i32>} : memref<18x24x128xbf16, #tpu.memory_space<vmem>>, vector<1x24x128xbf16>,
    } else {
    }
    %c18_i32 = arith.constant 18 : i32
    %40 = arith.addi %0, %c18_i32 : i32
    %c1_i32_31 = arith.constant 1 : i32
    %41 = arith.subi %40, %c1_i32_31 : i32
    %c16_i32_32 = arith.constant 16 : i32
    %42 = arith.cmpi sgt, %41, %c16_i32_32 : i32
    %43 = arith.extui %42 : i1 to i32
    %c0_i32_33 = arith.constant 0 : i32
    %44 = arith.cmpi ne, %43, %c0_i32_33 : i32
    scf.if %44 {
      %c17_61 = arith.constant 17 : index
      %c0_62 = arith.constant 0 : index
      %c0_63 = arith.constant 0 : index
      %89 = vector.load %arg11[%c17_61, %c0_62, %c0_63] : memref<18x24x128xbf16, #tpu.memory_space<vmem>>, vector<1x24x128xbf16>
      %90 = vector.shape_cast %89 : vector<1x24x128xbf16> to vector<24x128xbf16>
      %91 = vector.shape_cast %36 : vector<24x128xbf16> to vector<1x24x128xbf16>
      tpu.vector_store %arg11[%c17_61, %c0_62, %c0_63], %91 {strides = array<i32>} : memref<18x24x128xbf16, #tpu.memory_space<vmem>>, vector<1x24x128xbf16>,
    } else {
    }
    %c0_34 = arith.constant 0 : index
    %c0_35 = arith.constant 0 : index
    %c0_36 = arith.constant 0 : index
    %45 = vector.load %arg11[%c0_34, %c0_35, %c0_36] : memref<18x24x128xbf16, #tpu.memory_space<vmem>>, vector<18x24x128xbf16>
    %46 = vector.extract_strided_slice %45 {offsets = [0, 0, 0], sizes = [16, 16, 128], strides = [1, 1, 1]} : vector<18x24x128xbf16> to vector<16x16x128xbf16>
    %47 = vector.shape_cast %46 : vector<16x16x128xbf16> to vector<256x128xbf16>
    %c0_37 = arith.constant 0 : index
    %c0_38 = arith.constant 0 : index
    %48 = vector.load %arg12[%c0_37, %c0_38] : memref<256x1152xbf16, #tpu.memory_space<vmem>>, vector<256x128xbf16>
    tpu.vector_store %arg12[%c0_37, %c0_38], %47 {strides = array<i32>} : memref<256x1152xbf16, #tpu.memory_space<vmem>>, vector<256x128xbf16>,
    %49 = vector.extract_strided_slice %45 {offsets = [0, 1, 0], sizes = [16, 16, 128], strides = [1, 1, 1]} : vector<18x24x128xbf16> to vector<16x16x128xbf16>
    %50 = vector.shape_cast %49 : vector<16x16x128xbf16> to vector<256x128xbf16>
    %c0_39 = arith.constant 0 : index
    %c128 = arith.constant 128 : index
    %51 = vector.load %arg12[%c0_39, %c128] : memref<256x1152xbf16, #tpu.memory_space<vmem>>, vector<256x128xbf16>
    tpu.vector_store %arg12[%c0_39, %c128], %50 {strides = array<i32>} : memref<256x1152xbf16, #tpu.memory_space<vmem>>, vector<256x128xbf16>,
    %52 = vector.extract_strided_slice %45 {offsets = [0, 2, 0], sizes = [16, 16, 128], strides = [1, 1, 1]} : vector<18x24x128xbf16> to vector<16x16x128xbf16>
    %53 = vector.shape_cast %52 : vector<16x16x128xbf16> to vector<256x128xbf16>
    %c0_40 = arith.constant 0 : index
    %c256 = arith.constant 256 : index
    %54 = vector.load %arg12[%c0_40, %c256] : memref<256x1152xbf16, #tpu.memory_space<vmem>>, vector<256x128xbf16>
    tpu.vector_store %arg12[%c0_40, %c256], %53 {strides = array<i32>} : memref<256x1152xbf16, #tpu.memory_space<vmem>>, vector<256x128xbf16>,
    %55 = vector.extract_strided_slice %45 {offsets = [1, 0, 0], sizes = [16, 16, 128], strides = [1, 1, 1]} : vector<18x24x128xbf16> to vector<16x16x128xbf16>
    %56 = vector.shape_cast %55 : vector<16x16x128xbf16> to vector<256x128xbf16>
    %c0_41 = arith.constant 0 : index
    %c384 = arith.constant 384 : index
    %57 = vector.load %arg12[%c0_41, %c384] : memref<256x1152xbf16, #tpu.memory_space<vmem>>, vector<256x128xbf16>
    tpu.vector_store %arg12[%c0_41, %c384], %56 {strides = array<i32>} : memref<256x1152xbf16, #tpu.memory_space<vmem>>, vector<256x128xbf16>,
    %58 = vector.extract_strided_slice %45 {offsets = [1, 1, 0], sizes = [16, 16, 128], strides = [1, 1, 1]} : vector<18x24x128xbf16> to vector<16x16x128xbf16>
    %59 = vector.shape_cast %58 : vector<16x16x128xbf16> to vector<256x128xbf16>
    %c0_42 = arith.constant 0 : index
    %c512 = arith.constant 512 : index
    %60 = vector.load %arg12[%c0_42, %c512] : memref<256x1152xbf16, #tpu.memory_space<vmem>>, vector<256x128xbf16>
    tpu.vector_store %arg12[%c0_42, %c512], %59 {strides = array<i32>} : memref<256x1152xbf16, #tpu.memory_space<vmem>>, vector<256x128xbf16>,
    %61 = vector.extract_strided_slice %45 {offsets = [1, 2, 0], sizes = [16, 16, 128], strides = [1, 1, 1]} : vector<18x24x128xbf16> to vector<16x16x128xbf16>
    %62 = vector.shape_cast %61 : vector<16x16x128xbf16> to vector<256x128xbf16>
    %c0_43 = arith.constant 0 : index
    %c640 = arith.constant 640 : index
    %63 = vector.load %arg12[%c0_43, %c640] : memref<256x1152xbf16, #tpu.memory_space<vmem>>, vector<256x128xbf16>
    tpu.vector_store %arg12[%c0_43, %c640], %62 {strides = array<i32>} : memref<256x1152xbf16, #tpu.memory_space<vmem>>, vector<256x128xbf16>,
    %64 = vector.extract_strided_slice %45 {offsets = [2, 0, 0], sizes = [16, 16, 128], strides = [1, 1, 1]} : vector<18x24x128xbf16> to vector<16x16x128xbf16>
    %65 = vector.shape_cast %64 : vector<16x16x128xbf16> to vector<256x128xbf16>
    %c0_44 = arith.constant 0 : index
    %c768 = arith.constant 768 : index
    %66 = vector.load %arg12[%c0_44, %c768] : memref<256x1152xbf16, #tpu.memory_space<vmem>>, vector<256x128xbf16>
    tpu.vector_store %arg12[%c0_44, %c768], %65 {strides = array<i32>} : memref<256x1152xbf16, #tpu.memory_space<vmem>>, vector<256x128xbf16>,
    %67 = vector.extract_strided_slice %45 {offsets = [2, 1, 0], sizes = [16, 16, 128], strides = [1, 1, 1]} : vector<18x24x128xbf16> to vector<16x16x128xbf16>
    %68 = vector.shape_cast %67 : vector<16x16x128xbf16> to vector<256x128xbf16>
    %c0_45 = arith.constant 0 : index
    %c896 = arith.constant 896 : index
    %69 = vector.load %arg12[%c0_45, %c896] : memref<256x1152xbf16, #tpu.memory_space<vmem>>, vector<256x128xbf16>
    tpu.vector_store %arg12[%c0_45, %c896], %68 {strides = array<i32>} : memref<256x1152xbf16, #tpu.memory_space<vmem>>, vector<256x128xbf16>,
    %70 = vector.extract_strided_slice %45 {offsets = [2, 2, 0], sizes = [16, 16, 128], strides = [1, 1, 1]} : vector<18x24x128xbf16> to vector<16x16x128xbf16>
    %71 = vector.shape_cast %70 : vector<16x16x128xbf16> to vector<256x128xbf16>
    %c0_46 = arith.constant 0 : index
    %c1024 = arith.constant 1024 : index
    %72 = vector.load %arg12[%c0_46, %c1024] : memref<256x1152xbf16, #tpu.memory_space<vmem>>, vector<256x128xbf16>
    tpu.vector_store %arg12[%c0_46, %c1024], %71 {strides = array<i32>} : memref<256x1152xbf16, #tpu.memory_space<vmem>>, vector<256x128xbf16>,
    %c0_47 = arith.constant 0 : index
    %c0_48 = arith.constant 0 : index
    %73 = vector.load %arg12[%c0_47, %c0_48] : memref<256x1152xbf16, #tpu.memory_space<vmem>>, vector<256x1152xbf16>
    %c0_49 = arith.constant 0 : index
    %c0_50 = arith.constant 0 : index
    %74 = vector.load %arg6[%c0_49, %c0_50] : memref<1152x128xbf16, #tpu.memory_space<vmem>>, vector<1152x128xbf16>
    %cst_51 = arith.constant dense<0.000000e+00> : vector<256x128xf32>
    %75 = tpu.matmul %73, %74, %cst_51 {dimension_numbers = #tpu.dot_dimension_numbers<[1], [0], [0], [1], [0, 0, 1, 1], [], []>} : vector<256x1152xbf16>, vector<1152x128xbf16>, vector<256x128xf32> -> vector<256x128xf32>
    %c0_52 = arith.constant 0 : index
    %c0_53 = arith.constant 0 : index
    %76 = vector.load %arg7[%c0_52, %c0_53] : memref<1x128xf32, #tpu.memory_space<vmem>>, vector<1x128xf32>
    %77 = vector.broadcast %76 : vector<1x128xf32> to vector<256x128xf32>
    %78 = arith.mulf %75, %77 : vector<256x128xf32>
    %c0_54 = arith.constant 0 : index
    %c0_55 = arith.constant 0 : index
    %79 = vector.load %arg8[%c0_54, %c0_55] : memref<1x128xf32, #tpu.memory_space<vmem>>, vector<1x128xf32>
    %80 = vector.broadcast %79 : vector<1x128xf32> to vector<256x128xf32>
    %81 = arith.addf %78, %80 : vector<256x128xf32>
    %cst_56 = arith.constant 0.000000e+00 : f32
    %82 = vector.broadcast %cst_56 : f32 to vector<256x128xf32>
    %83 = arith.maximumf %81, %82 : vector<256x128xf32>
    %84 = vector.shape_cast %83 : vector<256x128xf32> to vector<16x16x128xf32>
    %85 = arith.truncf %84 : vector<16x16x128xf32> to vector<16x16x128xbf16>
    %c0_57 = arith.constant 0 : index
    %c0_58 = arith.constant 0 : index
    %c0_59 = arith.constant 0 : index
    %c0_60 = arith.constant 0 : index
    %86 = vector.load %arg9[%c0_57, %c0_58, %c0_59, %c0_60] : memref<1x16x16x128xbf16, #tpu.memory_space<vmem>>, vector<1x16x16x128xbf16>
    %87 = vector.shape_cast %86 : vector<1x16x16x128xbf16> to vector<16x16x128xbf16>
    %88 = vector.shape_cast %85 : vector<16x16x128xbf16> to vector<1x16x16x128xbf16>
    tpu.vector_store %arg9[%c0_57, %c0_58, %c0_59, %c0_60], %88 {strides = array<i32>} : memref<1x16x16x128xbf16, #tpu.memory_space<vmem>>, vector<1x16x16x128xbf16>,
    return
  }
  func.func @transform_1(%arg0: i32, %arg1: i32) -> (i32, i32) {
    %c0_i32 = arith.constant 0 : i32
    %c0_i32_0 = arith.constant 0 : i32
    %c0_i32_1 = arith.constant 0 : i32
    return %c0_i32, %c0_i32_0 : i32, i32
  }
  func.func @transform_2(%arg0: i32, %arg1: i32) -> (i32, i32) {
    %c0_i32 = arith.constant 0 : i32
    %c0_i32_0 = arith.constant 0 : i32
    %c0_i32_1 = arith.constant 0 : i32
    return %c0_i32, %c0_i32_0 : i32, i32
  }
  func.func @transform_3(%arg0: i32, %arg1: i32) -> (i32, i32) {
    %c0_i32 = arith.constant 0 : i32
    %c0_i32_0 = arith.constant 0 : i32
    %c0_i32_1 = arith.constant 0 : i32
    return %c0_i32, %c0_i32_0 : i32, i32
  }
  func.func @transform_4(%arg0: i32, %arg1: i32) -> (i32, i32) {
    %c0_i32 = arith.constant 0 : i32
    %c0_i32_0 = arith.constant 0 : i32
    %c0_i32_1 = arith.constant 0 : i32
    return %c0_i32, %c0_i32_0 : i32, i32
  }
  func.func @transform_5(%arg0: i32, %arg1: i32) -> (i32, i32) {
    %c0_i32 = arith.constant 0 : i32
    %c0_i32_0 = arith.constant 0 : i32
    %c0_i32_1 = arith.constant 0 : i32
    return %c0_i32, %c0_i32_0 : i32, i32
  }
  func.func @transform_6(%arg0: i32, %arg1: i32) -> (i32, i32) {
    %c0_i32 = arith.constant 0 : i32
    %c0_i32_0 = arith.constant 0 : i32
    %c0_i32_1 = arith.constant 0 : i32
    return %c0_i32, %c0_i32_0 : i32, i32
  }
  func.func @transform_7(%arg0: i32, %arg1: i32) -> (i32, i32, i32, i32) {
    %c0_i32 = arith.constant 0 : i32
    %c0_i32_0 = arith.constant 0 : i32
    %c0_i32_1 = arith.constant 0 : i32
    return %arg0, %arg1, %c0_i32, %c0_i32_0 : i32, i32, i32, i32
  }
}

</mosaic_0001>

<llo_original>
// kernel: tpu_custom_call.1
$region0: #{tpu_custom_call.1}
  #allocation0 [shape = 'u32[]', space=smem, size = 0x4, offset = 0x4, fixed_abs, tag = 'smem constant byte address 0x4 - core index']
  #allocation1 [shape = 'u32[144,128]{1,0:T(1,128)}', space=vmem, size = 0x12000, scoped, tag = 'internal scratch']
  %s0 = inlined_call_operand.hbm [shape: f32[8,128], index: 0, kind: input, shape index: {}]
  %s1 = inlined_call_operand.hbm [shape: f32[8,128], index: 1, kind: input, shape index: {}]
  %s2 = inlined_call_operand.hbm [shape: f32[8,128], index: 2, kind: output, shape index: {}]
  %s3 = sld [smem:[#allocation0]]
  $region26: #{tpu_custom_call.1} parent=0
    _
  %s5 = ssub.s32 1, %s3
  %s6 = scalar_select 0, %s5, %s3
  $region1: #{tpu_custom_call.1} parent=0
    #allocation2 [shape = 'u8[4096]{0}', space=vmem, size = 0x1000, scoped, tag = 'input window, operand 0, single buffered']
    #allocation3 [shape = 's32[1]{0}', space=sflag, size = 0x4, scoped, tag = 'scoped memory for tpu_custom_call.1']
    #allocation4 [shape = 's32[1]{0}', space=sflag, size = 0x4, scoped, tag = 'scoped memory for tpu_custom_call.1']
    #allocation5 [shape = 'u8[4096]{0}', space=vmem, size = 0x1000, scoped, tag = 'input window, operand 1, single buffered']
    #allocation6 [shape = 's32[1]{0}', space=sflag, size = 0x4, scoped, tag = 'scoped memory for tpu_custom_call.1']
    #allocation7 [shape = 'u8[4096]{0}', space=vmem, size = 0x1000, scoped, tag = 'output window, operand 0, single buffered']
    %7 = vsyncpa [#allocation3], 0
    %8 = vsyncpa [#allocation6], 0
    %9 = vsyncpa [#allocation4], 0
    // Predicated region
    $region2: #{tpu_custom_call.1} parent=1 // pred_check
      _
    $region3: #{tpu_custom_call.1} parent=1 // pred_check_branch
      %11 = sbr.rel (0) target = $region5
    $region4: #{tpu_custom_call.1} parent=1 // pred_region
      %s13 = ssub.s32 128, 128
      %14 = vsyncadd [#allocation3], %s13
      %s16 = sshll.u32 [#allocation2], 4
      %s17 = int_to_ptr.vmem [resolvable:$true] %s16
      %19 = dma.hbm_to_vmem [thread:$0]  %s0, 128, %s17, [#allocation3]
    $region5: #{tpu_custom_call.1} parent=1 // pred_fallthru
      _
    // Predicated region
    $region6: #{tpu_custom_call.1} parent=1 // pred_check
      _
    $region7: #{tpu_custom_call.1} parent=1 // pred_check_branch
      %21 = sbr.rel (0) target = $region9
    $region8: #{tpu_custom_call.1} parent=1 // pred_region
      %s23 = ssub.s32 128, 128
      %24 = vsyncadd [#allocation6], %s23
      %s26 = sshll.u32 [#allocation5], 4
      %s27 = int_to_ptr.vmem [resolvable:$true] %s26
      %29 = dma.hbm_to_vmem [thread:$0]  %s1, 128, %s27, [#allocation6]
    $region9: #{tpu_custom_call.1} parent=1 // pred_fallthru
      _
    // Predicated region
    $region10: #{tpu_custom_call.1} parent=1 // pred_check
      _
    $region11: #{tpu_custom_call.1} parent=1 // pred_check_branch
      %31 = sbr.rel (0) target = $region13
    $region12: #{tpu_custom_call.1} parent=1 // pred_region
      %32 = dma.done [#allocation3], 128
    $region13: #{tpu_custom_call.1} parent=1 // pred_fallthru
      _
    // Predicated region
    $region14: #{tpu_custom_call.1} parent=1 // pred_check
      _
    $region15: #{tpu_custom_call.1} parent=1 // pred_check_branch
      %34 = sbr.rel (0) target = $region17
    $region16: #{tpu_custom_call.1} parent=1 // pred_region
      %35 = dma.done [#allocation6], 128
    $region17: #{tpu_custom_call.1} parent=1 // pred_fallthru
      _
    %v36 = vld [vmem:[#allocation5] sm:$0xff]
    %v37 = vld [vmem:[#allocation2] sm:$0xff]
    %v38 = vadd.f32 %v36, %v37
    %39 = vst [vmem:[#allocation7] sm:$0xff] %v38
    // Predicated region
    $region18: #{tpu_custom_call.1} parent=1 // pred_check
      _
    $region19: #{tpu_custom_call.1} parent=1 // pred_check_branch
      %41 = sbr.rel (0) target = $region21
    $region20: #{tpu_custom_call.1} parent=1 // pred_region
      %s43 = ssub.s32 128, 128
      %44 = vsyncadd [#allocation4], %s43
      %s46 = sshll.u32 [#allocation7], 4
      %s47 = int_to_ptr.vmem [resolvable:$true] %s46
      %49 = dma.vmem_to_hbm [thread:$0]  %s47, 128, %s2, [#allocation4]
    $region21: #{tpu_custom_call.1} parent=1 // pred_fallthru
      _
    // Predicated region
    $region22: #{tpu_custom_call.1} parent=1 // pred_check
      _
    $region23: #{tpu_custom_call.1} parent=1 // pred_check_branch
      %51 = sbr.rel (0) target = $region25
    $region24: #{tpu_custom_call.1} parent=1 // pred_region
      %52 = dma.done [#allocation4], 128
    $region25: #{tpu_custom_call.1} parent=1 // pred_fallthru
      _
    %53 = vsyncpa [#allocation3], 1
    %54 = vsyncpa [#allocation6], 1
    %55 = vsyncpa [#allocation4], 1

// kernel: tpu_custom_call.1
$region0: #{tpu_custom_call.1}
  #allocation0 [shape = 'u32[]', space=smem, size = 0x4, offset = 0x4, fixed_abs, tag = 'smem constant byte address 0x4 - core index']
  #allocation1 [shape = 'u32[144,128]{1,0:T(1,128)}', space=vmem, size = 0x12000, scoped, tag = 'internal scratch']
  #allocation2 [shape = 'bf16[2,18,24,128]{3,2,1,0:T(8,128)(2,1)}', space=vmem, size = 0x36000, scoped, tag = 'scratch operand']
  #allocation3 [shape = 'bf16[18,24,128]{2,1,0:T(8,128)(2,1)}', space=vmem, size = 0x1b000, scoped, tag = 'scratch operand']
  #allocation4 [shape = 'bf16[256,1152]{1,0:T(8,128)(2,1)}', space=vmem, size = 0x90000, scoped, tag = 'scratch operand']
  #allocation5 [shape = 's32[2]{0}', space=sflag, size = 0x8, scoped, tag = 'scratch operand']
  #allocation12 [shape = 's32[]', space=sflag, size = 0x4, offset = 0, fixed_abs, tag = 'sflag constant byte address 0x0 - dummy sync flag']
  #allocation13 [shape = 's32[]', space=sflag, size = 0x4, offset = 0, fixed_abs, tag = 'sflag constant byte address 0x0 - dummy sync flag']
  #allocation14 [shape = 'u32[]', space=smem, size = 0x4, offset = 0x44, fixed_abs, tag = 'smem constant byte address 0x44 - assertion arg 0']
  #allocation15 [shape = 'u32[]', space=smem, size = 0x4, offset = 0x48, fixed_abs, tag = 'smem constant byte address 0x48 - assertion arg 1']
  #allocation16 [shape = 's32[]', space=sflag, size = 0x4, offset = 0, fixed_abs, tag = 'sflag constant byte address 0x0 - dummy sync flag']
  #allocation17 [shape = 's32[]', space=sflag, size = 0x4, offset = 0, fixed_abs, tag = 'sflag constant byte address 0x0 - dummy sync flag']
  %s0 = inlined_call_operand.hbm [shape: bf16[2,18,24,128], index: 0, kind: input, shape index: {}]
  %s1 = inlined_call_operand.hbm [shape: bf16[128,128], index: 1, kind: input, shape index: {}]
  %s2 = inlined_call_operand.vmem [shape: f32[1,128], index: 2, kind: input, shape index: {}]
  %s3 = inlined_call_operand.vmem [shape: f32[1,128], index: 3, kind: input, shape index: {}]
  %s4 = inlined_call_operand.hbm [shape: bf16[1152,128], index: 4, kind: input, shape index: {}]
  %s5 = inlined_call_operand.vmem [shape: f32[1,128], index: 5, kind: input, shape index: {}]
  %s6 = inlined_call_operand.vmem [shape: f32[1,128], index: 6, kind: input, shape index: {}]
  %s7 = inlined_call_operand.hbm [shape: bf16[2,16,16,128], index: 7, kind: output, shape index: {}]
  %s8 = sld [smem:[#allocation0]]
  $region89: #{tpu_custom_call.1} parent=0
    _
  %s10 = ssub.s32 1, %s8
  %s11 = scalar_select 0, %s10, %s8
  $region1: #{tpu_custom_call.1} parent=0
    #allocation6 [shape = 'u8[32768]{0}', space=vmem, size = 0x8000, scoped, tag = 'input window, operand 1, single buffered']
    #allocation7 [shape = 's32[2]{0}', space=sflag, size = 0x8, scoped, tag = 'scoped memory for tpu_custom_call.1']
    #allocation8 [shape = 's32[2]{0}', space=sflag, size = 0x8, scoped, tag = 'scoped memory for tpu_custom_call.1']
    #allocation9 [shape = 'u8[294912]{0}', space=vmem, size = 0x48000, scoped, tag = 'input window, operand 4, single buffered']
    #allocation10 [shape = 's32[1]{0}', space=sflag, size = 0x4, scoped, tag = 'scoped memory for tpu_custom_call.1']
    #allocation11 [shape = 'u8[131072]{0}', space=vmem, size = 0x20000, scoped, tag = 'output window, operand 0']
    %12 = vsyncpa [#allocation7], 0
    %13 = vsyncpa [#allocation10], 0
    %14 = vsyncpa [#allocation8], 0
    %s15 = scalar_lea.sflag [#allocation8], 1
    %16 = vsyncpa %s15, 0
    loop: start=0, step=1, limit=4
    $region2: #{tpu_custom_call.1} parent=1 // loop_pre_header
      _
    $region3: #{tpu_custom_call.1} parent=1 // loop_header
      %s18 = sphi 0, %s22
      %p19 = scmp.ge.s32.totalorder %s18, 4
      %s25 = sphi 0, %s37
      %s26 = sphi 0, %s33
      %s27 = sphi 0, %s25
      %s28 = sphi 0, %s26
      %s29 = sphi 0, %s27
      %s30 = sphi 0, %s28
      %s38 = sphi 0, %s38
      %s40 = sphi 0, %s38
      %s41 = sphi 0, %s40
      %s55 = sphi 0, %s41
      %s59 = sphi 0, %s59
      %s61 = sphi 0, %s59
      %s62 = sphi 0, %s61
      %s76 = sphi 0, %s62
      %s80 = sphi 0, %s80
      %s82 = sphi 0, %s80
      %s83 = sphi 0, %s82
      %s97 = sphi 0, %s83
      %s101 = sphi 0, %s101
      %s103 = sphi 0, %s101
      %s104 = sphi 0, %s103
      %s118 = sphi 0, %s104
      %s122 = sphi 0, %s122
      %s124 = sphi 0, %s122
      %s125 = sphi 0, %s124
      %s139 = sphi 0, %s125
      %s143 = sphi 0, %s143
      %s145 = sphi 0, %s143
      %s146 = sphi 0, %s145
      %s160 = sphi 0, %s146
      %s168 = sphi 0, %s170
      %s171 = sphi 0, %s168
      %s172 = sphi 0, %s171
      %s188 = sphi 0, %s172
    $region4: #{tpu_custom_call.1} parent=1 // loop_header_branch
      %21 = sbr.rel (%p19) target = $region8
    $region5: #{tpu_custom_call.1} parent=1 // loop_body
      %s23 = ssub.s32 %s18, 1
      %s24 = ssub.s32 %s18, 2
      %s31 = sadd.s32 1, %s26
      %p32 = scmp.ge.s32.totalorder %s31, 1
      %s33 = scalar_select %p32, 0, %s31
      %s34 = sadd.s32 1, %s25
      %s35 = scalar_select %p32, %s34, %s25
      %p36 = scmp.ge.s32.totalorder %s35, 2
      %s37 = scalar_select %p36, 0, %s35
      %s39 = sadd.s32 %s38, 1
      %p42 = scmp.eq.s32.totalorder %s18, 1
      %p43 = scmp.ne.s32.totalorder %s38, %s40
      %p44 = scmp.eq.s32.totalorder %s18, 0
      %p45 = por %p43, %p44
      %p46 = scmp.ne.s32.totalorder %s38, %s40
      %p47 = scmp.eq.s32.totalorder %s23, 1
      %p48 = por %p46, %p47
      %p49 = scmp.ne.s32.totalorder %s40, %s41
      %p50 = scmp.eq.s32.totalorder %s23, 0
      %p51 = por %p49, %p50
      %p52 = scmp.ne.s32.totalorder %s40, %s41
      %p53 = scmp.eq.s32.totalorder %s24, 1
      %p54 = por %p52, %p53
      %p56 = scmp.ne.s32.totalorder %s41, %s55
      %p57 = scmp.eq.s32.totalorder %s24, 0
      %p58 = por %p56, %p57
      %s60 = sadd.s32 %s59, 1
      %p63 = scmp.eq.s32.totalorder %s18, 1
      %p64 = scmp.ne.s32.totalorder %s59, %s61
      %p65 = scmp.eq.s32.totalorder %s18, 0
      %p66 = por %p64, %p65
      %p67 = scmp.ne.s32.totalorder %s59, %s61
      %p68 = scmp.eq.s32.totalorder %s23, 1
      %p69 = por %p67, %p68
      %p70 = scmp.ne.s32.totalorder %s61, %s62
      %p71 = scmp.eq.s32.totalorder %s23, 0
      %p72 = por %p70, %p71
      %p73 = scmp.ne.s32.totalorder %s61, %s62
      %p74 = scmp.eq.s32.totalorder %s24, 1
      %p75 = por %p73, %p74
      %p77 = scmp.ne.s32.totalorder %s62, %s76
      %p78 = scmp.eq.s32.totalorder %s24, 0
      %p79 = por %p77, %p78
      %s81 = sadd.s32 %s80, 1
      %p84 = scmp.eq.s32.totalorder %s18, 1
      %p85 = scmp.ne.s32.totalorder %s80, %s82
      %p86 = scmp.eq.s32.totalorder %s18, 0
      %p87 = por %p85, %p86
      %p88 = scmp.ne.s32.totalorder %s80, %s82
      %p89 = scmp.eq.s32.totalorder %s23, 1
      %p90 = por %p88, %p89
      %p91 = scmp.ne.s32.totalorder %s82, %s83
      %p92 = scmp.eq.s32.totalorder %s23, 0
      %p93 = por %p91, %p92
      %p94 = scmp.ne.s32.totalorder %s82, %s83
      %p95 = scmp.eq.s32.totalorder %s24, 1
      %p96 = por %p94, %p95
      %p98 = scmp.ne.s32.totalorder %s83, %s97
      %p99 = scmp.eq.s32.totalorder %s24, 0
      %p100 = por %p98, %p99
      %s102 = sadd.s32 %s101, 1
      %p105 = scmp.eq.s32.totalorder %s18, 1
      %p106 = scmp.ne.s32.totalorder %s101, %s103
      %p107 = scmp.eq.s32.totalorder %s18, 0
      %p108 = por %p106, %p107
      %p109 = scmp.ne.s32.totalorder %s101, %s103
      %p110 = scmp.eq.s32.totalorder %s23, 1
      %p111 = por %p109, %p110
      %p112 = scmp.ne.s32.totalorder %s103, %s104
      %p113 = scmp.eq.s32.totalorder %s23, 0
      %p114 = por %p112, %p113
      %p115 = scmp.ne.s32.totalorder %s103, %s104
      %p116 = scmp.eq.s32.totalorder %s24, 1
      %p117 = por %p115, %p116
      %p119 = scmp.ne.s32.totalorder %s104, %s118
      %p120 = scmp.eq.s32.totalorder %s24, 0
      %p121 = por %p119, %p120
      %s123 = sadd.s32 %s122, 1
      %p126 = scmp.eq.s32.totalorder %s18, 1
      %p127 = scmp.ne.s32.totalorder %s122, %s124
      %p128 = scmp.eq.s32.totalorder %s18, 0
      %p129 = por %p127, %p128
      %p130 = scmp.ne.s32.totalorder %s122, %s124
      %p131 = scmp.eq.s32.totalorder %s23, 1
      %p132 = por %p130, %p131
      %p133 = scmp.ne.s32.totalorder %s124, %s125
      %p134 = scmp.eq.s32.totalorder %s23, 0
      %p135 = por %p133, %p134
      %p136 = scmp.ne.s32.totalorder %s124, %s125
      %p137 = scmp.eq.s32.totalorder %s24, 1
      %p138 = por %p136, %p137
      %p140 = scmp.ne.s32.totalorder %s125, %s139
      %p141 = scmp.eq.s32.totalorder %s24, 0
      %p142 = por %p140, %p141
      %s144 = sadd.s32 %s143, 1
      %p147 = scmp.eq.s32.totalorder %s18, 1
      %p148 = scmp.ne.s32.totalorder %s143, %s145
      %p149 = scmp.eq.s32.totalorder %s18, 0
      %p150 = por %p148, %p149
      %p151 = scmp.ne.s32.totalorder %s143, %s145
      %p152 = scmp.eq.s32.totalorder %s23, 1
      %p153 = por %p151, %p152
      %p154 = scmp.ne.s32.totalorder %s145, %s146
      %p155 = scmp.eq.s32.totalorder %s23, 0
      %p156 = por %p154, %p155
      %p157 = scmp.ne.s32.totalorder %s145, %s146
      %p158 = scmp.eq.s32.totalorder %s24, 1
      %p159 = por %p157, %p158
      %p161 = scmp.ne.s32.totalorder %s146, %s160
      %p162 = scmp.eq.s32.totalorder %s24, 0
      %p163 = por %p161, %p162
      %s164 = ssub.s32 %s25, %s37
      %s165 = ssub.s32 %s26, %s33
      %s166 = sor.u32 %s164, %s165
      %p167 = scmp.eq.s32.totalorder %s166, 0
      %s169 = sadd.s32 %s168, 1
      %s170 = scalar_select %p167, %s168, %s169
      %p173 = pneg %p167
      %p174 = scmp.eq.s32.totalorder %s18, 1
      %p175 = por %p173, %p174
      %p176 = scmp.ne.s32.totalorder %s168, %s171
      %p177 = scmp.eq.s32.totalorder %s18, 0
      %p178 = por %p176, %p177
      %p179 = scmp.ne.s32.totalorder %s168, %s171
      %p180 = scmp.eq.s32.totalorder %s23, 1
      %p181 = por %p179, %p180
      %p182 = scmp.ne.s32.totalorder %s171, %s172
      %p183 = scmp.eq.s32.totalorder %s23, 0
      %p184 = por %p182, %p183
      %p185 = scmp.ne.s32.totalorder %s171, %s172
      %p186 = scmp.eq.s32.totalorder %s24, 1
      %p187 = por %p185, %p186
      %p189 = scmp.ne.s32.totalorder %s172, %s188
      %p190 = scmp.eq.s32.totalorder %s24, 0
      %p191 = por %p189, %p190
      %p192 = scmp.le.s32.totalorder 1, %s18
      %p193 = scmp.lt.s32.totalorder %s18, 3
      %p194 = pnand %p192, %p193
      %p195 = pneg %p194
      // Predicated region
      $region9: #{tpu_custom_call.1} parent=5 // pred_check
        _
      $region10: #{tpu_custom_call.1} parent=5 // pred_check_branch
        %197 = sbr.rel (%p194) target = $region12
      $region11: #{tpu_custom_call.1} parent=5 // pred_region
        %s198 = ssub.s32 %s18, 1
        // Predicated region
        $region13: #{tpu_custom_call.1} parent=11 // pred_check
          %p199 = pneg %p51
        $region14: #{tpu_custom_call.1} parent=11 // pred_check_branch
          %201 = sbr.rel (%p199) target = $region16
        $region15: #{tpu_custom_call.1} parent=11 // pred_region
          %s203 = ssub.s32 1024, 1024
          %204 = vsyncadd [#allocation7], %s203
          %s205 = sshll.u32 [#allocation6], 4
          %s206 = int_to_ptr.vmem [resolvable:$true] %s205
          %211 = dma.hbm_to_vmem [thread:$0]  %s1, 1024, %s206, [#allocation7], 64, 64, 4
        $region16: #{tpu_custom_call.1} parent=11 // pred_fallthru
          _
        // Predicated region
        $region17: #{tpu_custom_call.1} parent=11 // pred_check
          %p212 = pneg %p72
        $region18: #{tpu_custom_call.1} parent=11 // pred_check_branch
          %214 = sbr.rel (%p212) target = $region20
        $region19: #{tpu_custom_call.1} parent=11 // pred_region
          _
        $region20: #{tpu_custom_call.1} parent=11 // pred_fallthru
          _
        // Predicated region
        $region21: #{tpu_custom_call.1} parent=11 // pred_check
          %p215 = pneg %p93
        $region22: #{tpu_custom_call.1} parent=11 // pred_check_branch
          %217 = sbr.rel (%p215) target = $region24
        $region23: #{tpu_custom_call.1} parent=11 // pred_region
          _
        $region24: #{tpu_custom_call.1} parent=11 // pred_fallthru
          _
        // Predicated region
        $region25: #{tpu_custom_call.1} parent=11 // pred_check
          %p218 = pneg %p114
        $region26: #{tpu_custom_call.1} parent=11 // pred_check_branch
          %220 = sbr.rel (%p218) target = $region28
        $region27: #{tpu_custom_call.1} parent=11 // pred_region
          %s222 = ssub.s32 9216, 9216
          %223 = vsyncadd [#allocation10], %s222
          %s224 = sshll.u32 [#allocation9], 4
          %s225 = int_to_ptr.vmem [resolvable:$true] %s224
          %230 = dma.hbm_to_vmem [thread:$0]  %s4, 9216, %s225, [#allocation10], 64, 64, 4
        $region28: #{tpu_custom_call.1} parent=11 // pred_fallthru
          _
        // Predicated region
        $region29: #{tpu_custom_call.1} parent=11 // pred_check
          %p231 = pneg %p135
        $region30: #{tpu_custom_call.1} parent=11 // pred_check_branch
          %233 = sbr.rel (%p231) target = $region32
        $region31: #{tpu_custom_call.1} parent=11 // pred_region
          _
        $region32: #{tpu_custom_call.1} parent=11 // pred_fallthru
          _
        // Predicated region
        $region33: #{tpu_custom_call.1} parent=11 // pred_check
          %p234 = pneg %p156
        $region34: #{tpu_custom_call.1} parent=11 // pred_check_branch
          %236 = sbr.rel (%p234) target = $region36
        $region35: #{tpu_custom_call.1} parent=11 // pred_region
          _
        $region36: #{tpu_custom_call.1} parent=11 // pred_fallthru
          _
      $region12: #{tpu_custom_call.1} parent=5 // pred_fallthru
        _
      %p237 = scmp.lt.s32.totalorder %s18, 2
      // Predicated region
      $region37: #{tpu_custom_call.1} parent=5 // pred_check
        %p238 = pneg %p237
      $region38: #{tpu_custom_call.1} parent=5 // pred_check_branch
        %240 = sbr.rel (%p238) target = $region40
      $region39: #{tpu_custom_call.1} parent=5 // pred_region
        _
      $region40: #{tpu_custom_call.1} parent=5 // pred_fallthru
        _
      %p241 = scmp.le.s32.totalorder 1, %s18
      %p242 = scmp.lt.s32.totalorder %s18, 3
      %p243 = pnand %p241, %p242
      %p244 = pneg %p243
      // Predicated region
      $region41: #{tpu_custom_call.1} parent=5 // pred_check
        _
      $region42: #{tpu_custom_call.1} parent=5 // pred_check_branch
        %246 = sbr.rel (%p243) target = $region44
      $region43: #{tpu_custom_call.1} parent=5 // pred_region
        %s247 = ssub.s32 %s18, 1
        // Predicated region
        $region45: #{tpu_custom_call.1} parent=43 // pred_check
          %p248 = pneg %p51
        $region46: #{tpu_custom_call.1} parent=43 // pred_check_branch
          %250 = sbr.rel (%p248) target = $region48
        $region47: #{tpu_custom_call.1} parent=43 // pred_region
          %251 = dma.done [#allocation7], 1024
        $region48: #{tpu_custom_call.1} parent=43 // pred_fallthru
          _
        // Predicated region
        $region49: #{tpu_custom_call.1} parent=43 // pred_check
          %p252 = pneg %p114
        $region50: #{tpu_custom_call.1} parent=43 // pred_check_branch
          %254 = sbr.rel (%p252) target = $region52
        $region51: #{tpu_custom_call.1} parent=43 // pred_region
          %255 = dma.done [#allocation10], 9216
        $region52: #{tpu_custom_call.1} parent=43 // pred_fallthru
          _
        %p256 = pneg %p51
        %p257 = pneg %p48
        %p258 = pneg %p72
        %p259 = pneg %p69
        %p260 = pneg %p93
        %p261 = pneg %p90
        %p262 = pneg %p114
        %p263 = pneg %p111
        %p264 = pneg %p135
        %p265 = pneg %p132
        %p266 = pneg %p156
        %p267 = pneg %p153
        %p268 = pneg %p184
        %p269 = pneg %p181
        %s270 = sand.u32 %s171, 1
        %s271 = scalar_lea.sflag [#allocation8], %s270
        %s272 = sand.u32 %s171, 1
        %s273 = smul.addr %s272, 128
        %s274 = scalar_lea.vmem [#allocation11], %s273
        %s275 = smul.u32 16, %s28
        %s277 = smul.u32 %s28, 16
        %s278 = sand.u32 %s28, 1
        %p279 = scmp.eq.s32.totalorder %s28, 0
        // Predicated region
        $region53: #{tpu_custom_call.1} parent=43 // pred_check
          %p280 = pneg %p279
        $region54: #{tpu_custom_call.1} parent=43 // pred_check_branch
          %282 = sbr.rel (%p280) target = $region56
        $region55: #{tpu_custom_call.1} parent=43 // pred_region
          %s283 = smul.u32 %s27, 54
          %s284 = smul.addr %s283, 64
          %s285 = scalar_lea.hbm %s0, %s284
          // Predicated region
          $region57: #{tpu_custom_call.1} parent=55 // pred_check
            _
          $region58: #{tpu_custom_call.1} parent=55 // pred_check_branch
            %287 = sbr.rel target = $region60
          $region59: #{tpu_custom_call.1} parent=55 // pred_region
            %288 = sst [smem:[#allocation14]] [#allocation13]
            %289 = sst [smem:[#allocation15]] [#allocation12]
          $region60: #{tpu_custom_call.1} parent=55 // pred_fallthru
            _
          %291 = shalt.err (0)
          %s293 = sshll.u32 [#allocation2], 4
          %s294 = int_to_ptr.vmem [resolvable:$true] %s293
          %296 = dma.hbm_to_vmem [thread:$0]  %s285, 3456, %s294, [#allocation5]
        $region56: #{tpu_custom_call.1} parent=43 // pred_fallthru
          _
        %s297 = sadd.s32 %s28, 1
        %p298 = scmp.lt.s32.totalorder %s297, 1
        // Predicated region
        $region61: #{tpu_custom_call.1} parent=43 // pred_check
          %p299 = pneg %p298
        $region62: #{tpu_custom_call.1} parent=43 // pred_check_branch
          %301 = sbr.rel (%p299) target = $region64
        $region63: #{tpu_custom_call.1} parent=43 // pred_region
          %s302 = ssub.s32 1, %s278
          %s303 = smul.u32 %s297, 16
          %s304 = smul.u32 %s303, 3
          %s305 = smul.u32 %s27, 54
          %s306 = sadd.s32 %s304, %s305
          %s307 = smul.addr %s306, 64
          %s308 = scalar_lea.hbm %s0, %s307
          %s309 = smul.u32 %s302, 54
          %s310 = smul.addr %s309, 4
          %s311 = scalar_lea.vmem [#allocation2], %s310
          %s312 = scalar_lea.sflag [#allocation5], %s302
          // Predicated region
          $region65: #{tpu_custom_call.1} parent=63 // pred_check
            _
          $region66: #{tpu_custom_call.1} parent=63 // pred_check_branch
            %314 = sbr.rel target = $region68
          $region67: #{tpu_custom_call.1} parent=63 // pred_region
            %315 = sst [smem:[#allocation14]] [#allocation17]
            %316 = sst [smem:[#allocation15]] [#allocation16]
          $region68: #{tpu_custom_call.1} parent=63 // pred_fallthru
            _
          %318 = shalt.err (0)
          %s320 = sshll.u32 %s311, 4
          %s321 = int_to_ptr.vmem [resolvable:$true] %s320
          %323 = dma.hbm_to_vmem [thread:$0]  %s308, 3456, %s321, %s312
        $region64: #{tpu_custom_call.1} parent=43 // pred_fallthru
          _
        %s324 = smul.u32 %s278, 54
        %s325 = smul.addr %s324, 4
        %s326 = scalar_lea.vmem [#allocation2], %s325
        %s327 = scalar_lea.sflag [#allocation5], %s278
        %s328 = smul.u32 4, 18
        %s329 = smul.u32 %s328, 3
        %s330 = smul.u32 %s329, 1
        %s331 = sshll.u32 %s330, 4
        %332 = dma.done %s327, %s331
        %v333 = vld [vmem:[%s326] sm:$0xf]
        %v334 = vld [vmem:[%s326 + $0x4] sm:$0xf]
        %v335 = vld [vmem:[%s326 + $0x8] sm:$0xf]
        %v336 = vld [vmem:[%s326 + $0xc] sm:$0xf]
        %v337 = vld [vmem:[%s326 + $0x10] sm:$0xf]
        %v338 = vld [vmem:[%s326 + $0x14] sm:$0xf]
        %v339 = vld [vmem:[%s326 + $0x18] sm:$0xf]
        %v340 = vld [vmem:[%s326 + $0x1c] sm:$0xf]
        %v341 = vld [vmem:[%s326 + $0x20] sm:$0xf]
        %v342 = vld [vmem:[%s326 + $0x24] sm:$0xf]
        %v343 = vld [vmem:[%s326 + $0x28] sm:$0xf]
        %v344 = vld [vmem:[%s326 + $0x2c] sm:$0xf]
        %v345 = vld [vmem:[%s326 + $0x30] sm:$0xf]
        %v346 = vld [vmem:[%s326 + $0x34] sm:$0xf]
        %v347 = vld [vmem:[%s326 + $0x38] sm:$0xf]
        %v348 = vld [vmem:[%s326 + $0x3c] sm:$0xf]
        %v349 = vld [vmem:[%s326 + $0x40] sm:$0xf]
        %v350 = vld [vmem:[%s326 + $0x44] sm:$0xf]
        %v351 = vld [vmem:[%s326 + $0x48] sm:$0xf]
        %v352 = vld [vmem:[%s326 + $0x4c] sm:$0xf]
        %v353 = vld [vmem:[%s326 + $0x50] sm:$0xf]
        %v354 = vld [vmem:[%s326 + $0x54] sm:$0xf]
        %v355 = vld [vmem:[%s326 + $0x58] sm:$0xf]
        %v356 = vld [vmem:[%s326 + $0x5c] sm:$0xf]
        %v357 = vld [vmem:[%s326 + $0x60] sm:$0xf]
        %v358 = vld [vmem:[%s326 + $0x64] sm:$0xf]
        %v359 = vld [vmem:[%s326 + $0x68] sm:$0xf]
        %v360 = vld [vmem:[%s326 + $0x6c] sm:$0xf]
        %v361 = vld [vmem:[%s326 + $0x70] sm:$0xf]
        %v362 = vld [vmem:[%s326 + $0x74] sm:$0xf]
        %v363 = vld [vmem:[%s326 + $0x78] sm:$0xf]
        %v364 = vld [vmem:[%s326 + $0x7c] sm:$0xf]
        %v365 = vld [vmem:[%s326 + $0x80] sm:$0xf]
        %v366 = vld [vmem:[%s326 + $0x84] sm:$0xf]
        %v367 = vld [vmem:[%s326 + $0x88] sm:$0xf]
        %v368 = vld [vmem:[%s326 + $0x8c] sm:$0xf]
        %v369 = vld [vmem:[%s326 + $0x90] sm:$0xf]
        %v370 = vld [vmem:[%s326 + $0x94] sm:$0xf]
        %v371 = vld [vmem:[%s326 + $0x98] sm:$0xf]
        %v372 = vld [vmem:[%s326 + $0x9c] sm:$0xf]
        %v373 = vld [vmem:[%s326 + $0xa0] sm:$0xf]
        %v374 = vld [vmem:[%s326 + $0xa4] sm:$0xf]
        %v375 = vld [vmem:[%s326 + $0xa8] sm:$0xf]
        %v376 = vld [vmem:[%s326 + $0xac] sm:$0xf]
        %v377 = vld [vmem:[%s326 + $0xb0] sm:$0xf]
        %v378 = vld [vmem:[%s326 + $0xb4] sm:$0xf]
        %v379 = vld [vmem:[%s326 + $0xb8] sm:$0xf]
        %v380 = vld [vmem:[%s326 + $0xbc] sm:$0xf]
        %v381 = vld [vmem:[%s326 + $0xc0] sm:$0xf]
        %v382 = vld [vmem:[%s326 + $0xc4] sm:$0xf]
        %v383 = vld [vmem:[%s326 + $0xc8] sm:$0xf]
        %v384 = vld [vmem:[%s326 + $0xcc] sm:$0xf]
        %v385 = vld [vmem:[%s326 + $0xd0] sm:$0xf]
        %v386 = vld [vmem:[%s326 + $0xd4] sm:$0xf]
        %v387 = vld [vmem:[#allocation6] sm:$0xf]
        %v388 = vld [vmem:[#allocation6 + $0x4] sm:$0xf]
        %v389 = vld [vmem:[#allocation6 + $0x8] sm:$0xf]
        %v390 = vld [vmem:[#allocation6 + $0xc] sm:$0xf]
        %v391 = vld [vmem:[#allocation6 + $0x10] sm:$0xf]
        %v392 = vld [vmem:[#allocation6 + $0x14] sm:$0xf]
        %v393 = vld [vmem:[#allocation6 + $0x18] sm:$0xf]
        %v394 = vld [vmem:[#allocation6 + $0x1c] sm:$0xf]
        %v395 = vld [vmem:[#allocation6 + $0x20] sm:$0xf]
        %v396 = vld [vmem:[#allocation6 + $0x24] sm:$0xf]
        %v397 = vld [vmem:[#allocation6 + $0x28] sm:$0xf]
        %v398 = vld [vmem:[#allocation6 + $0x2c] sm:$0xf]
        %v399 = vld [vmem:[#allocation6 + $0x30] sm:$0xf]
        %v400 = vld [vmem:[#allocation6 + $0x34] sm:$0xf]
        %v401 = vld [vmem:[#allocation6 + $0x38] sm:$0xf]
        %v402 = vld [vmem:[#allocation6 + $0x3c] sm:$0xf]
        %v457 = vunpack.c.l.b16 %v333
        %v458 = vunpack.c.l.b16 %v334
        %v459 = vunpack.c.l.b16 %v335
        %v460 = vunpack.c.l.b16 %v336
        %v461 = vunpack.c.l.b16 %v337
        %v462 = vunpack.c.l.b16 %v338
        %v463 = vunpack.c.l.b16 %v339
        %v464 = vunpack.c.l.b16 %v340
        %v465 = vunpack.c.l.b16 %v341
        %v466 = vunpack.c.l.b16 %v342
        %v467 = vunpack.c.l.b16 %v343
        %v468 = vunpack.c.l.b16 %v344
        %v469 = vunpack.c.l.b16 %v345
        %v470 = vunpack.c.l.b16 %v346
        %v471 = vunpack.c.l.b16 %v347
        %v472 = vunpack.c.l.b16 %v348
        %v473 = vunpack.c.l.b16 %v349
        %v474 = vunpack.c.l.b16 %v350
        %v475 = vunpack.c.l.b16 %v351
        %v476 = vunpack.c.l.b16 %v352
        %v477 = vunpack.c.l.b16 %v353
        %v478 = vunpack.c.l.b16 %v354
        %v479 = vunpack.c.l.b16 %v355
        %v480 = vunpack.c.l.b16 %v356
        %v481 = vunpack.c.l.b16 %v357
        %v482 = vunpack.c.l.b16 %v358
        %v483 = vunpack.c.l.b16 %v359
        %v484 = vunpack.c.l.b16 %v360
        %v485 = vunpack.c.l.b16 %v361
        %v486 = vunpack.c.l.b16 %v362
        %v487 = vunpack.c.l.b16 %v363
        %v488 = vunpack.c.l.b16 %v364
        %v489 = vunpack.c.l.b16 %v365
        %v490 = vunpack.c.l.b16 %v366
        %v491 = vunpack.c.l.b16 %v367
        %v492 = vunpack.c.l.b16 %v368
        %v493 = vunpack.c.l.b16 %v369
        %v494 = vunpack.c.l.b16 %v370
        %v495 = vunpack.c.l.b16 %v371
        %v496 = vunpack.c.l.b16 %v372
        %v497 = vunpack.c.l.b16 %v373
        %v498 = vunpack.c.l.b16 %v374
        %v499 = vunpack.c.l.b16 %v375
        %v500 = vunpack.c.l.b16 %v376
        %v501 = vunpack.c.l.b16 %v377
        %v502 = vunpack.c.l.b16 %v378
        %v503 = vunpack.c.l.b16 %v379
        %v504 = vunpack.c.l.b16 %v380
        %v505 = vunpack.c.l.b16 %v381
        %v506 = vunpack.c.l.b16 %v382
        %v507 = vunpack.c.l.b16 %v383
        %v508 = vunpack.c.l.b16 %v384
        %v509 = vunpack.c.l.b16 %v385
        %v510 = vunpack.c.l.b16 %v386
        %v511 = vpack.c.b16 %v458, %v457
        %v512 = vpack.c.b16 %v460, %v459
        %v513 = vpack.c.b16 %v462, %v461
        %v514 = vpack.c.b16 %v464, %v463
        %v515 = vpack.c.b16 %v466, %v465
        %v516 = vpack.c.b16 %v468, %v467
        %v517 = vpack.c.b16 %v470, %v469
        %v518 = vpack.c.b16 %v472, %v471
        %v519 = vpack.c.b16 %v474, %v473
        %v520 = vpack.c.b16 %v476, %v475
        %v521 = vpack.c.b16 %v478, %v477
        %v522 = vpack.c.b16 %v480, %v479
        %v523 = vpack.c.b16 %v482, %v481
        %v524 = vpack.c.b16 %v484, %v483
        %v525 = vpack.c.b16 %v486, %v485
        %v526 = vpack.c.b16 %v488, %v487
        %v527 = vpack.c.b16 %v490, %v489
        %v528 = vpack.c.b16 %v492, %v491
        %v529 = vpack.c.b16 %v494, %v493
        %v530 = vpack.c.b16 %v496, %v495
        %v531 = vpack.c.b16 %v498, %v497
        %v532 = vpack.c.b16 %v500, %v499
        %v533 = vpack.c.b16 %v502, %v501
        %v534 = vpack.c.b16 %v504, %v503
        %v535 = vpack.c.b16 %v506, %v505
        %v536 = vpack.c.b16 %v508, %v507
        %v537 = vpack.c.b16 %v510, %v509
        %v581 = vunpack.c.l.b16 %v387
        %v582 = vunpack.c.l.b16 %v388
        %v583 = vunpack.c.l.b16 %v389
        %v584 = vunpack.c.l.b16 %v390
        %v585 = vunpack.c.l.b16 %v391
        %v586 = vunpack.c.l.b16 %v392
        %v587 = vunpack.c.l.b16 %v393
        %v588 = vunpack.c.l.b16 %v394
        %v589 = vunpack.c.l.b16 %v395
        %v590 = vunpack.c.l.b16 %v396
        %v591 = vunpack.c.l.b16 %v397
        %v592 = vunpack.c.l.b16 %v398
        %v593 = vunpack.c.l.b16 %v399
        %v594 = vunpack.c.l.b16 %v400
        %v595 = vunpack.c.l.b16 %v401
        %v596 = vunpack.c.l.b16 %v402
        %v597 = vpack.c.b16 %v582, %v581
        %v598 = vpack.c.b16 %v584, %v583
        %v599 = vpack.c.b16 %v586, %v585
        %v600 = vpack.c.b16 %v588, %v587
        %v601 = vpack.c.b16 %v590, %v589
        %v602 = vpack.c.b16 %v592, %v591
        %v603 = vpack.c.b16 %v594, %v593
        %v604 = vpack.c.b16 %v596, %v595
        %613 = vmatprep.subr.bf16.mxu0 0
        %614 = vmatpush1.bf16.msra.mxu0 %v604
        %615 = vmatprep.subr.bf16.mxu0 0
        %616 = vmatpush1.bf16.msra.mxu0 %v603
        %617 = vmatprep.subr.bf16.mxu0 0
        %618 = vmatpush1.bf16.msra.mxu0 %v602
        %619 = vmatprep.subr.bf16.mxu0 0
        %620 = vmatpush1.bf16.msra.mxu0 %v601
        %621 = vmatprep.subr.bf16.mxu0 0
        %622 = vmatpush1.bf16.msra.mxu0 %v600
        %623 = vmatprep.subr.bf16.mxu0 0
        %624 = vmatpush1.bf16.msra.mxu0 %v599
        %625 = vmatprep.subr.bf16.mxu0 0
        %626 = vmatpush1.bf16.msra.mxu0 %v598
        %627 = vmatprep.subr.bf16.mxu0 0
        %628 = vmatpush1.bf16.msra.mxu0 %v597
        %629 = vmatprep.subr.bf16.mxu0 0
        %630 = vmatpush2.bf16.msra.mxu0 0
        %631 = vmatprep.subr.bf16.mxu0 0
        %632 = vmatpush2.bf16.msra.mxu0 0
        %633 = vmatprep.subr.bf16.mxu0 0
        %634 = vmatpush2.bf16.msra.mxu0 0
        %635 = vmatprep.subr.bf16.mxu0 0
        %636 = vmatpush2.bf16.msra.mxu0 0
        %637 = vmatprep.subr.bf16.mxu0 0
        %638 = vmatpush2.bf16.msra.mxu0 0
        %639 = vmatprep.subr.bf16.mxu0 0
        %640 = vmatpush2.bf16.msra.mxu0 0
        %641 = vmatprep.subr.bf16.mxu0 0
        %642 = vmatpush2.bf16.msra.mxu0 0
        %643 = vmatprep.subr.bf16.mxu0 0
        %644 = vmatpush2.bf16.msra.mxu0 0
        %645 = vmatprep.mubr.bf16.mxu0 0
        %646 = vmatmul.mubr.bf16.gmra.mxu0 %v511
        %v647 = vpop.f32.mrf.mxu0
        %v648 = vadd.f32 0.0, %v647
        %v649 = vpop.f32.mrf.mxu0
        %v650 = vpop.f32.mrf.mxu0
        %v651 = vadd.f32 0.0, %v650
        %v652 = vpop.f32.mrf.mxu0
        %653 = vmatprep.mubr.bf16.mxu0 0
        %654 = vmatmul.mubr.bf16.gmra.mxu0 %v512
        %v655 = vpop.f32.mrf.mxu0
        %v656 = vadd.f32 0.0, %v655
        %v657 = vpop.f32.mrf.mxu0
        %v658 = vpop.f32.mrf.mxu0
        %v659 = vadd.f32 0.0, %v658
        %v660 = vpop.f32.mrf.mxu0
        %661 = vmatprep.mubr.bf16.mxu0 0
        %662 = vmatmul.mubr.bf16.gmra.mxu0 %v513
        %v663 = vpop.f32.mrf.mxu0
        %v664 = vadd.f32 0.0, %v663
        %v665 = vpop.f32.mrf.mxu0
        %v666 = vpop.f32.mrf.mxu0
        %v667 = vadd.f32 0.0, %v666
        %v668 = vpop.f32.mrf.mxu0
        %669 = vmatprep.mubr.bf16.mxu0 0
        %670 = vmatmul.mubr.bf16.gmra.mxu0 %v514
        %v671 = vpop.f32.mrf.mxu0
        %v672 = vadd.f32 0.0, %v671
        %v673 = vpop.f32.mrf.mxu0
        %v674 = vpop.f32.mrf.mxu0
        %v675 = vadd.f32 0.0, %v674
        %v676 = vpop.f32.mrf.mxu0
        %677 = vmatprep.mubr.bf16.mxu0 0
        %678 = vmatmul.mubr.bf16.gmra.mxu0 %v515
        %v679 = vpop.f32.mrf.mxu0
        %v680 = vadd.f32 0.0, %v679
        %v681 = vpop.f32.mrf.mxu0
        %v682 = vpop.f32.mrf.mxu0
        %v683 = vadd.f32 0.0, %v682
        %v684 = vpop.f32.mrf.mxu0
        %685 = vmatprep.mubr.bf16.mxu0 0
        %686 = vmatmul.mubr.bf16.gmra.mxu0 %v516
        %v687 = vpop.f32.mrf.mxu0
        %v688 = vadd.f32 0.0, %v687
        %v689 = vpop.f32.mrf.mxu0
        %v690 = vpop.f32.mrf.mxu0
        %v691 = vadd.f32 0.0, %v690
        %v692 = vpop.f32.mrf.mxu0
        %693 = vmatprep.mubr.bf16.mxu0 0
        %694 = vmatmul.mubr.bf16.gmra.mxu0 %v517
        %v695 = vpop.f32.mrf.mxu0
        %v696 = vadd.f32 0.0, %v695
        %v697 = vpop.f32.mrf.mxu0
        %v698 = vpop.f32.mrf.mxu0
        %v699 = vadd.f32 0.0, %v698
        %v700 = vpop.f32.mrf.mxu0
        %701 = vmatprep.mubr.bf16.mxu0 0
        %702 = vmatmul.mubr.bf16.gmra.mxu0 %v518
        %v703 = vpop.f32.mrf.mxu0
        %v704 = vadd.f32 0.0, %v703
        %v705 = vpop.f32.mrf.mxu0
        %v706 = vpop.f32.mrf.mxu0
        %v707 = vadd.f32 0.0, %v706
        %v708 = vpop.f32.mrf.mxu0
        %709 = vmatprep.mubr.bf16.mxu0 0
        %710 = vmatmul.mubr.bf16.gmra.mxu0 %v519
        %v711 = vpop.f32.mrf.mxu0
        %v712 = vadd.f32 0.0, %v711
        %v713 = vpop.f32.mrf.mxu0
        %v714 = vpop.f32.mrf.mxu0
        %v715 = vadd.f32 0.0, %v714
        %v716 = vpop.f32.mrf.mxu0
        %717 = vmatprep.mubr.bf16.mxu0 0
        %718 = vmatmul.mubr.bf16.gmra.mxu0 %v520
        %v719 = vpop.f32.mrf.mxu0
        %v720 = vadd.f32 0.0, %v719
        %v721 = vpop.f32.mrf.mxu0
        %v722 = vpop.f32.mrf.mxu0
        %v723 = vadd.f32 0.0, %v722
        %v724 = vpop.f32.mrf.mxu0
        %725 = vmatprep.mubr.bf16.mxu0 0
        %726 = vmatmul.mubr.bf16.gmra.mxu0 %v521
        %v727 = vpop.f32.mrf.mxu0
        %v728 = vadd.f32 0.0, %v727
        %v729 = vpop.f32.mrf.mxu0
        %v730 = vpop.f32.mrf.mxu0
        %v731 = vadd.f32 0.0, %v730
        %v732 = vpop.f32.mrf.mxu0
        %733 = vmatprep.mubr.bf16.mxu0 0
        %734 = vmatmul.mubr.bf16.gmra.mxu0 %v522
        %v735 = vpop.f32.mrf.mxu0
        %v736 = vadd.f32 0.0, %v735
        %v737 = vpop.f32.mrf.mxu0
        %v738 = vpop.f32.mrf.mxu0
        %v739 = vadd.f32 0.0, %v738
        %v740 = vpop.f32.mrf.mxu0
        %741 = vmatprep.mubr.bf16.mxu0 0
        %742 = vmatmul.mubr.bf16.gmra.mxu0 %v523
        %v743 = vpop.f32.mrf.mxu0
        %v744 = vadd.f32 0.0, %v743
        %v745 = vpop.f32.mrf.mxu0
        %v746 = vpop.f32.mrf.mxu0
        %v747 = vadd.f32 0.0, %v746
        %v748 = vpop.f32.mrf.mxu0
        %749 = vmatprep.mubr.bf16.mxu0 0
        %750 = vmatmul.mubr.bf16.gmra.mxu0 %v524
        %v751 = vpop.f32.mrf.mxu0
        %v752 = vadd.f32 0.0, %v751
        %v753 = vpop.f32.mrf.mxu0
        %v754 = vpop.f32.mrf.mxu0
        %v755 = vadd.f32 0.0, %v754
        %v756 = vpop.f32.mrf.mxu0
        %757 = vmatprep.mubr.bf16.mxu0 0
        %758 = vmatmul.mubr.bf16.gmra.mxu0 %v525
        %v759 = vpop.f32.mrf.mxu0
        %v760 = vadd.f32 0.0, %v759
        %v761 = vpop.f32.mrf.mxu0
        %v762 = vpop.f32.mrf.mxu0
        %v763 = vadd.f32 0.0, %v762
        %v764 = vpop.f32.mrf.mxu0
        %765 = vmatprep.mubr.bf16.mxu0 0
        %766 = vmatmul.mubr.bf16.gmra.mxu0 %v526
        %v767 = vpop.f32.mrf.mxu0
        %v768 = vadd.f32 0.0, %v767
        %v769 = vpop.f32.mrf.mxu0
        %v770 = vpop.f32.mrf.mxu0
        %v771 = vadd.f32 0.0, %v770
        %v772 = vpop.f32.mrf.mxu0
        %773 = vmatprep.mubr.bf16.mxu0 0
        %774 = vmatmul.mubr.bf16.gmra.mxu0 %v527
        %v775 = vpop.f32.mrf.mxu0
        %v776 = vadd.f32 0.0, %v775
        %v777 = vpop.f32.mrf.mxu0
        %v778 = vpop.f32.mrf.mxu0
        %v779 = vadd.f32 0.0, %v778
        %v780 = vpop.f32.mrf.mxu0
        %781 = vmatprep.mubr.bf16.mxu0 0
        %782 = vmatmul.mubr.bf16.gmra.mxu0 %v528
        %v783 = vpop.f32.mrf.mxu0
        %v784 = vadd.f32 0.0, %v783
        %v785 = vpop.f32.mrf.mxu0
        %v786 = vpop.f32.mrf.mxu0
        %v787 = vadd.f32 0.0, %v786
        %v788 = vpop.f32.mrf.mxu0
        %789 = vmatprep.mubr.bf16.mxu0 0
        %790 = vmatmul.mubr.bf16.gmra.mxu0 %v529
        %v791 = vpop.f32.mrf.mxu0
        %v792 = vadd.f32 0.0, %v791
        %v793 = vpop.f32.mrf.mxu0
        %v794 = vpop.f32.mrf.mxu0
        %v795 = vadd.f32 0.0, %v794
        %v796 = vpop.f32.mrf.mxu0
        %797 = vmatprep.mubr.bf16.mxu0 0
        %798 = vmatmul.mubr.bf16.gmra.mxu0 %v530
        %v799 = vpop.f32.mrf.mxu0
        %v800 = vadd.f32 0.0, %v799
        %v801 = vpop.f32.mrf.mxu0
        %v802 = vpop.f32.mrf.mxu0
        %v803 = vadd.f32 0.0, %v802
        %v804 = vpop.f32.mrf.mxu0
        %805 = vmatprep.mubr.bf16.mxu0 0
        %806 = vmatmul.mubr.bf16.gmra.mxu0 %v531
        %v807 = vpop.f32.mrf.mxu0
        %v808 = vadd.f32 0.0, %v807
        %v809 = vpop.f32.mrf.mxu0
        %v810 = vpop.f32.mrf.mxu0
        %v811 = vadd.f32 0.0, %v810
        %v812 = vpop.f32.mrf.mxu0
        %813 = vmatprep.mubr.bf16.mxu0 0
        %814 = vmatmul.mubr.bf16.gmra.mxu0 %v532
        %v815 = vpop.f32.mrf.mxu0
        %v816 = vadd.f32 0.0, %v815
        %v817 = vpop.f32.mrf.mxu0
        %v818 = vpop.f32.mrf.mxu0
        %v819 = vadd.f32 0.0, %v818
        %v820 = vpop.f32.mrf.mxu0
        %821 = vmatprep.mubr.bf16.mxu0 0
        %822 = vmatmul.mubr.bf16.gmra.mxu0 %v533
        %v823 = vpop.f32.mrf.mxu0
        %v824 = vadd.f32 0.0, %v823
        %v825 = vpop.f32.mrf.mxu0
        %v826 = vpop.f32.mrf.mxu0
        %v827 = vadd.f32 0.0, %v826
        %v828 = vpop.f32.mrf.mxu0
        %829 = vmatprep.mubr.bf16.mxu0 0
        %830 = vmatmul.mubr.bf16.gmra.mxu0 %v534
        %v831 = vpop.f32.mrf.mxu0
        %v832 = vadd.f32 0.0, %v831
        %v833 = vpop.f32.mrf.mxu0
        %v834 = vpop.f32.mrf.mxu0
        %v835 = vadd.f32 0.0, %v834
        %v836 = vpop.f32.mrf.mxu0
        %837 = vmatprep.mubr.bf16.mxu0 0
        %838 = vmatmul.mubr.bf16.gmra.mxu0 %v535
        %v839 = vpop.f32.mrf.mxu0
        %v840 = vadd.f32 0.0, %v839
        %v841 = vpop.f32.mrf.mxu0
        %v842 = vpop.f32.mrf.mxu0
        %v843 = vadd.f32 0.0, %v842
        %v844 = vpop.f32.mrf.mxu0
        %845 = vmatprep.mubr.bf16.mxu0 0
        %846 = vmatmul.mubr.bf16.gmra.mxu0 %v536
        %v847 = vpop.f32.mrf.mxu0
        %v848 = vadd.f32 0.0, %v847
        %v849 = vpop.f32.mrf.mxu0
        %v850 = vpop.f32.mrf.mxu0
        %v851 = vadd.f32 0.0, %v850
        %v852 = vpop.f32.mrf.mxu0
        %853 = vmatprep.mubr.bf16.mxu0 0
        %854 = vmatmul.mubr.bf16.gmra.mxu0 %v537
        %v855 = vpop.f32.mrf.mxu0
        %v856 = vadd.f32 0.0, %v855
        %v857 = vpop.f32.mrf.mxu0
        %v858 = vpop.f32.mrf.mxu0
        %v859 = vadd.f32 0.0, %v858
        %v860 = vpop.f32.mrf.mxu0
        %861 = vdwg.mxu0
        %v862 = vld [vmem:[%s2] sm:$0x1]
        %v864 = vlaneseq
        %v865 = vshrl.u32 %v864, 7
        %v866 = vsub.s32 0, %v865
        %v867 = vrot.slane %v862, %v866
        %v869 = vmul.f32 %v648, %v867
        %v870 = vmul.f32 %v651, %v867
        %v871 = vmul.f32 %v656, %v867
        %v872 = vmul.f32 %v659, %v867
        %v873 = vmul.f32 %v664, %v867
        %v874 = vmul.f32 %v667, %v867
        %v875 = vmul.f32 %v672, %v867
        %v876 = vmul.f32 %v675, %v867
        %v877 = vmul.f32 %v680, %v867
        %v878 = vmul.f32 %v683, %v867
        %v879 = vmul.f32 %v688, %v867
        %v880 = vmul.f32 %v691, %v867
        %v881 = vmul.f32 %v696, %v867
        %v882 = vmul.f32 %v699, %v867
        %v883 = vmul.f32 %v704, %v867
        %v884 = vmul.f32 %v707, %v867
        %v885 = vmul.f32 %v712, %v867
        %v886 = vmul.f32 %v715, %v867
        %v887 = vmul.f32 %v720, %v867
        %v888 = vmul.f32 %v723, %v867
        %v889 = vmul.f32 %v728, %v867
        %v890 = vmul.f32 %v731, %v867
        %v891 = vmul.f32 %v736, %v867
        %v892 = vmul.f32 %v739, %v867
        %v893 = vmul.f32 %v744, %v867
        %v894 = vmul.f32 %v747, %v867
        %v895 = vmul.f32 %v752, %v867
        %v896 = vmul.f32 %v755, %v867
        %v897 = vmul.f32 %v760, %v867
        %v898 = vmul.f32 %v763, %v867
        %v899 = vmul.f32 %v768, %v867
        %v900 = vmul.f32 %v771, %v867
        %v901 = vmul.f32 %v776, %v867
        %v902 = vmul.f32 %v779, %v867
        %v903 = vmul.f32 %v784, %v867
        %v904 = vmul.f32 %v787, %v867
        %v905 = vmul.f32 %v792, %v867
        %v906 = vmul.f32 %v795, %v867
        %v907 = vmul.f32 %v800, %v867
        %v908 = vmul.f32 %v803, %v867
        %v909 = vmul.f32 %v808, %v867
        %v910 = vmul.f32 %v811, %v867
        %v911 = vmul.f32 %v816, %v867
        %v912 = vmul.f32 %v819, %v867
        %v913 = vmul.f32 %v824, %v867
        %v914 = vmul.f32 %v827, %v867
        %v915 = vmul.f32 %v832, %v867
        %v916 = vmul.f32 %v835, %v867
        %v917 = vmul.f32 %v840, %v867
        %v918 = vmul.f32 %v843, %v867
        %v919 = vmul.f32 %v848, %v867
        %v920 = vmul.f32 %v851, %v867
        %v921 = vmul.f32 %v856, %v867
        %v922 = vmul.f32 %v859, %v867
        %v923 = vld [vmem:[%s3] sm:$0x1]
        %v925 = vlaneseq
        %v926 = vshrl.u32 %v925, 7
        %v927 = vsub.s32 0, %v926
        %v928 = vrot.slane %v923, %v927
        %v930 = vadd.f32 %v869, %v928
        %v931 = vadd.f32 %v870, %v928
        %v932 = vadd.f32 %v871, %v928
        %v933 = vadd.f32 %v872, %v928
        %v934 = vadd.f32 %v873, %v928
        %v935 = vadd.f32 %v874, %v928
        %v936 = vadd.f32 %v875, %v928
        %v937 = vadd.f32 %v876, %v928
        %v938 = vadd.f32 %v877, %v928
        %v939 = vadd.f32 %v878, %v928
        %v940 = vadd.f32 %v879, %v928
        %v941 = vadd.f32 %v880, %v928
        %v942 = vadd.f32 %v881, %v928
        %v943 = vadd.f32 %v882, %v928
        %v944 = vadd.f32 %v883, %v928
        %v945 = vadd.f32 %v884, %v928
        %v946 = vadd.f32 %v885, %v928
        %v947 = vadd.f32 %v886, %v928
        %v948 = vadd.f32 %v887, %v928
        %v949 = vadd.f32 %v888, %v928
        %v950 = vadd.f32 %v889, %v928
        %v951 = vadd.f32 %v890, %v928
        %v952 = vadd.f32 %v891, %v928
        %v953 = vadd.f32 %v892, %v928
        %v954 = vadd.f32 %v893, %v928
        %v955 = vadd.f32 %v894, %v928
        %v956 = vadd.f32 %v895, %v928
        %v957 = vadd.f32 %v896, %v928
        %v958 = vadd.f32 %v897, %v928
        %v959 = vadd.f32 %v898, %v928
        %v960 = vadd.f32 %v899, %v928
        %v961 = vadd.f32 %v900, %v928
        %v962 = vadd.f32 %v901, %v928
        %v963 = vadd.f32 %v902, %v928
        %v964 = vadd.f32 %v903, %v928
        %v965 = vadd.f32 %v904, %v928
        %v966 = vadd.f32 %v905, %v928
        %v967 = vadd.f32 %v906, %v928
        %v968 = vadd.f32 %v907, %v928
        %v969 = vadd.f32 %v908, %v928
        %v970 = vadd.f32 %v909, %v928
        %v971 = vadd.f32 %v910, %v928
        %v972 = vadd.f32 %v911, %v928
        %v973 = vadd.f32 %v912, %v928
        %v974 = vadd.f32 %v913, %v928
        %v975 = vadd.f32 %v914, %v928
        %v976 = vadd.f32 %v915, %v928
        %v977 = vadd.f32 %v916, %v928
        %v978 = vadd.f32 %v917, %v928
        %v979 = vadd.f32 %v918, %v928
        %v980 = vadd.f32 %v919, %v928
        %v981 = vadd.f32 %v920, %v928
        %v982 = vadd.f32 %v921, %v928
        %v983 = vadd.f32 %v922, %v928
        %v984 = vmax.f32 %v930, 0.0
        %v985 = vmax.f32 %v931, 0.0
        %v986 = vmax.f32 %v932, 0.0
        %v987 = vmax.f32 %v933, 0.0
        %v988 = vmax.f32 %v934, 0.0
        %v989 = vmax.f32 %v935, 0.0
        %v990 = vmax.f32 %v936, 0.0
        %v991 = vmax.f32 %v937, 0.0
        %v992 = vmax.f32 %v938, 0.0
        %v993 = vmax.f32 %v939, 0.0
        %v994 = vmax.f32 %v940, 0.0
        %v995 = vmax.f32 %v941, 0.0
        %v996 = vmax.f32 %v942, 0.0
        %v997 = vmax.f32 %v943, 0.0
        %v998 = vmax.f32 %v944, 0.0
        %v999 = vmax.f32 %v945, 0.0
        %v1000 = vmax.f32 %v946, 0.0
        %v1001 = vmax.f32 %v947, 0.0
        %v1002 = vmax.f32 %v948, 0.0
        %v1003 = vmax.f32 %v949, 0.0
        %v1004 = vmax.f32 %v950, 0.0
        %v1005 = vmax.f32 %v951, 0.0
        %v1006 = vmax.f32 %v952, 0.0
        %v1007 = vmax.f32 %v953, 0.0
        %v1008 = vmax.f32 %v954, 0.0
        %v1009 = vmax.f32 %v955, 0.0
        %v1010 = vmax.f32 %v956, 0.0
        %v1011 = vmax.f32 %v957, 0.0
        %v1012 = vmax.f32 %v958, 0.0
        %v1013 = vmax.f32 %v959, 0.0
        %v1014 = vmax.f32 %v960, 0.0
        %v1015 = vmax.f32 %v961, 0.0
        %v1016 = vmax.f32 %v962, 0.0
        %v1017 = vmax.f32 %v963, 0.0
        %v1018 = vmax.f32 %v964, 0.0
        %v1019 = vmax.f32 %v965, 0.0
        %v1020 = vmax.f32 %v966, 0.0
        %v1021 = vmax.f32 %v967, 0.0
        %v1022 = vmax.f32 %v968, 0.0
        %v1023 = vmax.f32 %v969, 0.0
        %v1024 = vmax.f32 %v970, 0.0
        %v1025 = vmax.f32 %v971, 0.0
        %v1026 = vmax.f32 %v972, 0.0
        %v1027 = vmax.f32 %v973, 0.0
        %v1028 = vmax.f32 %v974, 0.0
        %v1029 = vmax.f32 %v975, 0.0
        %v1030 = vmax.f32 %v976, 0.0
        %v1031 = vmax.f32 %v977, 0.0
        %v1032 = vmax.f32 %v978, 0.0
        %v1033 = vmax.f32 %v979, 0.0
        %v1034 = vmax.f32 %v980, 0.0
        %v1035 = vmax.f32 %v981, 0.0
        %v1036 = vmax.f32 %v982, 0.0
        %v1037 = vmax.f32 %v983, 0.0
        %v1038 = vpack.c.bf16 %v985, %v984
        %v1039 = vpack.c.bf16 %v986, %v986
        %v1040 = vpack.c.bf16 %v988, %v987
        %v1041 = vpack.c.bf16 %v989, %v989
        %v1042 = vpack.c.bf16 %v991, %v990
        %v1043 = vpack.c.bf16 %v992, %v992
        %v1044 = vpack.c.bf16 %v994, %v993
        %v1045 = vpack.c.bf16 %v995, %v995
        %v1046 = vpack.c.bf16 %v997, %v996
        %v1047 = vpack.c.bf16 %v998, %v998
        %v1048 = vpack.c.bf16 %v1000, %v999
        %v1049 = vpack.c.bf16 %v1001, %v1001
        %v1050 = vpack.c.bf16 %v1003, %v1002
        %v1051 = vpack.c.bf16 %v1004, %v1004
        %v1052 = vpack.c.bf16 %v1006, %v1005
        %v1053 = vpack.c.bf16 %v1007, %v1007
        %v1054 = vpack.c.bf16 %v1009, %v1008
        %v1055 = vpack.c.bf16 %v1010, %v1010
        %v1056 = vpack.c.bf16 %v1012, %v1011
        %v1057 = vpack.c.bf16 %v1013, %v1013
        %v1058 = vpack.c.bf16 %v1015, %v1014
        %v1059 = vpack.c.bf16 %v1016, %v1016
        %v1060 = vpack.c.bf16 %v1018, %v1017
        %v1061 = vpack.c.bf16 %v1019, %v1019
        %v1062 = vpack.c.bf16 %v1021, %v1020
        %v1063 = vpack.c.bf16 %v1022, %v1022
        %v1064 = vpack.c.bf16 %v1024, %v1023
        %v1065 = vpack.c.bf16 %v1025, %v1025
        %v1066 = vpack.c.bf16 %v1027, %v1026
        %v1067 = vpack.c.bf16 %v1028, %v1028
        %v1068 = vpack.c.bf16 %v1030, %v1029
        %v1069 = vpack.c.bf16 %v1031, %v1031
        %v1070 = vpack.c.bf16 %v1033, %v1032
        %v1071 = vpack.c.bf16 %v1034, %v1034
        %v1072 = vpack.c.bf16 %v1036, %v1035
        %v1073 = vpack.c.bf16 %v1037, %v1037
        %v1110 = vunpack.c.l.b16 %v1038
        %v1111 = vunpack.c.h.b16 %v1038
        %v1112 = vunpack.c.l.b16 %v1039
        %v1113 = vunpack.c.l.b16 %v1040
        %v1114 = vunpack.c.h.b16 %v1040
        %v1115 = vunpack.c.l.b16 %v1041
        %v1116 = vunpack.c.l.b16 %v1042
        %v1117 = vunpack.c.h.b16 %v1042
        %v1118 = vunpack.c.l.b16 %v1043
        %v1119 = vunpack.c.l.b16 %v1044
        %v1120 = vunpack.c.h.b16 %v1044
        %v1121 = vunpack.c.l.b16 %v1045
        %v1122 = vunpack.c.l.b16 %v1046
        %v1123 = vunpack.c.h.b16 %v1046
        %v1124 = vunpack.c.l.b16 %v1047
        %v1125 = vunpack.c.l.b16 %v1048
        %v1126 = vunpack.c.h.b16 %v1048
        %v1127 = vunpack.c.l.b16 %v1049
        %v1128 = vunpack.c.l.b16 %v1050
        %v1129 = vunpack.c.h.b16 %v1050
        %v1130 = vunpack.c.l.b16 %v1051
        %v1131 = vunpack.c.l.b16 %v1052
        %v1132 = vunpack.c.h.b16 %v1052
        %v1133 = vunpack.c.l.b16 %v1053
        %v1134 = vunpack.c.l.b16 %v1054
        %v1135 = vunpack.c.h.b16 %v1054
        %v1136 = vunpack.c.l.b16 %v1055
        %v1137 = vunpack.c.l.b16 %v1056
        %v1138 = vunpack.c.h.b16 %v1056
        %v1139 = vunpack.c.l.b16 %v1057
        %v1140 = vunpack.c.l.b16 %v1058
        %v1141 = vunpack.c.h.b16 %v1058
        %v1142 = vunpack.c.l.b16 %v1059
        %v1143 = vunpack.c.l.b16 %v1060
        %v1144 = vunpack.c.h.b16 %v1060
        %v1145 = vunpack.c.l.b16 %v1061
        %v1146 = vunpack.c.l.b16 %v1062
        %v1147 = vunpack.c.h.b16 %v1062
        %v1148 = vunpack.c.l.b16 %v1063
        %v1149 = vunpack.c.l.b16 %v1064
        %v1150 = vunpack.c.h.b16 %v1064
        %v1151 = vunpack.c.l.b16 %v1065
        %v1152 = vunpack.c.l.b16 %v1066
        %v1153 = vunpack.c.h.b16 %v1066
        %v1154 = vunpack.c.l.b16 %v1067
        %v1155 = vunpack.c.l.b16 %v1068
        %v1156 = vunpack.c.h.b16 %v1068
        %v1157 = vunpack.c.l.b16 %v1069
        %v1158 = vunpack.c.l.b16 %v1070
        %v1159 = vunpack.c.h.b16 %v1070
        %v1160 = vunpack.c.l.b16 %v1071
        %v1161 = vunpack.c.l.b16 %v1072
        %v1162 = vunpack.c.h.b16 %v1072
        %v1163 = vunpack.c.l.b16 %v1073
        %v1164 = vpack.c.b16 %v1110, %v1110
        %v1165 = vpack.c.b16 %v1111, %v1111
        %v1166 = vpack.c.b16 %v1112, %v1112
        %v1167 = vpack.c.b16 %v1113, %v1113
        %v1168 = vpack.c.b16 %v1114, %v1114
        %v1169 = vpack.c.b16 %v1115, %v1115
        %v1170 = vpack.c.b16 %v1116, %v1116
        %v1171 = vpack.c.b16 %v1117, %v1117
        %v1172 = vpack.c.b16 %v1118, %v1118
        %v1173 = vpack.c.b16 %v1119, %v1119
        %v1174 = vpack.c.b16 %v1120, %v1120
        %v1175 = vpack.c.b16 %v1121, %v1121
        %v1176 = vpack.c.b16 %v1122, %v1122
        %v1177 = vpack.c.b16 %v1123, %v1123
        %v1178 = vpack.c.b16 %v1124, %v1124
        %v1179 = vpack.c.b16 %v1125, %v1125
        %v1180 = vpack.c.b16 %v1126, %v1126
        %v1181 = vpack.c.b16 %v1127, %v1127
        %v1182 = vpack.c.b16 %v1128, %v1128
        %v1183 = vpack.c.b16 %v1129, %v1129
        %v1184 = vpack.c.b16 %v1130, %v1130
        %v1185 = vpack.c.b16 %v1131, %v1131
        %v1186 = vpack.c.b16 %v1132, %v1132
        %v1187 = vpack.c.b16 %v1133, %v1133
        %v1188 = vpack.c.b16 %v1134, %v1134
        %v1189 = vpack.c.b16 %v1135, %v1135
        %v1190 = vpack.c.b16 %v1136, %v1136
        %v1191 = vpack.c.b16 %v1137, %v1137
        %v1192 = vpack.c.b16 %v1138, %v1138
        %v1193 = vpack.c.b16 %v1139, %v1139
        %v1194 = vpack.c.b16 %v1140, %v1140
        %v1195 = vpack.c.b16 %v1141, %v1141
        %v1196 = vpack.c.b16 %v1142, %v1142
        %v1197 = vpack.c.b16 %v1143, %v1143
        %v1198 = vpack.c.b16 %v1144, %v1144
        %v1199 = vpack.c.b16 %v1145, %v1145
        %v1200 = vpack.c.b16 %v1146, %v1146
        %v1201 = vpack.c.b16 %v1147, %v1147
        %v1202 = vpack.c.b16 %v1148, %v1148
        %v1203 = vpack.c.b16 %v1149, %v1149
        %v1204 = vpack.c.b16 %v1150, %v1150
        %v1205 = vpack.c.b16 %v1151, %v1151
        %v1206 = vpack.c.b16 %v1152, %v1152
        %v1207 = vpack.c.b16 %v1153, %v1153
        %v1208 = vpack.c.b16 %v1154, %v1154
        %v1209 = vpack.c.b16 %v1155, %v1155
        %v1210 = vpack.c.b16 %v1156, %v1156
        %v1211 = vpack.c.b16 %v1157, %v1157
        %v1212 = vpack.c.b16 %v1158, %v1158
        %v1213 = vpack.c.b16 %v1159, %v1159
        %v1214 = vpack.c.b16 %v1160, %v1160
        %v1215 = vpack.c.b16 %v1161, %v1161
        %v1216 = vpack.c.b16 %v1162, %v1162
        %v1217 = vpack.c.b16 %v1163, %v1163
        %1272 = vst [vmem:[#allocation3] sm:$0xf] %v1164
        %1273 = vst [vmem:[#allocation3 + $0x4] sm:$0xf] %v1165
        %1274 = vst [vmem:[#allocation3 + $0x8] sm:$0xf] %v1166
        %1275 = vst [vmem:[#allocation3 + $0xc] sm:$0xf] %v1167
        %1276 = vst [vmem:[#allocation3 + $0x10] sm:$0xf] %v1168
        %1277 = vst [vmem:[#allocation3 + $0x14] sm:$0xf] %v1169
        %1278 = vst [vmem:[#allocation3 + $0x18] sm:$0xf] %v1170
        %1279 = vst [vmem:[#allocation3 + $0x1c] sm:$0xf] %v1171
        %1280 = vst [vmem:[#allocation3 + $0x20] sm:$0xf] %v1172
        %1281 = vst [vmem:[#allocation3 + $0x24] sm:$0xf] %v1173
        %1282 = vst [vmem:[#allocation3 + $0x28] sm:$0xf] %v1174
        %1283 = vst [vmem:[#allocation3 + $0x2c] sm:$0xf] %v1175
        %1284 = vst [vmem:[#allocation3 + $0x30] sm:$0xf] %v1176
        %1285 = vst [vmem:[#allocation3 + $0x34] sm:$0xf] %v1177
        %1286 = vst [vmem:[#allocation3 + $0x38] sm:$0xf] %v1178
        %1287 = vst [vmem:[#allocation3 + $0x3c] sm:$0xf] %v1179
        %1288 = vst [vmem:[#allocation3 + $0x40] sm:$0xf] %v1180
        %1289 = vst [vmem:[#allocation3 + $0x44] sm:$0xf] %v1181
        %1290 = vst [vmem:[#allocation3 + $0x48] sm:$0xf] %v1182
        %1291 = vst [vmem:[#allocation3 + $0x4c] sm:$0xf] %v1183
        %1292 = vst [vmem:[#allocation3 + $0x50] sm:$0xf] %v1184
        %1293 = vst [vmem:[#allocation3 + $0x54] sm:$0xf] %v1185
        %1294 = vst [vmem:[#allocation3 + $0x58] sm:$0xf] %v1186
        %1295 = vst [vmem:[#allocation3 + $0x5c] sm:$0xf] %v1187
        %1296 = vst [vmem:[#allocation3 + $0x60] sm:$0xf] %v1188
        %1297 = vst [vmem:[#allocation3 + $0x64] sm:$0xf] %v1189
        %1298 = vst [vmem:[#allocation3 + $0x68] sm:$0xf] %v1190
        %1299 = vst [vmem:[#allocation3 + $0x6c] sm:$0xf] %v1191
        %1300 = vst [vmem:[#allocation3 + $0x70] sm:$0xf] %v1192
        %1301 = vst [vmem:[#allocation3 + $0x74] sm:$0xf] %v1193
        %1302 = vst [vmem:[#allocation3 + $0x78] sm:$0xf] %v1194
        %1303 = vst [vmem:[#allocation3 + $0x7c] sm:$0xf] %v1195
        %1304 = vst [vmem:[#allocation3 + $0x80] sm:$0xf] %v1196
        %1305 = vst [vmem:[#allocation3 + $0x84] sm:$0xf] %v1197
        %1306 = vst [vmem:[#allocation3 + $0x88] sm:$0xf] %v1198
        %1307 = vst [vmem:[#allocation3 + $0x8c] sm:$0xf] %v1199
        %1308 = vst [vmem:[#allocation3 + $0x90] sm:$0xf] %v1200
        %1309 = vst [vmem:[#allocation3 + $0x94] sm:$0xf] %v1201
        %1310 = vst [vmem:[#allocation3 + $0x98] sm:$0xf] %v1202
        %1311 = vst [vmem:[#allocation3 + $0x9c] sm:$0xf] %v1203
        %1312 = vst [vmem:[#allocation3 + $0xa0] sm:$0xf] %v1204
        %1313 = vst [vmem:[#allocation3 + $0xa4] sm:$0xf] %v1205
        %1314 = vst [vmem:[#allocation3 + $0xa8] sm:$0xf] %v1206
        %1315 = vst [vmem:[#allocation3 + $0xac] sm:$0xf] %v1207
        %1316 = vst [vmem:[#allocation3 + $0xb0] sm:$0xf] %v1208
        %1317 = vst [vmem:[#allocation3 + $0xb4] sm:$0xf] %v1209
        %1318 = vst [vmem:[#allocation3 + $0xb8] sm:$0xf] %v1210
        %1319 = vst [vmem:[#allocation3 + $0xbc] sm:$0xf] %v1211
        %1320 = vst [vmem:[#allocation3 + $0xc0] sm:$0xf] %v1212
        %1321 = vst [vmem:[#allocation3 + $0xc4] sm:$0xf] %v1213
        %1322 = vst [vmem:[#allocation3 + $0xc8] sm:$0xf] %v1214
        %1323 = vst [vmem:[#allocation3 + $0xcc] sm:$0xf] %v1215
        %1324 = vst [vmem:[#allocation3 + $0xd0] sm:$0xf] %v1216
        %1325 = vst [vmem:[#allocation3 + $0xd4] sm:$0xf] %v1217
        %vm1326 = vcmask 1040384
        %vm1327 = vsmask.f32 256
        %vm1328 = vmand %vm1326, %vm1327
        %v1329 = vld [vmem:[#allocation3] sm:$0x1]
        %v1330 = vsel %vm1328, 0, %v1329
        %1331 = vst [vmem:[#allocation3] sm:$0x1] %v1330
        %v1332 = vld [vmem:[#allocation3 + $0xc] sm:$0x1]
        %v1333 = vsel %vm1328, 0, %v1332
        %1334 = vst [vmem:[#allocation3 + $0xc] sm:$0x1] %v1333
        %v1335 = vld [vmem:[#allocation3 + $0x18] sm:$0x1]
        %v1336 = vsel %vm1328, 0, %v1335
        %1337 = vst [vmem:[#allocation3 + $0x18] sm:$0x1] %v1336
        %v1338 = vld [vmem:[#allocation3 + $0x24] sm:$0x1]
        %v1339 = vsel %vm1328, 0, %v1338
        %1340 = vst [vmem:[#allocation3 + $0x24] sm:$0x1] %v1339
        %v1341 = vld [vmem:[#allocation3 + $0x30] sm:$0x1]
        %v1342 = vsel %vm1328, 0, %v1341
        %1343 = vst [vmem:[#allocation3 + $0x30] sm:$0x1] %v1342
        %v1344 = vld [vmem:[#allocation3 + $0x3c] sm:$0x1]
        %v1345 = vsel %vm1328, 0, %v1344
        %1346 = vst [vmem:[#allocation3 + $0x3c] sm:$0x1] %v1345
        %v1347 = vld [vmem:[#allocation3 + $0x48] sm:$0x1]
        %v1348 = vsel %vm1328, 0, %v1347
        %1349 = vst [vmem:[#allocation3 + $0x48] sm:$0x1] %v1348
        %v1350 = vld [vmem:[#allocation3 + $0x54] sm:$0x1]
        %v1351 = vsel %vm1328, 0, %v1350
        %1352 = vst [vmem:[#allocation3 + $0x54] sm:$0x1] %v1351
        %v1353 = vld [vmem:[#allocation3 + $0x60] sm:$0x1]
        %v1354 = vsel %vm1328, 0, %v1353
        %1355 = vst [vmem:[#allocation3 + $0x60] sm:$0x1] %v1354
        %v1356 = vld [vmem:[#allocation3 + $0x6c] sm:$0x1]
        %v1357 = vsel %vm1328, 0, %v1356
        %1358 = vst [vmem:[#allocation3 + $0x6c] sm:$0x1] %v1357
        %v1359 = vld [vmem:[#allocation3 + $0x78] sm:$0x1]
        %v1360 = vsel %vm1328, 0, %v1359
        %1361 = vst [vmem:[#allocation3 + $0x78] sm:$0x1] %v1360
        %v1362 = vld [vmem:[#allocation3 + $0x84] sm:$0x1]
        %v1363 = vsel %vm1328, 0, %v1362
        %1364 = vst [vmem:[#allocation3 + $0x84] sm:$0x1] %v1363
        %v1365 = vld [vmem:[#allocation3 + $0x90] sm:$0x1]
        %v1366 = vsel %vm1328, 0, %v1365
        %1367 = vst [vmem:[#allocation3 + $0x90] sm:$0x1] %v1366
        %v1368 = vld [vmem:[#allocation3 + $0x9c] sm:$0x1]
        %v1369 = vsel %vm1328, 0, %v1368
        %1370 = vst [vmem:[#allocation3 + $0x9c] sm:$0x1] %v1369
        %v1371 = vld [vmem:[#allocation3 + $0xa8] sm:$0x1]
        %v1372 = vsel %vm1328, 0, %v1371
        %1373 = vst [vmem:[#allocation3 + $0xa8] sm:$0x1] %v1372
        %v1374 = vld [vmem:[#allocation3 + $0xb4] sm:$0x1]
        %v1375 = vsel %vm1328, 0, %v1374
        %1376 = vst [vmem:[#allocation3 + $0xb4] sm:$0x1] %v1375
        %v1377 = vld [vmem:[#allocation3 + $0xc0] sm:$0x1]
        %v1378 = vsel %vm1328, 0, %v1377
        %1379 = vst [vmem:[#allocation3 + $0xc0] sm:$0x1] %v1378
        %v1380 = vld [vmem:[#allocation3 + $0xcc] sm:$0x1]
        %v1381 = vsel %vm1328, 0, %v1380
        %1382 = vst [vmem:[#allocation3 + $0xcc] sm:$0x1] %v1381
        %vm1383 = vsmask.f32 7938
        %vm1384 = vmand %vm1326, %vm1383
        %v1385 = vld [vmem:[#allocation3 + $0x8] sm:$0x1]
        %v1386 = vsel %vm1384, 0, %v1385
        %1387 = vst [vmem:[#allocation3 + $0x8] sm:$0x1] %v1386
        %v1388 = vld [vmem:[#allocation3 + $0x14] sm:$0x1]
        %v1389 = vsel %vm1384, 0, %v1388
        %1390 = vst [vmem:[#allocation3 + $0x14] sm:$0x1] %v1389
        %v1391 = vld [vmem:[#allocation3 + $0x20] sm:$0x1]
        %v1392 = vsel %vm1384, 0, %v1391
        %1393 = vst [vmem:[#allocation3 + $0x20] sm:$0x1] %v1392
        %v1394 = vld [vmem:[#allocation3 + $0x2c] sm:$0x1]
        %v1395 = vsel %vm1384, 0, %v1394
        %1396 = vst [vmem:[#allocation3 + $0x2c] sm:$0x1] %v1395
        %v1397 = vld [vmem:[#allocation3 + $0x38] sm:$0x1]
        %v1398 = vsel %vm1384, 0, %v1397
        %1399 = vst [vmem:[#allocation3 + $0x38] sm:$0x1] %v1398
        %v1400 = vld [vmem:[#allocation3 + $0x44] sm:$0x1]
        %v1401 = vsel %vm1384, 0, %v1400
        %1402 = vst [vmem:[#allocation3 + $0x44] sm:$0x1] %v1401
        %v1403 = vld [vmem:[#allocation3 + $0x50] sm:$0x1]
        %v1404 = vsel %vm1384, 0, %v1403
        %1405 = vst [vmem:[#allocation3 + $0x50] sm:$0x1] %v1404
        %v1406 = vld [vmem:[#allocation3 + $0x5c] sm:$0x1]
        %v1407 = vsel %vm1384, 0, %v1406
        %1408 = vst [vmem:[#allocation3 + $0x5c] sm:$0x1] %v1407
        %v1409 = vld [vmem:[#allocation3 + $0x68] sm:$0x1]
        %v1410 = vsel %vm1384, 0, %v1409
        %1411 = vst [vmem:[#allocation3 + $0x68] sm:$0x1] %v1410
        %v1412 = vld [vmem:[#allocation3 + $0x74] sm:$0x1]
        %v1413 = vsel %vm1384, 0, %v1412
        %1414 = vst [vmem:[#allocation3 + $0x74] sm:$0x1] %v1413
        %v1415 = vld [vmem:[#allocation3 + $0x80] sm:$0x1]
        %v1416 = vsel %vm1384, 0, %v1415
        %1417 = vst [vmem:[#allocation3 + $0x80] sm:$0x1] %v1416
        %v1418 = vld [vmem:[#allocation3 + $0x8c] sm:$0x1]
        %v1419 = vsel %vm1384, 0, %v1418
        %1420 = vst [vmem:[#allocation3 + $0x8c] sm:$0x1] %v1419
        %v1421 = vld [vmem:[#allocation3 + $0x98] sm:$0x1]
        %v1422 = vsel %vm1384, 0, %v1421
        %1423 = vst [vmem:[#allocation3 + $0x98] sm:$0x1] %v1422
        %v1424 = vld [vmem:[#allocation3 + $0xa4] sm:$0x1]
        %v1425 = vsel %vm1384, 0, %v1424
        %1426 = vst [vmem:[#allocation3 + $0xa4] sm:$0x1] %v1425
        %v1427 = vld [vmem:[#allocation3 + $0xb0] sm:$0x1]
        %v1428 = vsel %vm1384, 0, %v1427
        %1429 = vst [vmem:[#allocation3 + $0xb0] sm:$0x1] %v1428
        %v1430 = vld [vmem:[#allocation3 + $0xbc] sm:$0x1]
        %v1431 = vsel %vm1384, 0, %v1430
        %1432 = vst [vmem:[#allocation3 + $0xbc] sm:$0x1] %v1431
        %v1433 = vld [vmem:[#allocation3 + $0xc8] sm:$0x1]
        %v1434 = vsel %vm1384, 0, %v1433
        %1435 = vst [vmem:[#allocation3 + $0xc8] sm:$0x1] %v1434
        %v1436 = vld [vmem:[#allocation3 + $0xd4] sm:$0x1]
        %v1437 = vsel %vm1384, 0, %v1436
        %1438 = vst [vmem:[#allocation3 + $0xd4] sm:$0x1] %v1437
        %p1439 = scmp.eq.s32.totalorder %s277, 0
        // Predicated region
        $region69: #{tpu_custom_call.1} parent=43 // pred_check
          %p1440 = pneg %p1439
        $region70: #{tpu_custom_call.1} parent=43 // pred_check_branch
          %1442 = sbr.rel (%p1440) target = $region72
        $region71: #{tpu_custom_call.1} parent=43 // pred_region
          %1443 = vst [vmem:[#allocation3] sm:$0xf] 0
          %1444 = vst [vmem:[#allocation3 + $0x4] sm:$0xf] 0
          %1445 = vst [vmem:[#allocation3 + $0x8] sm:$0xf] 0
        $region72: #{tpu_custom_call.1} parent=43 // pred_fallthru
          _
        %s1446 = sadd.s32 %s277, 17
        %p1447 = scmp.gt.s32.totalorder %s1446, 16
        // Predicated region
        $region73: #{tpu_custom_call.1} parent=43 // pred_check
          %p1448 = pneg %p1447
        $region74: #{tpu_custom_call.1} parent=43 // pred_check_branch
          %1450 = sbr.rel (%p1448) target = $region76
        $region75: #{tpu_custom_call.1} parent=43 // pred_region
          %s1451 = scalar_lea.vmem [#allocation3], 204
          %1452 = vst [vmem:[%s1451] sm:$0xf] 0
          %1453 = vst [vmem:[%s1451 + $0x4] sm:$0xf] 0
          %1454 = vst [vmem:[%s1451 + $0x8] sm:$0xf] 0
        $region76: #{tpu_custom_call.1} parent=43 // pred_fallthru
          _
        %v1455 = vld [vmem:[#allocation3] sm:$0xf]
        %v1456 = vld [vmem:[#allocation3 + $0x4] sm:$0xf]
        %v1457 = vld [vmem:[#allocation3 + $0x8] sm:$0xf]
        %v1458 = vld [vmem:[#allocation3 + $0xc] sm:$0xf]
        %v1459 = vld [vmem:[#allocation3 + $0x10] sm:$0xf]
        %v1460 = vld [vmem:[#allocation3 + $0x14] sm:$0xf]
        %v1461 = vld [vmem:[#allocation3 + $0x18] sm:$0xf]
        %v1462 = vld [vmem:[#allocation3 + $0x1c] sm:$0xf]
        %v1463 = vld [vmem:[#allocation3 + $0x20] sm:$0xf]
        %v1464 = vld [vmem:[#allocation3 + $0x24] sm:$0xf]
        %v1465 = vld [vmem:[#allocation3 + $0x28] sm:$0xf]
        %v1466 = vld [vmem:[#allocation3 + $0x2c] sm:$0xf]
        %v1467 = vld [vmem:[#allocation3 + $0x30] sm:$0xf]
        %v1468 = vld [vmem:[#allocation3 + $0x34] sm:$0xf]
        %v1469 = vld [vmem:[#allocation3 + $0x38] sm:$0xf]
        %v1470 = vld [vmem:[#allocation3 + $0x3c] sm:$0xf]
        %v1471 = vld [vmem:[#allocation3 + $0x40] sm:$0xf]
        %v1472 = vld [vmem:[#allocation3 + $0x44] sm:$0xf]
        %v1473 = vld [vmem:[#allocation3 + $0x48] sm:$0xf]
        %v1474 = vld [vmem:[#allocation3 + $0x4c] sm:$0xf]
        %v1475 = vld [vmem:[#allocation3 + $0x50] sm:$0xf]
        %v1476 = vld [vmem:[#allocation3 + $0x54] sm:$0xf]
        %v1477 = vld [vmem:[#allocation3 + $0x58] sm:$0xf]
        %v1478 = vld [vmem:[#allocation3 + $0x5c] sm:$0xf]
        %v1479 = vld [vmem:[#allocation3 + $0x60] sm:$0xf]
        %v1480 = vld [vmem:[#allocation3 + $0x64] sm:$0xf]
        %v1481 = vld [vmem:[#allocation3 + $0x68] sm:$0xf]
        %v1482 = vld [vmem:[#allocation3 + $0x6c] sm:$0xf]
        %v1483 = vld [vmem:[#allocation3 + $0x70] sm:$0xf]
        %v1484 = vld [vmem:[#allocation3 + $0x74] sm:$0xf]
        %v1485 = vld [vmem:[#allocation3 + $0x78] sm:$0xf]
        %v1486 = vld [vmem:[#allocation3 + $0x7c] sm:$0xf]
        %v1487 = vld [vmem:[#allocation3 + $0x80] sm:$0xf]
        %v1488 = vld [vmem:[#allocation3 + $0x84] sm:$0xf]
        %v1489 = vld [vmem:[#allocation3 + $0x88] sm:$0xf]
        %v1490 = vld [vmem:[#allocation3 + $0x8c] sm:$0xf]
        %v1491 = vld [vmem:[#allocation3 + $0x90] sm:$0xf]
        %v1492 = vld [vmem:[#allocation3 + $0x94] sm:$0xf]
        %v1493 = vld [vmem:[#allocation3 + $0x98] sm:$0xf]
        %v1494 = vld [vmem:[#allocation3 + $0x9c] sm:$0xf]
        %v1495 = vld [vmem:[#allocation3 + $0xa0] sm:$0xf]
        %v1496 = vld [vmem:[#allocation3 + $0xa4] sm:$0xf]
        %v1497 = vld [vmem:[#allocation3 + $0xa8] sm:$0xf]
        %v1498 = vld [vmem:[#allocation3 + $0xac] sm:$0xf]
        %v1499 = vld [vmem:[#allocation3 + $0xb0] sm:$0xf]
        %v1500 = vld [vmem:[#allocation3 + $0xb4] sm:$0xf]
        %v1501 = vld [vmem:[#allocation3 + $0xb8] sm:$0xf]
        %v1502 = vld [vmem:[#allocation3 + $0xbc] sm:$0xf]
        %v1503 = vld [vmem:[#allocation3 + $0xc0] sm:$0xf]
        %v1504 = vld [vmem:[#allocation3 + $0xc4] sm:$0xf]
        %v1505 = vld [vmem:[#allocation3 + $0xc8] sm:$0xf]
        %v1506 = vld [vmem:[#allocation3 + $0xcc] sm:$0xf]
        %v1507 = vld [vmem:[#allocation3 + $0xd0] sm:$0xf]
        %v1508 = vld [vmem:[#allocation3 + $0xd4] sm:$0xf]
        %1509 = vst [vmem:[#allocation4] sm:$0xf] %v1455
        %1510 = vst [vmem:[#allocation4 + $0x24] sm:$0xf] %v1456
        %1511 = vst [vmem:[#allocation4 + $0x48] sm:$0xf] %v1458
        %1512 = vst [vmem:[#allocation4 + $0x6c] sm:$0xf] %v1459
        %1513 = vst [vmem:[#allocation4 + $0x90] sm:$0xf] %v1461
        %1514 = vst [vmem:[#allocation4 + $0xb4] sm:$0xf] %v1462
        %1515 = vst [vmem:[#allocation4 + $0xd8] sm:$0xf] %v1464
        %1516 = vst [vmem:[#allocation4 + $0xfc] sm:$0xf] %v1465
        %1517 = vst [vmem:[#allocation4 + $0x120] sm:$0xf] %v1467
        %1518 = vst [vmem:[#allocation4 + $0x144] sm:$0xf] %v1468
        %1519 = vst [vmem:[#allocation4 + $0x168] sm:$0xf] %v1470
        %1520 = vst [vmem:[#allocation4 + $0x18c] sm:$0xf] %v1471
        %1521 = vst [vmem:[#allocation4 + $0x1b0] sm:$0xf] %v1473
        %1522 = vst [vmem:[#allocation4 + $0x1d4] sm:$0xf] %v1474
        %1523 = vst [vmem:[#allocation4 + $0x1f8] sm:$0xf] %v1476
        %1524 = vst [vmem:[#allocation4 + $0x21c] sm:$0xf] %v1477
        %1525 = vst [vmem:[#allocation4 + $0x240] sm:$0xf] %v1479
        %1526 = vst [vmem:[#allocation4 + $0x264] sm:$0xf] %v1480
        %1527 = vst [vmem:[#allocation4 + $0x288] sm:$0xf] %v1482
        %1528 = vst [vmem:[#allocation4 + $0x2ac] sm:$0xf] %v1483
        %1529 = vst [vmem:[#allocation4 + $0x2d0] sm:$0xf] %v1485
        %1530 = vst [vmem:[#allocation4 + $0x2f4] sm:$0xf] %v1486
        %1531 = vst [vmem:[#allocation4 + $0x318] sm:$0xf] %v1488
        %1532 = vst [vmem:[#allocation4 + $0x33c] sm:$0xf] %v1489
        %1533 = vst [vmem:[#allocation4 + $0x360] sm:$0xf] %v1491
        %1534 = vst [vmem:[#allocation4 + $0x384] sm:$0xf] %v1492
        %1535 = vst [vmem:[#allocation4 + $0x3a8] sm:$0xf] %v1494
        %1536 = vst [vmem:[#allocation4 + $0x3cc] sm:$0xf] %v1495
        %1537 = vst [vmem:[#allocation4 + $0x3f0] sm:$0xf] %v1497
        %1538 = vst [vmem:[#allocation4 + $0x414] sm:$0xf] %v1498
        %1539 = vst [vmem:[#allocation4 + $0x438] sm:$0xf] %v1500
        %1540 = vst [vmem:[#allocation4 + $0x45c] sm:$0xf] %v1501
        %vm1541 = vsmask.f32 3328
        %vm1542 = vsmask.f32 7440
        %vm1543 = vmor %vm1541, %vm1542
        %v1545 = vshrl.u32 %v1455, 16
        %v1547 = vrot.slane %v1545, 4
        %v1548 = vshll.u32 %v1455, 16
        %v1550 = vrot.slane %v1548, 5
        %v1551 = vor.u32 %v1547, %v1550
        %v1552 = vrot.slane %v1551, 4
        %v1554 = vshll.u32 %v1456, 16
        %v1556 = vrot.slane %v1554, 5
        %v1557 = vsel %vm1543, %v1552, %v1556
        %v1558 = vshrl.u32 %v1456, 16
        %v1560 = vrot.slane %v1558, 4
        %v1561 = vor.u32 %v1560, %v1556
        %v1562 = vrot.slane %v1561, 4
        %v1564 = vshll.u32 %v1457, 16
        %v1566 = vrot.slane %v1564, 5
        %v1567 = vsel %vm1543, %v1562, %v1566
        %v1569 = vshrl.u32 %v1458, 16
        %v1571 = vrot.slane %v1569, 4
        %v1572 = vshll.u32 %v1458, 16
        %v1574 = vrot.slane %v1572, 5
        %v1575 = vor.u32 %v1571, %v1574
        %v1576 = vrot.slane %v1575, 4
        %v1578 = vshll.u32 %v1459, 16
        %v1580 = vrot.slane %v1578, 5
        %v1581 = vsel %vm1543, %v1576, %v1580
        %v1582 = vshrl.u32 %v1459, 16
        %v1584 = vrot.slane %v1582, 4
        %v1585 = vor.u32 %v1584, %v1580
        %v1586 = vrot.slane %v1585, 4
        %v1588 = vshll.u32 %v1460, 16
        %v1590 = vrot.slane %v1588, 5
        %v1591 = vsel %vm1543, %v1586, %v1590
        %v1593 = vshrl.u32 %v1461, 16
        %v1595 = vrot.slane %v1593, 4
        %v1596 = vshll.u32 %v1461, 16
        %v1598 = vrot.slane %v1596, 5
        %v1599 = vor.u32 %v1595, %v1598
        %v1600 = vrot.slane %v1599, 4
        %v1602 = vshll.u32 %v1462, 16
        %v1604 = vrot.slane %v1602, 5
        %v1605 = vsel %vm1543, %v1600, %v1604
        %v1606 = vshrl.u32 %v1462, 16
        %v1608 = vrot.slane %v1606, 4
        %v1609 = vor.u32 %v1608, %v1604
        %v1610 = vrot.slane %v1609, 4
        %v1612 = vshll.u32 %v1463, 16
        %v1614 = vrot.slane %v1612, 5
        %v1615 = vsel %vm1543, %v1610, %v1614
        %v1617 = vshrl.u32 %v1464, 16
        %v1619 = vrot.slane %v1617, 4
        %v1620 = vshll.u32 %v1464, 16
        %v1622 = vrot.slane %v1620, 5
        %v1623 = vor.u32 %v1619, %v1622
        %v1624 = vrot.slane %v1623, 4
        %v1626 = vshll.u32 %v1465, 16
        %v1628 = vrot.slane %v1626, 5
        %v1629 = vsel %vm1543, %v1624, %v1628
        %v1630 = vshrl.u32 %v1465, 16
        %v1632 = vrot.slane %v1630, 4
        %v1633 = vor.u32 %v1632, %v1628
        %v1634 = vrot.slane %v1633, 4
        %v1636 = vshll.u32 %v1466, 16
        %v1638 = vrot.slane %v1636, 5
        %v1639 = vsel %vm1543, %v1634, %v1638
        %v1641 = vshrl.u32 %v1467, 16
        %v1643 = vrot.slane %v1641, 4
        %v1644 = vshll.u32 %v1467, 16
        %v1646 = vrot.slane %v1644, 5
        %v1647 = vor.u32 %v1643, %v1646
        %v1648 = vrot.slane %v1647, 4
        %v1650 = vshll.u32 %v1468, 16
        %v1652 = vrot.slane %v1650, 5
        %v1653 = vsel %vm1543, %v1648, %v1652
        %v1654 = vshrl.u32 %v1468, 16
        %v1656 = vrot.slane %v1654, 4
        %v1657 = vor.u32 %v1656, %v1652
        %v1658 = vrot.slane %v1657, 4
        %v1660 = vshll.u32 %v1469, 16
        %v1662 = vrot.slane %v1660, 5
        %v1663 = vsel %vm1543, %v1658, %v1662
        %v1665 = vshrl.u32 %v1470, 16
        %v1667 = vrot.slane %v1665, 4
        %v1668 = vshll.u32 %v1470, 16
        %v1670 = vrot.slane %v1668, 5
        %v1671 = vor.u32 %v1667, %v1670
        %v1672 = vrot.slane %v1671, 4
        %v1674 = vshll.u32 %v1471, 16
        %v1676 = vrot.slane %v1674, 5
        %v1677 = vsel %vm1543, %v1672, %v1676
        %v1678 = vshrl.u32 %v1471, 16
        %v1680 = vrot.slane %v1678, 4
        %v1681 = vor.u32 %v1680, %v1676
        %v1682 = vrot.slane %v1681, 4
        %v1684 = vshll.u32 %v1472, 16
        %v1686 = vrot.slane %v1684, 5
        %v1687 = vsel %vm1543, %v1682, %v1686
        %v1689 = vshrl.u32 %v1473, 16
        %v1691 = vrot.slane %v1689, 4
        %v1692 = vshll.u32 %v1473, 16
        %v1694 = vrot.slane %v1692, 5
        %v1695 = vor.u32 %v1691, %v1694
        %v1696 = vrot.slane %v1695, 4
        %v1698 = vshll.u32 %v1474, 16
        %v1700 = vrot.slane %v1698, 5
        %v1701 = vsel %vm1543, %v1696, %v1700
        %v1702 = vshrl.u32 %v1474, 16
        %v1704 = vrot.slane %v1702, 4
        %v1705 = vor.u32 %v1704, %v1700
        %v1706 = vrot.slane %v1705, 4
        %v1708 = vshll.u32 %v1475, 16
        %v1710 = vrot.slane %v1708, 5
        %v1711 = vsel %vm1543, %v1706, %v1710
        %v1713 = vshrl.u32 %v1476, 16
        %v1715 = vrot.slane %v1713, 4
        %v1716 = vshll.u32 %v1476, 16
        %v1718 = vrot.slane %v1716, 5
        %v1719 = vor.u32 %v1715, %v1718
        %v1720 = vrot.slane %v1719, 4
        %v1722 = vshll.u32 %v1477, 16
        %v1724 = vrot.slane %v1722, 5
        %v1725 = vsel %vm1543, %v1720, %v1724
        %v1726 = vshrl.u32 %v1477, 16
        %v1728 = vrot.slane %v1726, 4
        %v1729 = vor.u32 %v1728, %v1724
        %v1730 = vrot.slane %v1729, 4
        %v1732 = vshll.u32 %v1478, 16
        %v1734 = vrot.slane %v1732, 5
        %v1735 = vsel %vm1543, %v1730, %v1734
        %v1737 = vshrl.u32 %v1479, 16
        %v1739 = vrot.slane %v1737, 4
        %v1740 = vshll.u32 %v1479, 16
        %v1742 = vrot.slane %v1740, 5
        %v1743 = vor.u32 %v1739, %v1742
        %v1744 = vrot.slane %v1743, 4
        %v1746 = vshll.u32 %v1480, 16
        %v1748 = vrot.slane %v1746, 5
        %v1749 = vsel %vm1543, %v1744, %v1748
        %v1750 = vshrl.u32 %v1480, 16
        %v1752 = vrot.slane %v1750, 4
        %v1753 = vor.u32 %v1752, %v1748
        %v1754 = vrot.slane %v1753, 4
        %v1756 = vshll.u32 %v1481, 16
        %v1758 = vrot.slane %v1756, 5
        %v1759 = vsel %vm1543, %v1754, %v1758
        %v1761 = vshrl.u32 %v1482, 16
        %v1763 = vrot.slane %v1761, 4
        %v1764 = vshll.u32 %v1482, 16
        %v1766 = vrot.slane %v1764, 5
        %v1767 = vor.u32 %v1763, %v1766
        %v1768 = vrot.slane %v1767, 4
        %v1770 = vshll.u32 %v1483, 16
        %v1772 = vrot.slane %v1770, 5
        %v1773 = vsel %vm1543, %v1768, %v1772
        %v1774 = vshrl.u32 %v1483, 16
        %v1776 = vrot.slane %v1774, 4
        %v1777 = vor.u32 %v1776, %v1772
        %v1778 = vrot.slane %v1777, 4
        %v1780 = vshll.u32 %v1484, 16
        %v1782 = vrot.slane %v1780, 5
        %v1783 = vsel %vm1543, %v1778, %v1782
        %v1785 = vshrl.u32 %v1485, 16
        %v1787 = vrot.slane %v1785, 4
        %v1788 = vshll.u32 %v1485, 16
        %v1790 = vrot.slane %v1788, 5
        %v1791 = vor.u32 %v1787, %v1790
        %v1792 = vrot.slane %v1791, 4
        %v1794 = vshll.u32 %v1486, 16
        %v1796 = vrot.slane %v1794, 5
        %v1797 = vsel %vm1543, %v1792, %v1796
        %v1798 = vshrl.u32 %v1486, 16
        %v1800 = vrot.slane %v1798, 4
        %v1801 = vor.u32 %v1800, %v1796
        %v1802 = vrot.slane %v1801, 4
        %v1804 = vshll.u32 %v1487, 16
        %v1806 = vrot.slane %v1804, 5
        %v1807 = vsel %vm1543, %v1802, %v1806
        %v1809 = vshrl.u32 %v1488, 16
        %v1811 = vrot.slane %v1809, 4
        %v1812 = vshll.u32 %v1488, 16
        %v1814 = vrot.slane %v1812, 5
        %v1815 = vor.u32 %v1811, %v1814
        %v1816 = vrot.slane %v1815, 4
        %v1818 = vshll.u32 %v1489, 16
        %v1820 = vrot.slane %v1818, 5
        %v1821 = vsel %vm1543, %v1816, %v1820
        %v1822 = vshrl.u32 %v1489, 16
        %v1824 = vrot.slane %v1822, 4
        %v1825 = vor.u32 %v1824, %v1820
        %v1826 = vrot.slane %v1825, 4
        %v1828 = vshll.u32 %v1490, 16
        %v1830 = vrot.slane %v1828, 5
        %v1831 = vsel %vm1543, %v1826, %v1830
        %v1833 = vshrl.u32 %v1491, 16
        %v1835 = vrot.slane %v1833, 4
        %v1836 = vshll.u32 %v1491, 16
        %v1838 = vrot.slane %v1836, 5
        %v1839 = vor.u32 %v1835, %v1838
        %v1840 = vrot.slane %v1839, 4
        %v1842 = vshll.u32 %v1492, 16
        %v1844 = vrot.slane %v1842, 5
        %v1845 = vsel %vm1543, %v1840, %v1844
        %v1846 = vshrl.u32 %v1492, 16
        %v1848 = vrot.slane %v1846, 4
        %v1849 = vor.u32 %v1848, %v1844
        %v1850 = vrot.slane %v1849, 4
        %v1852 = vshll.u32 %v1493, 16
        %v1854 = vrot.slane %v1852, 5
        %v1855 = vsel %vm1543, %v1850, %v1854
        %v1857 = vshrl.u32 %v1494, 16
        %v1859 = vrot.slane %v1857, 4
        %v1860 = vshll.u32 %v1494, 16
        %v1862 = vrot.slane %v1860, 5
        %v1863 = vor.u32 %v1859, %v1862
        %v1864 = vrot.slane %v1863, 4
        %v1866 = vshll.u32 %v1495, 16
        %v1868 = vrot.slane %v1866, 5
        %v1869 = vsel %vm1543, %v1864, %v1868
        %v1870 = vshrl.u32 %v1495, 16
        %v1872 = vrot.slane %v1870, 4
        %v1873 = vor.u32 %v1872, %v1868
        %v1874 = vrot.slane %v1873, 4
        %v1876 = vshll.u32 %v1496, 16
        %v1878 = vrot.slane %v1876, 5
        %v1879 = vsel %vm1543, %v1874, %v1878
        %v1881 = vshrl.u32 %v1497, 16
        %v1883 = vrot.slane %v1881, 4
        %v1884 = vshll.u32 %v1497, 16
        %v1886 = vrot.slane %v1884, 5
        %v1887 = vor.u32 %v1883, %v1886
        %v1888 = vrot.slane %v1887, 4
        %v1890 = vshll.u32 %v1498, 16
        %v1892 = vrot.slane %v1890, 5
        %v1893 = vsel %vm1543, %v1888, %v1892
        %v1894 = vshrl.u32 %v1498, 16
        %v1896 = vrot.slane %v1894, 4
        %v1897 = vor.u32 %v1896, %v1892
        %v1898 = vrot.slane %v1897, 4
        %v1900 = vshll.u32 %v1499, 16
        %v1902 = vrot.slane %v1900, 5
        %v1903 = vsel %vm1543, %v1898, %v1902
        %v1905 = vshrl.u32 %v1500, 16
        %v1907 = vrot.slane %v1905, 4
        %v1908 = vshll.u32 %v1500, 16
        %v1910 = vrot.slane %v1908, 5
        %v1911 = vor.u32 %v1907, %v1910
        %v1912 = vrot.slane %v1911, 4
        %v1914 = vshll.u32 %v1501, 16
        %v1916 = vrot.slane %v1914, 5
        %v1917 = vsel %vm1543, %v1912, %v1916
        %v1918 = vshrl.u32 %v1501, 16
        %v1920 = vrot.slane %v1918, 4
        %v1921 = vor.u32 %v1920, %v1916
        %v1922 = vrot.slane %v1921, 4
        %v1924 = vshll.u32 %v1502, 16
        %v1926 = vrot.slane %v1924, 5
        %v1927 = vsel %vm1543, %v1922, %v1926
        %1960 = vst [vmem:[#allocation4 + $0x4] sm:$0xf] %v1557
        %1961 = vst [vmem:[#allocation4 + $0x28] sm:$0xf] %v1567
        %1962 = vst [vmem:[#allocation4 + $0x4c] sm:$0xf] %v1581
        %1963 = vst [vmem:[#allocation4 + $0x70] sm:$0xf] %v1591
        %1964 = vst [vmem:[#allocation4 + $0x94] sm:$0xf] %v1605
        %1965 = vst [vmem:[#allocation4 + $0xb8] sm:$0xf] %v1615
        %1966 = vst [vmem:[#allocation4 + $0xdc] sm:$0xf] %v1629
        %1967 = vst [vmem:[#allocation4 + $0x100] sm:$0xf] %v1639
        %1968 = vst [vmem:[#allocation4 + $0x124] sm:$0xf] %v1653
        %1969 = vst [vmem:[#allocation4 + $0x148] sm:$0xf] %v1663
        %1970 = vst [vmem:[#allocation4 + $0x16c] sm:$0xf] %v1677
        %1971 = vst [vmem:[#allocation4 + $0x190] sm:$0xf] %v1687
        %1972 = vst [vmem:[#allocation4 + $0x1b4] sm:$0xf] %v1701
        %1973 = vst [vmem:[#allocation4 + $0x1d8] sm:$0xf] %v1711
        %1974 = vst [vmem:[#allocation4 + $0x1fc] sm:$0xf] %v1725
        %1975 = vst [vmem:[#allocation4 + $0x220] sm:$0xf] %v1735
        %1976 = vst [vmem:[#allocation4 + $0x244] sm:$0xf] %v1749
        %1977 = vst [vmem:[#allocation4 + $0x268] sm:$0xf] %v1759
        %1978 = vst [vmem:[#allocation4 + $0x28c] sm:$0xf] %v1773
        %1979 = vst [vmem:[#allocation4 + $0x2b0] sm:$0xf] %v1783
        %1980 = vst [vmem:[#allocation4 + $0x2d4] sm:$0xf] %v1797
        %1981 = vst [vmem:[#allocation4 + $0x2f8] sm:$0xf] %v1807
        %1982 = vst [vmem:[#allocation4 + $0x31c] sm:$0xf] %v1821
        %1983 = vst [vmem:[#allocation4 + $0x340] sm:$0xf] %v1831
        %1984 = vst [vmem:[#allocation4 + $0x364] sm:$0xf] %v1845
        %1985 = vst [vmem:[#allocation4 + $0x388] sm:$0xf] %v1855
        %1986 = vst [vmem:[#allocation4 + $0x3ac] sm:$0xf] %v1869
        %1987 = vst [vmem:[#allocation4 + $0x3d0] sm:$0xf] %v1879
        %1988 = vst [vmem:[#allocation4 + $0x3f4] sm:$0xf] %v1893
        %1989 = vst [vmem:[#allocation4 + $0x418] sm:$0xf] %v1903
        %1990 = vst [vmem:[#allocation4 + $0x43c] sm:$0xf] %v1917
        %1991 = vst [vmem:[#allocation4 + $0x460] sm:$0xf] %v1927
        %vm2040 = vcmask 1042432
        %vm2041 = vcmask 1046532
        %vm2042 = vmor %vm2040, %vm2041
        %v2043 = vrot.slane %v1455, 5
        %v2044 = vrot.slane %v2043, 4
        %v2045 = vrot.slane %v1456, 5
        %v2046 = vsel %vm2042, %v2044, %v2045
        %v2047 = vrot.slane %v2045, 4
        %v2048 = vrot.slane %v1457, 5
        %v2049 = vsel %vm2042, %v2047, %v2048
        %v2050 = vrot.slane %v1458, 5
        %v2051 = vrot.slane %v2050, 4
        %v2052 = vrot.slane %v1459, 5
        %v2053 = vsel %vm2042, %v2051, %v2052
        %v2054 = vrot.slane %v2052, 4
        %v2055 = vrot.slane %v1460, 5
        %v2056 = vsel %vm2042, %v2054, %v2055
        %v2057 = vrot.slane %v1461, 5
        %v2058 = vrot.slane %v2057, 4
        %v2059 = vrot.slane %v1462, 5
        %v2060 = vsel %vm2042, %v2058, %v2059
        %v2061 = vrot.slane %v2059, 4
        %v2062 = vrot.slane %v1463, 5
        %v2063 = vsel %vm2042, %v2061, %v2062
        %v2064 = vrot.slane %v1464, 5
        %v2065 = vrot.slane %v2064, 4
        %v2066 = vrot.slane %v1465, 5
        %v2067 = vsel %vm2042, %v2065, %v2066
        %v2068 = vrot.slane %v2066, 4
        %v2069 = vrot.slane %v1466, 5
        %v2070 = vsel %vm2042, %v2068, %v2069
        %v2071 = vrot.slane %v1467, 5
        %v2072 = vrot.slane %v2071, 4
        %v2073 = vrot.slane %v1468, 5
        %v2074 = vsel %vm2042, %v2072, %v2073
        %v2075 = vrot.slane %v2073, 4
        %v2076 = vrot.slane %v1469, 5
        %v2077 = vsel %vm2042, %v2075, %v2076
        %v2078 = vrot.slane %v1470, 5
        %v2079 = vrot.slane %v2078, 4
        %v2080 = vrot.slane %v1471, 5
        %v2081 = vsel %vm2042, %v2079, %v2080
        %v2082 = vrot.slane %v2080, 4
        %v2083 = vrot.slane %v1472, 5
        %v2084 = vsel %vm2042, %v2082, %v2083
        %v2085 = vrot.slane %v1473, 5
        %v2086 = vrot.slane %v2085, 4
        %v2087 = vrot.slane %v1474, 5
        %v2088 = vsel %vm2042, %v2086, %v2087
        %v2089 = vrot.slane %v2087, 4
        %v2090 = vrot.slane %v1475, 5
        %v2091 = vsel %vm2042, %v2089, %v2090
        %v2092 = vrot.slane %v1476, 5
        %v2093 = vrot.slane %v2092, 4
        %v2094 = vrot.slane %v1477, 5
        %v2095 = vsel %vm2042, %v2093, %v2094
        %v2096 = vrot.slane %v2094, 4
        %v2097 = vrot.slane %v1478, 5
        %v2098 = vsel %vm2042, %v2096, %v2097
        %v2099 = vrot.slane %v1479, 5
        %v2100 = vrot.slane %v2099, 4
        %v2101 = vrot.slane %v1480, 5
        %v2102 = vsel %vm2042, %v2100, %v2101
        %v2103 = vrot.slane %v2101, 4
        %v2104 = vrot.slane %v1481, 5
        %v2105 = vsel %vm2042, %v2103, %v2104
        %v2106 = vrot.slane %v1482, 5
        %v2107 = vrot.slane %v2106, 4
        %v2108 = vrot.slane %v1483, 5
        %v2109 = vsel %vm2042, %v2107, %v2108
        %v2110 = vrot.slane %v2108, 4
        %v2111 = vrot.slane %v1484, 5
        %v2112 = vsel %vm2042, %v2110, %v2111
        %v2113 = vrot.slane %v1485, 5
        %v2114 = vrot.slane %v2113, 4
        %v2115 = vrot.slane %v1486, 5
        %v2116 = vsel %vm2042, %v2114, %v2115
        %v2117 = vrot.slane %v2115, 4
        %v2118 = vrot.slane %v1487, 5
        %v2119 = vsel %vm2042, %v2117, %v2118
        %v2120 = vrot.slane %v1488, 5
        %v2121 = vrot.slane %v2120, 4
        %v2122 = vrot.slane %v1489, 5
        %v2123 = vsel %vm2042, %v2121, %v2122
        %v2124 = vrot.slane %v2122, 4
        %v2125 = vrot.slane %v1490, 5
        %v2126 = vsel %vm2042, %v2124, %v2125
        %v2127 = vrot.slane %v1491, 5
        %v2128 = vrot.slane %v2127, 4
        %v2129 = vrot.slane %v1492, 5
        %v2130 = vsel %vm2042, %v2128, %v2129
        %v2131 = vrot.slane %v2129, 4
        %v2132 = vrot.slane %v1493, 5
        %v2133 = vsel %vm2042, %v2131, %v2132
        %v2134 = vrot.slane %v1494, 5
        %v2135 = vrot.slane %v2134, 4
        %v2136 = vrot.slane %v1495, 5
        %v2137 = vsel %vm2042, %v2135, %v2136
        %v2138 = vrot.slane %v2136, 4
        %v2139 = vrot.slane %v1496, 5
        %v2140 = vsel %vm2042, %v2138, %v2139
        %v2141 = vrot.slane %v1497, 5
        %v2142 = vrot.slane %v2141, 4
        %v2143 = vrot.slane %v1498, 5
        %v2144 = vsel %vm2042, %v2142, %v2143
        %v2145 = vrot.slane %v2143, 4
        %v2146 = vrot.slane %v1499, 5
        %v2147 = vsel %vm2042, %v2145, %v2146
        %v2148 = vrot.slane %v1500, 5
        %v2149 = vrot.slane %v2148, 4
        %v2150 = vrot.slane %v1501, 5
        %v2151 = vsel %vm2042, %v2149, %v2150
        %v2152 = vrot.slane %v2150, 4
        %v2153 = vrot.slane %v1502, 5
        %v2154 = vsel %vm2042, %v2152, %v2153
        %2187 = vst [vmem:[#allocation4 + $0x8] sm:$0xf] %v2046
        %2188 = vst [vmem:[#allocation4 + $0x2c] sm:$0xf] %v2049
        %2189 = vst [vmem:[#allocation4 + $0x50] sm:$0xf] %v2053
        %2190 = vst [vmem:[#allocation4 + $0x74] sm:$0xf] %v2056
        %2191 = vst [vmem:[#allocation4 + $0x98] sm:$0xf] %v2060
        %2192 = vst [vmem:[#allocation4 + $0xbc] sm:$0xf] %v2063
        %2193 = vst [vmem:[#allocation4 + $0xe0] sm:$0xf] %v2067
        %2194 = vst [vmem:[#allocation4 + $0x104] sm:$0xf] %v2070
        %2195 = vst [vmem:[#allocation4 + $0x128] sm:$0xf] %v2074
        %2196 = vst [vmem:[#allocation4 + $0x14c] sm:$0xf] %v2077
        %2197 = vst [vmem:[#allocation4 + $0x170] sm:$0xf] %v2081
        %2198 = vst [vmem:[#allocation4 + $0x194] sm:$0xf] %v2084
        %2199 = vst [vmem:[#allocation4 + $0x1b8] sm:$0xf] %v2088
        %2200 = vst [vmem:[#allocation4 + $0x1dc] sm:$0xf] %v2091
        %2201 = vst [vmem:[#allocation4 + $0x200] sm:$0xf] %v2095
        %2202 = vst [vmem:[#allocation4 + $0x224] sm:$0xf] %v2098
        %2203 = vst [vmem:[#allocation4 + $0x248] sm:$0xf] %v2102
        %2204 = vst [vmem:[#allocation4 + $0x26c] sm:$0xf] %v2105
        %2205 = vst [vmem:[#allocation4 + $0x290] sm:$0xf] %v2109
        %2206 = vst [vmem:[#allocation4 + $0x2b4] sm:$0xf] %v2112
        %2207 = vst [vmem:[#allocation4 + $0x2d8] sm:$0xf] %v2116
        %2208 = vst [vmem:[#allocation4 + $0x2fc] sm:$0xf] %v2119
        %2209 = vst [vmem:[#allocation4 + $0x320] sm:$0xf] %v2123
        %2210 = vst [vmem:[#allocation4 + $0x344] sm:$0xf] %v2126
        %2211 = vst [vmem:[#allocation4 + $0x368] sm:$0xf] %v2130
        %2212 = vst [vmem:[#allocation4 + $0x38c] sm:$0xf] %v2133
        %2213 = vst [vmem:[#allocation4 + $0x3b0] sm:$0xf] %v2137
        %2214 = vst [vmem:[#allocation4 + $0x3d4] sm:$0xf] %v2140
        %2215 = vst [vmem:[#allocation4 + $0x3f8] sm:$0xf] %v2144
        %2216 = vst [vmem:[#allocation4 + $0x41c] sm:$0xf] %v2147
        %2217 = vst [vmem:[#allocation4 + $0x440] sm:$0xf] %v2151
        %2218 = vst [vmem:[#allocation4 + $0x464] sm:$0xf] %v2154
        %2219 = vst [vmem:[#allocation4 + $0xc] sm:$0xf] %v1458
        %2220 = vst [vmem:[#allocation4 + $0x30] sm:$0xf] %v1459
        %2221 = vst [vmem:[#allocation4 + $0x54] sm:$0xf] %v1461
        %2222 = vst [vmem:[#allocation4 + $0x78] sm:$0xf] %v1462
        %2223 = vst [vmem:[#allocation4 + $0x9c] sm:$0xf] %v1464
        %2224 = vst [vmem:[#allocation4 + $0xc0] sm:$0xf] %v1465
        %2225 = vst [vmem:[#allocation4 + $0xe4] sm:$0xf] %v1467
        %2226 = vst [vmem:[#allocation4 + $0x108] sm:$0xf] %v1468
        %2227 = vst [vmem:[#allocation4 + $0x12c] sm:$0xf] %v1470
        %2228 = vst [vmem:[#allocation4 + $0x150] sm:$0xf] %v1471
        %2229 = vst [vmem:[#allocation4 + $0x174] sm:$0xf] %v1473
        %2230 = vst [vmem:[#allocation4 + $0x198] sm:$0xf] %v1474
        %2231 = vst [vmem:[#allocation4 + $0x1bc] sm:$0xf] %v1476
        %2232 = vst [vmem:[#allocation4 + $0x1e0] sm:$0xf] %v1477
        %2233 = vst [vmem:[#allocation4 + $0x204] sm:$0xf] %v1479
        %2234 = vst [vmem:[#allocation4 + $0x228] sm:$0xf] %v1480
        %2235 = vst [vmem:[#allocation4 + $0x24c] sm:$0xf] %v1482
        %2236 = vst [vmem:[#allocation4 + $0x270] sm:$0xf] %v1483
        %2237 = vst [vmem:[#allocation4 + $0x294] sm:$0xf] %v1485
        %2238 = vst [vmem:[#allocation4 + $0x2b8] sm:$0xf] %v1486
        %2239 = vst [vmem:[#allocation4 + $0x2dc] sm:$0xf] %v1488
        %2240 = vst [vmem:[#allocation4 + $0x300] sm:$0xf] %v1489
        %2241 = vst [vmem:[#allocation4 + $0x324] sm:$0xf] %v1491
        %2242 = vst [vmem:[#allocation4 + $0x348] sm:$0xf] %v1492
        %2243 = vst [vmem:[#allocation4 + $0x36c] sm:$0xf] %v1494
        %2244 = vst [vmem:[#allocation4 + $0x390] sm:$0xf] %v1495
        %2245 = vst [vmem:[#allocation4 + $0x3b4] sm:$0xf] %v1497
        %2246 = vst [vmem:[#allocation4 + $0x3d8] sm:$0xf] %v1498
        %2247 = vst [vmem:[#allocation4 + $0x3fc] sm:$0xf] %v1500
        %2248 = vst [vmem:[#allocation4 + $0x420] sm:$0xf] %v1501
        %2249 = vst [vmem:[#allocation4 + $0x444] sm:$0xf] %v1503
        %2250 = vst [vmem:[#allocation4 + $0x468] sm:$0xf] %v1504
        %v2252 = vshrl.u32 %v1503, 16
        %v2254 = vrot.slane %v2252, 4
        %v2255 = vshll.u32 %v1503, 16
        %v2257 = vrot.slane %v2255, 5
        %v2258 = vor.u32 %v2254, %v2257
        %v2259 = vrot.slane %v2258, 4
        %v2261 = vshll.u32 %v1504, 16
        %v2263 = vrot.slane %v2261, 5
        %v2264 = vsel %vm1543, %v2259, %v2263
        %v2265 = vshrl.u32 %v1504, 16
        %v2267 = vrot.slane %v2265, 4
        %v2268 = vor.u32 %v2267, %v2263
        %v2269 = vrot.slane %v2268, 4
        %v2271 = vshll.u32 %v1505, 16
        %v2273 = vrot.slane %v2271, 5
        %v2274 = vsel %vm1543, %v2269, %v2273
        %2277 = vst [vmem:[#allocation4 + $0x10] sm:$0xf] %v1581
        %2278 = vst [vmem:[#allocation4 + $0x34] sm:$0xf] %v1591
        %2279 = vst [vmem:[#allocation4 + $0x58] sm:$0xf] %v1605
        %2280 = vst [vmem:[#allocation4 + $0x7c] sm:$0xf] %v1615
        %2281 = vst [vmem:[#allocation4 + $0xa0] sm:$0xf] %v1629
        %2282 = vst [vmem:[#allocation4 + $0xc4] sm:$0xf] %v1639
        %2283 = vst [vmem:[#allocation4 + $0xe8] sm:$0xf] %v1653
        %2284 = vst [vmem:[#allocation4 + $0x10c] sm:$0xf] %v1663
        %2285 = vst [vmem:[#allocation4 + $0x130] sm:$0xf] %v1677
        %2286 = vst [vmem:[#allocation4 + $0x154] sm:$0xf] %v1687
        %2287 = vst [vmem:[#allocation4 + $0x178] sm:$0xf] %v1701
        %2288 = vst [vmem:[#allocation4 + $0x19c] sm:$0xf] %v1711
        %2289 = vst [vmem:[#allocation4 + $0x1c0] sm:$0xf] %v1725
        %2290 = vst [vmem:[#allocation4 + $0x1e4] sm:$0xf] %v1735
        %2291 = vst [vmem:[#allocation4 + $0x208] sm:$0xf] %v1749
        %2292 = vst [vmem:[#allocation4 + $0x22c] sm:$0xf] %v1759
        %2293 = vst [vmem:[#allocation4 + $0x250] sm:$0xf] %v1773
        %2294 = vst [vmem:[#allocation4 + $0x274] sm:$0xf] %v1783
        %2295 = vst [vmem:[#allocation4 + $0x298] sm:$0xf] %v1797
        %2296 = vst [vmem:[#allocation4 + $0x2bc] sm:$0xf] %v1807
        %2297 = vst [vmem:[#allocation4 + $0x2e0] sm:$0xf] %v1821
        %2298 = vst [vmem:[#allocation4 + $0x304] sm:$0xf] %v1831
        %2299 = vst [vmem:[#allocation4 + $0x328] sm:$0xf] %v1845
        %2300 = vst [vmem:[#allocation4 + $0x34c] sm:$0xf] %v1855
        %2301 = vst [vmem:[#allocation4 + $0x370] sm:$0xf] %v1869
        %2302 = vst [vmem:[#allocation4 + $0x394] sm:$0xf] %v1879
        %2303 = vst [vmem:[#allocation4 + $0x3b8] sm:$0xf] %v1893
        %2304 = vst [vmem:[#allocation4 + $0x3dc] sm:$0xf] %v1903
        %2305 = vst [vmem:[#allocation4 + $0x400] sm:$0xf] %v1917
        %2306 = vst [vmem:[#allocation4 + $0x424] sm:$0xf] %v1927
        %2307 = vst [vmem:[#allocation4 + $0x448] sm:$0xf] %v2264
        %2308 = vst [vmem:[#allocation4 + $0x46c] sm:$0xf] %v2274
        %v2312 = vrot.slane %v1503, 5
        %v2313 = vrot.slane %v2312, 4
        %v2314 = vrot.slane %v1504, 5
        %v2315 = vsel %vm2042, %v2313, %v2314
        %v2316 = vrot.slane %v2314, 4
        %v2317 = vrot.slane %v1505, 5
        %v2318 = vsel %vm2042, %v2316, %v2317
        %2321 = vst [vmem:[#allocation4 + $0x14] sm:$0xf] %v2053
        %2322 = vst [vmem:[#allocation4 + $0x38] sm:$0xf] %v2056
        %2323 = vst [vmem:[#allocation4 + $0x5c] sm:$0xf] %v2060
        %2324 = vst [vmem:[#allocation4 + $0x80] sm:$0xf] %v2063
        %2325 = vst [vmem:[#allocation4 + $0xa4] sm:$0xf] %v2067
        %2326 = vst [vmem:[#allocation4 + $0xc8] sm:$0xf] %v2070
        %2327 = vst [vmem:[#allocation4 + $0xec] sm:$0xf] %v2074
        %2328 = vst [vmem:[#allocation4 + $0x110] sm:$0xf] %v2077
        %2329 = vst [vmem:[#allocation4 + $0x134] sm:$0xf] %v2081
        %2330 = vst [vmem:[#allocation4 + $0x158] sm:$0xf] %v2084
        %2331 = vst [vmem:[#allocation4 + $0x17c] sm:$0xf] %v2088
        %2332 = vst [vmem:[#allocation4 + $0x1a0] sm:$0xf] %v2091
        %2333 = vst [vmem:[#allocation4 + $0x1c4] sm:$0xf] %v2095
        %2334 = vst [vmem:[#allocation4 + $0x1e8] sm:$0xf] %v2098
        %2335 = vst [vmem:[#allocation4 + $0x20c] sm:$0xf] %v2102
        %2336 = vst [vmem:[#allocation4 + $0x230] sm:$0xf] %v2105
        %2337 = vst [vmem:[#allocation4 + $0x254] sm:$0xf] %v2109
        %2338 = vst [vmem:[#allocation4 + $0x278] sm:$0xf] %v2112
        %2339 = vst [vmem:[#allocation4 + $0x29c] sm:$0xf] %v2116
        %2340 = vst [vmem:[#allocation4 + $0x2c0] sm:$0xf] %v2119
        %2341 = vst [vmem:[#allocation4 + $0x2e4] sm:$0xf] %v2123
        %2342 = vst [vmem:[#allocation4 + $0x308] sm:$0xf] %v2126
        %2343 = vst [vmem:[#allocation4 + $0x32c] sm:$0xf] %v2130
        %2344 = vst [vmem:[#allocation4 + $0x350] sm:$0xf] %v2133
        %2345 = vst [vmem:[#allocation4 + $0x374] sm:$0xf] %v2137
        %2346 = vst [vmem:[#allocation4 + $0x398] sm:$0xf] %v2140
        %2347 = vst [vmem:[#allocation4 + $0x3bc] sm:$0xf] %v2144
        %2348 = vst [vmem:[#allocation4 + $0x3e0] sm:$0xf] %v2147
        %2349 = vst [vmem:[#allocation4 + $0x404] sm:$0xf] %v2151
        %2350 = vst [vmem:[#allocation4 + $0x428] sm:$0xf] %v2154
        %2351 = vst [vmem:[#allocation4 + $0x44c] sm:$0xf] %v2315
        %2352 = vst [vmem:[#allocation4 + $0x470] sm:$0xf] %v2318
        %2353 = vst [vmem:[#allocation4 + $0x18] sm:$0xf] %v1461
        %2354 = vst [vmem:[#allocation4 + $0x3c] sm:$0xf] %v1462
        %2355 = vst [vmem:[#allocation4 + $0x60] sm:$0xf] %v1464
        %2356 = vst [vmem:[#allocation4 + $0x84] sm:$0xf] %v1465
        %2357 = vst [vmem:[#allocation4 + $0xa8] sm:$0xf] %v1467
        %2358 = vst [vmem:[#allocation4 + $0xcc] sm:$0xf] %v1468
        %2359 = vst [vmem:[#allocation4 + $0xf0] sm:$0xf] %v1470
        %2360 = vst [vmem:[#allocation4 + $0x114] sm:$0xf] %v1471
        %2361 = vst [vmem:[#allocation4 + $0x138] sm:$0xf] %v1473
        %2362 = vst [vmem:[#allocation4 + $0x15c] sm:$0xf] %v1474
        %2363 = vst [vmem:[#allocation4 + $0x180] sm:$0xf] %v1476
        %2364 = vst [vmem:[#allocation4 + $0x1a4] sm:$0xf] %v1477
        %2365 = vst [vmem:[#allocation4 + $0x1c8] sm:$0xf] %v1479
        %2366 = vst [vmem:[#allocation4 + $0x1ec] sm:$0xf] %v1480
        %2367 = vst [vmem:[#allocation4 + $0x210] sm:$0xf] %v1482
        %2368 = vst [vmem:[#allocation4 + $0x234] sm:$0xf] %v1483
        %2369 = vst [vmem:[#allocation4 + $0x258] sm:$0xf] %v1485
        %2370 = vst [vmem:[#allocation4 + $0x27c] sm:$0xf] %v1486
        %2371 = vst [vmem:[#allocation4 + $0x2a0] sm:$0xf] %v1488
        %2372 = vst [vmem:[#allocation4 + $0x2c4] sm:$0xf] %v1489
        %2373 = vst [vmem:[#allocation4 + $0x2e8] sm:$0xf] %v1491
        %2374 = vst [vmem:[#allocation4 + $0x30c] sm:$0xf] %v1492
        %2375 = vst [vmem:[#allocation4 + $0x330] sm:$0xf] %v1494
        %2376 = vst [vmem:[#allocation4 + $0x354] sm:$0xf] %v1495
        %2377 = vst [vmem:[#allocation4 + $0x378] sm:$0xf] %v1497
        %2378 = vst [vmem:[#allocation4 + $0x39c] sm:$0xf] %v1498
        %2379 = vst [vmem:[#allocation4 + $0x3c0] sm:$0xf] %v1500
        %2380 = vst [vmem:[#allocation4 + $0x3e4] sm:$0xf] %v1501
        %2381 = vst [vmem:[#allocation4 + $0x408] sm:$0xf] %v1503
        %2382 = vst [vmem:[#allocation4 + $0x42c] sm:$0xf] %v1504
        %2383 = vst [vmem:[#allocation4 + $0x450] sm:$0xf] %v1506
        %2384 = vst [vmem:[#allocation4 + $0x474] sm:$0xf] %v1507
        %v2386 = vshrl.u32 %v1506, 16
        %v2388 = vrot.slane %v2386, 4
        %v2389 = vshll.u32 %v1506, 16
        %v2391 = vrot.slane %v2389, 5
        %v2392 = vor.u32 %v2388, %v2391
        %v2393 = vrot.slane %v2392, 4
        %v2395 = vshll.u32 %v1507, 16
        %v2397 = vrot.slane %v2395, 5
        %v2398 = vsel %vm1543, %v2393, %v2397
        %v2399 = vshrl.u32 %v1507, 16
        %v2401 = vrot.slane %v2399, 4
        %v2402 = vor.u32 %v2401, %v2397
        %v2403 = vrot.slane %v2402, 4
        %v2405 = vshll.u32 %v1508, 16
        %v2407 = vrot.slane %v2405, 5
        %v2408 = vsel %vm1543, %v2403, %v2407
        %2411 = vst [vmem:[#allocation4 + $0x1c] sm:$0xf] %v1605
        %2412 = vst [vmem:[#allocation4 + $0x40] sm:$0xf] %v1615
        %2413 = vst [vmem:[#allocation4 + $0x64] sm:$0xf] %v1629
        %2414 = vst [vmem:[#allocation4 + $0x88] sm:$0xf] %v1639
        %2415 = vst [vmem:[#allocation4 + $0xac] sm:$0xf] %v1653
        %2416 = vst [vmem:[#allocation4 + $0xd0] sm:$0xf] %v1663
        %2417 = vst [vmem:[#allocation4 + $0xf4] sm:$0xf] %v1677
        %2418 = vst [vmem:[#allocation4 + $0x118] sm:$0xf] %v1687
        %2419 = vst [vmem:[#allocation4 + $0x13c] sm:$0xf] %v1701
        %2420 = vst [vmem:[#allocation4 + $0x160] sm:$0xf] %v1711
        %2421 = vst [vmem:[#allocation4 + $0x184] sm:$0xf] %v1725
        %2422 = vst [vmem:[#allocation4 + $0x1a8] sm:$0xf] %v1735
        %2423 = vst [vmem:[#allocation4 + $0x1cc] sm:$0xf] %v1749
        %2424 = vst [vmem:[#allocation4 + $0x1f0] sm:$0xf] %v1759
        %2425 = vst [vmem:[#allocation4 + $0x214] sm:$0xf] %v1773
        %2426 = vst [vmem:[#allocation4 + $0x238] sm:$0xf] %v1783
        %2427 = vst [vmem:[#allocation4 + $0x25c] sm:$0xf] %v1797
        %2428 = vst [vmem:[#allocation4 + $0x280] sm:$0xf] %v1807
        %2429 = vst [vmem:[#allocation4 + $0x2a4] sm:$0xf] %v1821
        %2430 = vst [vmem:[#allocation4 + $0x2c8] sm:$0xf] %v1831
        %2431 = vst [vmem:[#allocation4 + $0x2ec] sm:$0xf] %v1845
        %2432 = vst [vmem:[#allocation4 + $0x310] sm:$0xf] %v1855
        %2433 = vst [vmem:[#allocation4 + $0x334] sm:$0xf] %v1869
        %2434 = vst [vmem:[#allocation4 + $0x358] sm:$0xf] %v1879
        %2435 = vst [vmem:[#allocation4 + $0x37c] sm:$0xf] %v1893
        %2436 = vst [vmem:[#allocation4 + $0x3a0] sm:$0xf] %v1903
        %2437 = vst [vmem:[#allocation4 + $0x3c4] sm:$0xf] %v1917
        %2438 = vst [vmem:[#allocation4 + $0x3e8] sm:$0xf] %v1927
        %2439 = vst [vmem:[#allocation4 + $0x40c] sm:$0xf] %v2264
        %2440 = vst [vmem:[#allocation4 + $0x430] sm:$0xf] %v2274
        %2441 = vst [vmem:[#allocation4 + $0x454] sm:$0xf] %v2398
        %2442 = vst [vmem:[#allocation4 + $0x478] sm:$0xf] %v2408
        %v2446 = vrot.slane %v1506, 5
        %v2447 = vrot.slane %v2446, 4
        %v2448 = vrot.slane %v1507, 5
        %v2449 = vsel %vm2042, %v2447, %v2448
        %v2450 = vrot.slane %v2448, 4
        %v2451 = vrot.slane %v1508, 5
        %v2452 = vsel %vm2042, %v2450, %v2451
        %2455 = vst [vmem:[#allocation4 + $0x20] sm:$0xf] %v2060
        %2456 = vst [vmem:[#allocation4 + $0x44] sm:$0xf] %v2063
        %2457 = vst [vmem:[#allocation4 + $0x68] sm:$0xf] %v2067
        %2458 = vst [vmem:[#allocation4 + $0x8c] sm:$0xf] %v2070
        %2459 = vst [vmem:[#allocation4 + $0xb0] sm:$0xf] %v2074
        %2460 = vst [vmem:[#allocation4 + $0xd4] sm:$0xf] %v2077
        %2461 = vst [vmem:[#allocation4 + $0xf8] sm:$0xf] %v2081
        %2462 = vst [vmem:[#allocation4 + $0x11c] sm:$0xf] %v2084
        %2463 = vst [vmem:[#allocation4 + $0x140] sm:$0xf] %v2088
        %2464 = vst [vmem:[#allocation4 + $0x164] sm:$0xf] %v2091
        %2465 = vst [vmem:[#allocation4 + $0x188] sm:$0xf] %v2095
        %2466 = vst [vmem:[#allocation4 + $0x1ac] sm:$0xf] %v2098
        %2467 = vst [vmem:[#allocation4 + $0x1d0] sm:$0xf] %v2102
        %2468 = vst [vmem:[#allocation4 + $0x1f4] sm:$0xf] %v2105
        %2469 = vst [vmem:[#allocation4 + $0x218] sm:$0xf] %v2109
        %2470 = vst [vmem:[#allocation4 + $0x23c] sm:$0xf] %v2112
        %2471 = vst [vmem:[#allocation4 + $0x260] sm:$0xf] %v2116
        %2472 = vst [vmem:[#allocation4 + $0x284] sm:$0xf] %v2119
        %2473 = vst [vmem:[#allocation4 + $0x2a8] sm:$0xf] %v2123
        %2474 = vst [vmem:[#allocation4 + $0x2cc] sm:$0xf] %v2126
        %2475 = vst [vmem:[#allocation4 + $0x2f0] sm:$0xf] %v2130
        %2476 = vst [vmem:[#allocation4 + $0x314] sm:$0xf] %v2133
        %2477 = vst [vmem:[#allocation4 + $0x338] sm:$0xf] %v2137
        %2478 = vst [vmem:[#allocation4 + $0x35c] sm:$0xf] %v2140
        %2479 = vst [vmem:[#allocation4 + $0x380] sm:$0xf] %v2144
        %2480 = vst [vmem:[#allocation4 + $0x3a4] sm:$0xf] %v2147
        %2481 = vst [vmem:[#allocation4 + $0x3c8] sm:$0xf] %v2151
        %2482 = vst [vmem:[#allocation4 + $0x3ec] sm:$0xf] %v2154
        %2483 = vst [vmem:[#allocation4 + $0x410] sm:$0xf] %v2315
        %2484 = vst [vmem:[#allocation4 + $0x434] sm:$0xf] %v2318
        %2485 = vst [vmem:[#allocation4 + $0x458] sm:$0xf] %v2449
        %2486 = vst [vmem:[#allocation4 + $0x47c] sm:$0xf] %v2452
        %v2487 = vld [vmem:[#allocation4] sm:$0xff]
        %v2488 = vld [vmem:[#allocation4 + $0x8] sm:$0xff]
        %v2489 = vld [vmem:[#allocation4 + $0x10] sm:$0xff]
        %v2490 = vld [vmem:[#allocation4 + $0x18] sm:$0xff]
        %v2491 = vld [vmem:[#allocation4 + $0x20] sm:$0xf]
        %v2492 = vld [vmem:[#allocation4 + $0x24] sm:$0xff]
        %v2493 = vld [vmem:[#allocation4 + $0x2c] sm:$0xff]
        %v2494 = vld [vmem:[#allocation4 + $0x34] sm:$0xff]
        %v2495 = vld [vmem:[#allocation4 + $0x3c] sm:$0xff]
        %v2496 = vld [vmem:[#allocation4 + $0x44] sm:$0xf]
        %v2497 = vld [vmem:[#allocation4 + $0x48] sm:$0xff]
        %v2498 = vld [vmem:[#allocation4 + $0x50] sm:$0xff]
        %v2499 = vld [vmem:[#allocation4 + $0x58] sm:$0xff]
        %v2500 = vld [vmem:[#allocation4 + $0x60] sm:$0xff]
        %v2501 = vld [vmem:[#allocation4 + $0x68] sm:$0xf]
        %v2502 = vld [vmem:[#allocation4 + $0x6c] sm:$0xff]
        %v2503 = vld [vmem:[#allocation4 + $0x74] sm:$0xff]
        %v2504 = vld [vmem:[#allocation4 + $0x7c] sm:$0xff]
        %v2505 = vld [vmem:[#allocation4 + $0x84] sm:$0xff]
        %v2506 = vld [vmem:[#allocation4 + $0x8c] sm:$0xf]
        %v2507 = vld [vmem:[#allocation4 + $0x90] sm:$0xff]
        %v2508 = vld [vmem:[#allocation4 + $0x98] sm:$0xff]
        %v2509 = vld [vmem:[#allocation4 + $0xa0] sm:$0xff]
        %v2510 = vld [vmem:[#allocation4 + $0xa8] sm:$0xff]
        %v2511 = vld [vmem:[#allocation4 + $0xb0] sm:$0xf]
        %v2512 = vld [vmem:[#allocation4 + $0xb4] sm:$0xff]
        %v2513 = vld [vmem:[#allocation4 + $0xbc] sm:$0xff]
        %v2514 = vld [vmem:[#allocation4 + $0xc4] sm:$0xff]
        %v2515 = vld [vmem:[#allocation4 + $0xcc] sm:$0xff]
        %v2516 = vld [vmem:[#allocation4 + $0xd4] sm:$0xf]
        %v2517 = vld [vmem:[#allocation4 + $0xd8] sm:$0xff]
        %v2518 = vld [vmem:[#allocation4 + $0xe0] sm:$0xff]
        %v2519 = vld [vmem:[#allocation4 + $0xe8] sm:$0xff]
        %v2520 = vld [vmem:[#allocation4 + $0xf0] sm:$0xff]
        %v2521 = vld [vmem:[#allocation4 + $0xf8] sm:$0xf]
        %v2522 = vld [vmem:[#allocation4 + $0xfc] sm:$0xff]
        %v2523 = vld [vmem:[#allocation4 + $0x104] sm:$0xff]
        %v2524 = vld [vmem:[#allocation4 + $0x10c] sm:$0xff]
        %v2525 = vld [vmem:[#allocation4 + $0x114] sm:$0xff]
        %v2526 = vld [vmem:[#allocation4 + $0x11c] sm:$0xf]
        %v2527 = vld [vmem:[#allocation4 + $0x120] sm:$0xff]
        %v2528 = vld [vmem:[#allocation4 + $0x128] sm:$0xff]
        %v2529 = vld [vmem:[#allocation4 + $0x130] sm:$0xff]
        %v2530 = vld [vmem:[#allocation4 + $0x138] sm:$0xff]
        %v2531 = vld [vmem:[#allocation4 + $0x140] sm:$0xf]
        %v2532 = vld [vmem:[#allocation4 + $0x144] sm:$0xff]
        %v2533 = vld [vmem:[#allocation4 + $0x14c] sm:$0xff]
        %v2534 = vld [vmem:[#allocation4 + $0x154] sm:$0xff]
        %v2535 = vld [vmem:[#allocation4 + $0x15c] sm:$0xff]
        %v2536 = vld [vmem:[#allocation4 + $0x164] sm:$0xf]
        %v2537 = vld [vmem:[#allocation4 + $0x168] sm:$0xff]
        %v2538 = vld [vmem:[#allocation4 + $0x170] sm:$0xff]
        %v2539 = vld [vmem:[#allocation4 + $0x178] sm:$0xff]
        %v2540 = vld [vmem:[#allocation4 + $0x180] sm:$0xff]
        %v2541 = vld [vmem:[#allocation4 + $0x188] sm:$0xf]
        %v2542 = vld [vmem:[#allocation4 + $0x18c] sm:$0xff]
        %v2543 = vld [vmem:[#allocation4 + $0x194] sm:$0xff]
        %v2544 = vld [vmem:[#allocation4 + $0x19c] sm:$0xff]
        %v2545 = vld [vmem:[#allocation4 + $0x1a4] sm:$0xff]
        %v2546 = vld [vmem:[#allocation4 + $0x1ac] sm:$0xf]
        %v2547 = vld [vmem:[#allocation4 + $0x1b0] sm:$0xff]
        %v2548 = vld [vmem:[#allocation4 + $0x1b8] sm:$0xff]
        %v2549 = vld [vmem:[#allocation4 + $0x1c0] sm:$0xff]
        %v2550 = vld [vmem:[#allocation4 + $0x1c8] sm:$0xff]
        %v2551 = vld [vmem:[#allocation4 + $0x1d0] sm:$0xf]
        %v2552 = vld [vmem:[#allocation4 + $0x1d4] sm:$0xff]
        %v2553 = vld [vmem:[#allocation4 + $0x1dc] sm:$0xff]
        %v2554 = vld [vmem:[#allocation4 + $0x1e4] sm:$0xff]
        %v2555 = vld [vmem:[#allocation4 + $0x1ec] sm:$0xff]
        %v2556 = vld [vmem:[#allocation4 + $0x1f4] sm:$0xf]
        %v2557 = vld [vmem:[#allocation4 + $0x1f8] sm:$0xff]
        %v2558 = vld [vmem:[#allocation4 + $0x200] sm:$0xff]
        %v2559 = vld [vmem:[#allocation4 + $0x208] sm:$0xff]
        %v2560 = vld [vmem:[#allocation4 + $0x210] sm:$0xff]
        %v2561 = vld [vmem:[#allocation4 + $0x218] sm:$0xf]
        %v2562 = vld [vmem:[#allocation4 + $0x21c] sm:$0xff]
        %v2563 = vld [vmem:[#allocation4 + $0x224] sm:$0xff]
        %v2564 = vld [vmem:[#allocation4 + $0x22c] sm:$0xff]
        %v2565 = vld [vmem:[#allocation4 + $0x234] sm:$0xff]
        %v2566 = vld [vmem:[#allocation4 + $0x23c] sm:$0xf]
        %v2567 = vld [vmem:[#allocation4 + $0x240] sm:$0xff]
        %v2568 = vld [vmem:[#allocation4 + $0x248] sm:$0xff]
        %v2569 = vld [vmem:[#allocation4 + $0x250] sm:$0xff]
        %v2570 = vld [vmem:[#allocation4 + $0x258] sm:$0xff]
        %v2571 = vld [vmem:[#allocation4 + $0x260] sm:$0xf]
        %v2572 = vld [vmem:[#allocation4 + $0x264] sm:$0xff]
        %v2573 = vld [vmem:[#allocation4 + $0x26c] sm:$0xff]
        %v2574 = vld [vmem:[#allocation4 + $0x274] sm:$0xff]
        %v2575 = vld [vmem:[#allocation4 + $0x27c] sm:$0xff]
        %v2576 = vld [vmem:[#allocation4 + $0x284] sm:$0xf]
        %v2577 = vld [vmem:[#allocation4 + $0x288] sm:$0xff]
        %v2578 = vld [vmem:[#allocation4 + $0x290] sm:$0xff]
        %v2579 = vld [vmem:[#allocation4 + $0x298] sm:$0xff]
        %v2580 = vld [vmem:[#allocation4 + $0x2a0] sm:$0xff]
        %v2581 = vld [vmem:[#allocation4 + $0x2a8] sm:$0xf]
        %v2582 = vld [vmem:[#allocation4 + $0x2ac] sm:$0xff]
        %v2583 = vld [vmem:[#allocation4 + $0x2b4] sm:$0xff]
        %v2584 = vld [vmem:[#allocation4 + $0x2bc] sm:$0xff]
        %v2585 = vld [vmem:[#allocation4 + $0x2c4] sm:$0xff]
        %v2586 = vld [vmem:[#allocation4 + $0x2cc] sm:$0xf]
        %v2587 = vld [vmem:[#allocation4 + $0x2d0] sm:$0xff]
        %v2588 = vld [vmem:[#allocation4 + $0x2d8] sm:$0xff]
        %v2589 = vld [vmem:[#allocation4 + $0x2e0] sm:$0xff]
        %v2590 = vld [vmem:[#allocation4 + $0x2e8] sm:$0xff]
        %v2591 = vld [vmem:[#allocation4 + $0x2f0] sm:$0xf]
        %v2592 = vld [vmem:[#allocation4 + $0x2f4] sm:$0xff]
        %v2593 = vld [vmem:[#allocation4 + $0x2fc] sm:$0xff]
        %v2594 = vld [vmem:[#allocation4 + $0x304] sm:$0xff]
        %v2595 = vld [vmem:[#allocation4 + $0x30c] sm:$0xff]
        %v2596 = vld [vmem:[#allocation4 + $0x314] sm:$0xf]
        %v2597 = vld [vmem:[#allocation4 + $0x318] sm:$0xff]
        %v2598 = vld [vmem:[#allocation4 + $0x320] sm:$0xff]
        %v2599 = vld [vmem:[#allocation4 + $0x328] sm:$0xff]
        %v2600 = vld [vmem:[#allocation4 + $0x330] sm:$0xff]
        %v2601 = vld [vmem:[#allocation4 + $0x338] sm:$0xf]
        %v2602 = vld [vmem:[#allocation4 + $0x33c] sm:$0xff]
        %v2603 = vld [vmem:[#allocation4 + $0x344] sm:$0xff]
        %v2604 = vld [vmem:[#allocation4 + $0x34c] sm:$0xff]
        %v2605 = vld [vmem:[#allocation4 + $0x354] sm:$0xff]
        %v2606 = vld [vmem:[#allocation4 + $0x35c] sm:$0xf]
        %v2607 = vld [vmem:[#allocation4 + $0x360] sm:$0xff]
        %v2608 = vld [vmem:[#allocation4 + $0x368] sm:$0xff]
        %v2609 = vld [vmem:[#allocation4 + $0x370] sm:$0xff]
        %v2610 = vld [vmem:[#allocation4 + $0x378] sm:$0xff]
        %v2611 = vld [vmem:[#allocation4 + $0x380] sm:$0xf]
        %v2612 = vld [vmem:[#allocation4 + $0x384] sm:$0xff]
        %v2613 = vld [vmem:[#allocation4 + $0x38c] sm:$0xff]
        %v2614 = vld [vmem:[#allocation4 + $0x394] sm:$0xff]
        %v2615 = vld [vmem:[#allocation4 + $0x39c] sm:$0xff]
        %v2616 = vld [vmem:[#allocation4 + $0x3a4] sm:$0xf]
        %v2617 = vld [vmem:[#allocation4 + $0x3a8] sm:$0xff]
        %v2618 = vld [vmem:[#allocation4 + $0x3b0] sm:$0xff]
        %v2619 = vld [vmem:[#allocation4 + $0x3b8] sm:$0xff]
        %v2620 = vld [vmem:[#allocation4 + $0x3c0] sm:$0xff]
        %v2621 = vld [vmem:[#allocation4 + $0x3c8] sm:$0xf]
        %v2622 = vld [vmem:[#allocation4 + $0x3cc] sm:$0xff]
        %v2623 = vld [vmem:[#allocation4 + $0x3d4] sm:$0xff]
        %v2624 = vld [vmem:[#allocation4 + $0x3dc] sm:$0xff]
        %v2625 = vld [vmem:[#allocation4 + $0x3e4] sm:$0xff]
        %v2626 = vld [vmem:[#allocation4 + $0x3ec] sm:$0xf]
        %v2627 = vld [vmem:[#allocation4 + $0x3f0] sm:$0xff]
        %v2628 = vld [vmem:[#allocation4 + $0x3f8] sm:$0xff]
        %v2629 = vld [vmem:[#allocation4 + $0x400] sm:$0xff]
        %v2630 = vld [vmem:[#allocation4 + $0x408] sm:$0xff]
        %v2631 = vld [vmem:[#allocation4 + $0x410] sm:$0xf]
        %v2632 = vld [vmem:[#allocation4 + $0x414] sm:$0xff]
        %v2633 = vld [vmem:[#allocation4 + $0x41c] sm:$0xff]
        %v2634 = vld [vmem:[#allocation4 + $0x424] sm:$0xff]
        %v2635 = vld [vmem:[#allocation4 + $0x42c] sm:$0xff]
        %v2636 = vld [vmem:[#allocation4 + $0x434] sm:$0xf]
        %v2637 = vld [vmem:[#allocation4 + $0x438] sm:$0xff]
        %v2638 = vld [vmem:[#allocation4 + $0x440] sm:$0xff]
        %v2639 = vld [vmem:[#allocation4 + $0x448] sm:$0xff]
        %v2640 = vld [vmem:[#allocation4 + $0x450] sm:$0xff]
        %v2641 = vld [vmem:[#allocation4 + $0x458] sm:$0xf]
        %v2642 = vld [vmem:[#allocation4 + $0x45c] sm:$0xff]
        %v2643 = vld [vmem:[#allocation4 + $0x464] sm:$0xff]
        %v2644 = vld [vmem:[#allocation4 + $0x46c] sm:$0xff]
        %v2645 = vld [vmem:[#allocation4 + $0x474] sm:$0xff]
        %v2646 = vld [vmem:[#allocation4 + $0x47c] sm:$0xf]
        %v2647 = vld [vmem:[#allocation9] sm:$0xf]
        %v2648 = vld [vmem:[#allocation9 + $0x4] sm:$0xf]
        %v2649 = vld [vmem:[#allocation9 + $0x8] sm:$0xf]
        %v2650 = vld [vmem:[#allocation9 + $0xc] sm:$0xf]
        %v2651 = vld [vmem:[#allocation9 + $0x10] sm:$0xf]
        %v2652 = vld [vmem:[#allocation9 + $0x14] sm:$0xf]
        %v2653 = vld [vmem:[#allocation9 + $0x18] sm:$0xf]
        %v2654 = vld [vmem:[#allocation9 + $0x1c] sm:$0xf]
        %v2655 = vld [vmem:[#allocation9 + $0x20] sm:$0xf]
        %v2656 = vld [vmem:[#allocation9 + $0x24] sm:$0xf]
        %v2657 = vld [vmem:[#allocation9 + $0x28] sm:$0xf]
        %v2658 = vld [vmem:[#allocation9 + $0x2c] sm:$0xf]
        %v2659 = vld [vmem:[#allocation9 + $0x30] sm:$0xf]
        %v2660 = vld [vmem:[#allocation9 + $0x34] sm:$0xf]
        %v2661 = vld [vmem:[#allocation9 + $0x38] sm:$0xf]
        %v2662 = vld [vmem:[#allocation9 + $0x3c] sm:$0xf]
        %v2663 = vld [vmem:[#allocation9 + $0x40] sm:$0xf]
        %v2664 = vld [vmem:[#allocation9 + $0x44] sm:$0xf]
        %v2665 = vld [vmem:[#allocation9 + $0x48] sm:$0xf]
        %v2666 = vld [vmem:[#allocation9 + $0x4c] sm:$0xf]
        %v2667 = vld [vmem:[#allocation9 + $0x50] sm:$0xf]
        %v2668 = vld [vmem:[#allocation9 + $0x54] sm:$0xf]
        %v2669 = vld [vmem:[#allocation9 + $0x58] sm:$0xf]
        %v2670 = vld [vmem:[#allocation9 + $0x5c] sm:$0xf]
        %v2671 = vld [vmem:[#allocation9 + $0x60] sm:$0xf]
        %v2672 = vld [vmem:[#allocation9 + $0x64] sm:$0xf]
        %v2673 = vld [vmem:[#allocation9 + $0x68] sm:$0xf]
        %v2674 = vld [vmem:[#allocation9 + $0x6c] sm:$0xf]
        %v2675 = vld [vmem:[#allocation9 + $0x70] sm:$0xf]
        %v2676 = vld [vmem:[#allocation9 + $0x74] sm:$0xf]
        %v2677 = vld [vmem:[#allocation9 + $0x78] sm:$0xf]
        %v2678 = vld [vmem:[#allocation9 + $0x7c] sm:$0xf]
        %v2679 = vld [vmem:[#allocation9 + $0x80] sm:$0xf]
        %v2680 = vld [vmem:[#allocation9 + $0x84] sm:$0xf]
        %v2681 = vld [vmem:[#allocation9 + $0x88] sm:$0xf]
        %v2682 = vld [vmem:[#allocation9 + $0x8c] sm:$0xf]
        %v2683 = vld [vmem:[#allocation9 + $0x90] sm:$0xf]
        %v2684 = vld [vmem:[#allocation9 + $0x94] sm:$0xf]
        %v2685 = vld [vmem:[#allocation9 + $0x98] sm:$0xf]
        %v2686 = vld [vmem:[#allocation9 + $0x9c] sm:$0xf]
        %v2687 = vld [vmem:[#allocation9 + $0xa0] sm:$0xf]
        %v2688 = vld [vmem:[#allocation9 + $0xa4] sm:$0xf]
        %v2689 = vld [vmem:[#allocation9 + $0xa8] sm:$0xf]
        %v2690 = vld [vmem:[#allocation9 + $0xac] sm:$0xf]
        %v2691 = vld [vmem:[#allocation9 + $0xb0] sm:$0xf]
        %v2692 = vld [vmem:[#allocation9 + $0xb4] sm:$0xf]
        %v2693 = vld [vmem:[#allocation9 + $0xb8] sm:$0xf]
        %v2694 = vld [vmem:[#allocation9 + $0xbc] sm:$0xf]
        %v2695 = vld [vmem:[#allocation9 + $0xc0] sm:$0xf]
        %v2696 = vld [vmem:[#allocation9 + $0xc4] sm:$0xf]
        %v2697 = vld [vmem:[#allocation9 + $0xc8] sm:$0xf]
        %v2698 = vld [vmem:[#allocation9 + $0xcc] sm:$0xf]
        %v2699 = vld [vmem:[#allocation9 + $0xd0] sm:$0xf]
        %v2700 = vld [vmem:[#allocation9 + $0xd4] sm:$0xf]
        %v2701 = vld [vmem:[#allocation9 + $0xd8] sm:$0xf]
        %v2702 = vld [vmem:[#allocation9 + $0xdc] sm:$0xf]
        %v2703 = vld [vmem:[#allocation9 + $0xe0] sm:$0xf]
        %v2704 = vld [vmem:[#allocation9 + $0xe4] sm:$0xf]
        %v2705 = vld [vmem:[#allocation9 + $0xe8] sm:$0xf]
        %v2706 = vld [vmem:[#allocation9 + $0xec] sm:$0xf]
        %v2707 = vld [vmem:[#allocation9 + $0xf0] sm:$0xf]
        %v2708 = vld [vmem:[#allocation9 + $0xf4] sm:$0xf]
        %v2709 = vld [vmem:[#allocation9 + $0xf8] sm:$0xf]
        %v2710 = vld [vmem:[#allocation9 + $0xfc] sm:$0xf]
        %v2711 = vld [vmem:[#allocation9 + $0x100] sm:$0xf]
        %v2712 = vld [vmem:[#allocation9 + $0x104] sm:$0xf]
        %v2713 = vld [vmem:[#allocation9 + $0x108] sm:$0xf]
        %v2714 = vld [vmem:[#allocation9 + $0x10c] sm:$0xf]
        %v2715 = vld [vmem:[#allocation9 + $0x110] sm:$0xf]
        %v2716 = vld [vmem:[#allocation9 + $0x114] sm:$0xf]
        %v2717 = vld [vmem:[#allocation9 + $0x118] sm:$0xf]
        %v2718 = vld [vmem:[#allocation9 + $0x11c] sm:$0xf]
        %v2719 = vld [vmem:[#allocation9 + $0x120] sm:$0xf]
        %v2720 = vld [vmem:[#allocation9 + $0x124] sm:$0xf]
        %v2721 = vld [vmem:[#allocation9 + $0x128] sm:$0xf]
        %v2722 = vld [vmem:[#allocation9 + $0x12c] sm:$0xf]
        %v2723 = vld [vmem:[#allocation9 + $0x130] sm:$0xf]
        %v2724 = vld [vmem:[#allocation9 + $0x134] sm:$0xf]
        %v2725 = vld [vmem:[#allocation9 + $0x138] sm:$0xf]
        %v2726 = vld [vmem:[#allocation9 + $0x13c] sm:$0xf]
        %v2727 = vld [vmem:[#allocation9 + $0x140] sm:$0xf]
        %v2728 = vld [vmem:[#allocation9 + $0x144] sm:$0xf]
        %v2729 = vld [vmem:[#allocation9 + $0x148] sm:$0xf]
        %v2730 = vld [vmem:[#allocation9 + $0x14c] sm:$0xf]
        %v2731 = vld [vmem:[#allocation9 + $0x150] sm:$0xf]
        %v2732 = vld [vmem:[#allocation9 + $0x154] sm:$0xf]
        %v2733 = vld [vmem:[#allocation9 + $0x158] sm:$0xf]
        %v2734 = vld [vmem:[#allocation9 + $0x15c] sm:$0xf]
        %v2735 = vld [vmem:[#allocation9 + $0x160] sm:$0xf]
        %v2736 = vld [vmem:[#allocation9 + $0x164] sm:$0xf]
        %v2737 = vld [vmem:[#allocation9 + $0x168] sm:$0xf]
        %v2738 = vld [vmem:[#allocation9 + $0x16c] sm:$0xf]
        %v2739 = vld [vmem:[#allocation9 + $0x170] sm:$0xf]
        %v2740 = vld [vmem:[#allocation9 + $0x174] sm:$0xf]
        %v2741 = vld [vmem:[#allocation9 + $0x178] sm:$0xf]
        %v2742 = vld [vmem:[#allocation9 + $0x17c] sm:$0xf]
        %v2743 = vld [vmem:[#allocation9 + $0x180] sm:$0xf]
        %v2744 = vld [vmem:[#allocation9 + $0x184] sm:$0xf]
        %v2745 = vld [vmem:[#allocation9 + $0x188] sm:$0xf]
        %v2746 = vld [vmem:[#allocation9 + $0x18c] sm:$0xf]
        %v2747 = vld [vmem:[#allocation9 + $0x190] sm:$0xf]
        %v2748 = vld [vmem:[#allocation9 + $0x194] sm:$0xf]
        %v2749 = vld [vmem:[#allocation9 + $0x198] sm:$0xf]
        %v2750 = vld [vmem:[#allocation9 + $0x19c] sm:$0xf]
        %v2751 = vld [vmem:[#allocation9 + $0x1a0] sm:$0xf]
        %v2752 = vld [vmem:[#allocation9 + $0x1a4] sm:$0xf]
        %v2753 = vld [vmem:[#allocation9 + $0x1a8] sm:$0xf]
        %v2754 = vld [vmem:[#allocation9 + $0x1ac] sm:$0xf]
        %v2755 = vld [vmem:[#allocation9 + $0x1b0] sm:$0xf]
        %v2756 = vld [vmem:[#allocation9 + $0x1b4] sm:$0xf]
        %v2757 = vld [vmem:[#allocation9 + $0x1b8] sm:$0xf]
        %v2758 = vld [vmem:[#allocation9 + $0x1bc] sm:$0xf]
        %v2759 = vld [vmem:[#allocation9 + $0x1c0] sm:$0xf]
        %v2760 = vld [vmem:[#allocation9 + $0x1c4] sm:$0xf]
        %v2761 = vld [vmem:[#allocation9 + $0x1c8] sm:$0xf]
        %v2762 = vld [vmem:[#allocation9 + $0x1cc] sm:$0xf]
        %v2763 = vld [vmem:[#allocation9 + $0x1d0] sm:$0xf]
        %v2764 = vld [vmem:[#allocation9 + $0x1d4] sm:$0xf]
        %v2765 = vld [vmem:[#allocation9 + $0x1d8] sm:$0xf]
        %v2766 = vld [vmem:[#allocation9 + $0x1dc] sm:$0xf]
        %v2767 = vld [vmem:[#allocation9 + $0x1e0] sm:$0xf]
        %v2768 = vld [vmem:[#allocation9 + $0x1e4] sm:$0xf]
        %v2769 = vld [vmem:[#allocation9 + $0x1e8] sm:$0xf]
        %v2770 = vld [vmem:[#allocation9 + $0x1ec] sm:$0xf]
        %v2771 = vld [vmem:[#allocation9 + $0x1f0] sm:$0xf]
        %v2772 = vld [vmem:[#allocation9 + $0x1f4] sm:$0xf]
        %v2773 = vld [vmem:[#allocation9 + $0x1f8] sm:$0xf]
        %v2774 = vld [vmem:[#allocation9 + $0x1fc] sm:$0xf]
        %v2775 = vld [vmem:[#allocation9 + $0x200] sm:$0xf]
        %v2776 = vld [vmem:[#allocation9 + $0x204] sm:$0xf]
        %v2777 = vld [vmem:[#allocation9 + $0x208] sm:$0xf]
        %v2778 = vld [vmem:[#allocation9 + $0x20c] sm:$0xf]
        %v2779 = vld [vmem:[#allocation9 + $0x210] sm:$0xf]
        %v2780 = vld [vmem:[#allocation9 + $0x214] sm:$0xf]
        %v2781 = vld [vmem:[#allocation9 + $0x218] sm:$0xf]
        %v2782 = vld [vmem:[#allocation9 + $0x21c] sm:$0xf]
        %v2783 = vld [vmem:[#allocation9 + $0x220] sm:$0xf]
        %v2784 = vld [vmem:[#allocation9 + $0x224] sm:$0xf]
        %v2785 = vld [vmem:[#allocation9 + $0x228] sm:$0xf]
        %v2786 = vld [vmem:[#allocation9 + $0x22c] sm:$0xf]
        %v2787 = vld [vmem:[#allocation9 + $0x230] sm:$0xf]
        %v2788 = vld [vmem:[#allocation9 + $0x234] sm:$0xf]
        %v2789 = vld [vmem:[#allocation9 + $0x238] sm:$0xf]
        %v2790 = vld [vmem:[#allocation9 + $0x23c] sm:$0xf]
        %v2951 = vunpack.c.l.b16 %v2487
        %v2952 = vunpack.c.h.b16 %v2487
        %v2953 = vunpack.c.l.b16 %v2488
        %v2954 = vunpack.c.h.b16 %v2488
        %v2955 = vunpack.c.l.b16 %v2489
        %v2956 = vunpack.c.h.b16 %v2489
        %v2957 = vunpack.c.l.b16 %v2490
        %v2958 = vunpack.c.h.b16 %v2490
        %v2959 = vunpack.c.l.b16 %v2491
        %v2960 = vunpack.c.l.b16 %v2492
        %v2961 = vunpack.c.h.b16 %v2492
        %v2962 = vunpack.c.l.b16 %v2493
        %v2963 = vunpack.c.h.b16 %v2493
        %v2964 = vunpack.c.l.b16 %v2494
        %v2965 = vunpack.c.h.b16 %v2494
        %v2966 = vunpack.c.l.b16 %v2495
        %v2967 = vunpack.c.h.b16 %v2495
        %v2968 = vunpack.c.l.b16 %v2496
        %v2969 = vunpack.c.l.b16 %v2497
        %v2970 = vunpack.c.h.b16 %v2497
        %v2971 = vunpack.c.l.b16 %v2498
        %v2972 = vunpack.c.h.b16 %v2498
        %v2973 = vunpack.c.l.b16 %v2499
        %v2974 = vunpack.c.h.b16 %v2499
        %v2975 = vunpack.c.l.b16 %v2500
        %v2976 = vunpack.c.h.b16 %v2500
        %v2977 = vunpack.c.l.b16 %v2501
        %v2978 = vunpack.c.l.b16 %v2502
        %v2979 = vunpack.c.h.b16 %v2502
        %v2980 = vunpack.c.l.b16 %v2503
        %v2981 = vunpack.c.h.b16 %v2503
        %v2982 = vunpack.c.l.b16 %v2504
        %v2983 = vunpack.c.h.b16 %v2504
        %v2984 = vunpack.c.l.b16 %v2505
        %v2985 = vunpack.c.h.b16 %v2505
        %v2986 = vunpack.c.l.b16 %v2506
        %v2987 = vunpack.c.l.b16 %v2507
        %v2988 = vunpack.c.h.b16 %v2507
        %v2989 = vunpack.c.l.b16 %v2508
        %v2990 = vunpack.c.h.b16 %v2508
        %v2991 = vunpack.c.l.b16 %v2509
        %v2992 = vunpack.c.h.b16 %v2509
        %v2993 = vunpack.c.l.b16 %v2510
        %v2994 = vunpack.c.h.b16 %v2510
        %v2995 = vunpack.c.l.b16 %v2511
        %v2996 = vunpack.c.l.b16 %v2512
        %v2997 = vunpack.c.h.b16 %v2512
        %v2998 = vunpack.c.l.b16 %v2513
        %v2999 = vunpack.c.h.b16 %v2513
        %v3000 = vunpack.c.l.b16 %v2514
        %v3001 = vunpack.c.h.b16 %v2514
        %v3002 = vunpack.c.l.b16 %v2515
        %v3003 = vunpack.c.h.b16 %v2515
        %v3004 = vunpack.c.l.b16 %v2516
        %v3005 = vunpack.c.l.b16 %v2517
        %v3006 = vunpack.c.h.b16 %v2517
        %v3007 = vunpack.c.l.b16 %v2518
        %v3008 = vunpack.c.h.b16 %v2518
        %v3009 = vunpack.c.l.b16 %v2519
        %v3010 = vunpack.c.h.b16 %v2519
        %v3011 = vunpack.c.l.b16 %v2520
        %v3012 = vunpack.c.h.b16 %v2520
        %v3013 = vunpack.c.l.b16 %v2521
        %v3014 = vunpack.c.l.b16 %v2522
        %v3015 = vunpack.c.h.b16 %v2522
        %v3016 = vunpack.c.l.b16 %v2523
        %v3017 = vunpack.c.h.b16 %v2523
        %v3018 = vunpack.c.l.b16 %v2524
        %v3019 = vunpack.c.h.b16 %v2524
        %v3020 = vunpack.c.l.b16 %v2525
        %v3021 = vunpack.c.h.b16 %v2525
        %v3022 = vunpack.c.l.b16 %v2526
        %v3023 = vunpack.c.l.b16 %v2527
        %v3024 = vunpack.c.h.b16 %v2527
        %v3025 = vunpack.c.l.b16 %v2528
        %v3026 = vunpack.c.h.b16 %v2528
        %v3027 = vunpack.c.l.b16 %v2529
        %v3028 = vunpack.c.h.b16 %v2529
        %v3029 = vunpack.c.l.b16 %v2530
        %v3030 = vunpack.c.h.b16 %v2530
        %v3031 = vunpack.c.l.b16 %v2531
        %v3032 = vunpack.c.l.b16 %v2532
        %v3033 = vunpack.c.h.b16 %v2532
        %v3034 = vunpack.c.l.b16 %v2533
        %v3035 = vunpack.c.h.b16 %v2533
        %v3036 = vunpack.c.l.b16 %v2534
        %v3037 = vunpack.c.h.b16 %v2534
        %v3038 = vunpack.c.l.b16 %v2535
        %v3039 = vunpack.c.h.b16 %v2535
        %v3040 = vunpack.c.l.b16 %v2536
        %v3041 = vunpack.c.l.b16 %v2537
        %v3042 = vunpack.c.h.b16 %v2537
        %v3043 = vunpack.c.l.b16 %v2538
        %v3044 = vunpack.c.h.b16 %v2538
        %v3045 = vunpack.c.l.b16 %v2539
        %v3046 = vunpack.c.h.b16 %v2539
        %v3047 = vunpack.c.l.b16 %v2540
        %v3048 = vunpack.c.h.b16 %v2540
        %v3049 = vunpack.c.l.b16 %v2541
        %v3050 = vunpack.c.l.b16 %v2542
        %v3051 = vunpack.c.h.b16 %v2542
        %v3052 = vunpack.c.l.b16 %v2543
        %v3053 = vunpack.c.h.b16 %v2543
        %v3054 = vunpack.c.l.b16 %v2544
        %v3055 = vunpack.c.h.b16 %v2544
        %v3056 = vunpack.c.l.b16 %v2545
        %v3057 = vunpack.c.h.b16 %v2545
        %v3058 = vunpack.c.l.b16 %v2546
        %v3059 = vunpack.c.l.b16 %v2547
        %v3060 = vunpack.c.h.b16 %v2547
        %v3061 = vunpack.c.l.b16 %v2548
        %v3062 = vunpack.c.h.b16 %v2548
        %v3063 = vunpack.c.l.b16 %v2549
        %v3064 = vunpack.c.h.b16 %v2549
        %v3065 = vunpack.c.l.b16 %v2550
        %v3066 = vunpack.c.h.b16 %v2550
        %v3067 = vunpack.c.l.b16 %v2551
        %v3068 = vunpack.c.l.b16 %v2552
        %v3069 = vunpack.c.h.b16 %v2552
        %v3070 = vunpack.c.l.b16 %v2553
        %v3071 = vunpack.c.h.b16 %v2553
        %v3072 = vunpack.c.l.b16 %v2554
        %v3073 = vunpack.c.h.b16 %v2554
        %v3074 = vunpack.c.l.b16 %v2555
        %v3075 = vunpack.c.h.b16 %v2555
        %v3076 = vunpack.c.l.b16 %v2556
        %v3077 = vunpack.c.l.b16 %v2557
        %v3078 = vunpack.c.h.b16 %v2557
        %v3079 = vunpack.c.l.b16 %v2558
        %v3080 = vunpack.c.h.b16 %v2558
        %v3081 = vunpack.c.l.b16 %v2559
        %v3082 = vunpack.c.h.b16 %v2559
        %v3083 = vunpack.c.l.b16 %v2560
        %v3084 = vunpack.c.h.b16 %v2560
        %v3085 = vunpack.c.l.b16 %v2561
        %v3086 = vunpack.c.l.b16 %v2562
        %v3087 = vunpack.c.h.b16 %v2562
        %v3088 = vunpack.c.l.b16 %v2563
        %v3089 = vunpack.c.h.b16 %v2563
        %v3090 = vunpack.c.l.b16 %v2564
        %v3091 = vunpack.c.h.b16 %v2564
        %v3092 = vunpack.c.l.b16 %v2565
        %v3093 = vunpack.c.h.b16 %v2565
        %v3094 = vunpack.c.l.b16 %v2566
        %v3095 = vunpack.c.l.b16 %v2567
        %v3096 = vunpack.c.h.b16 %v2567
        %v3097 = vunpack.c.l.b16 %v2568
        %v3098 = vunpack.c.h.b16 %v2568
        %v3099 = vunpack.c.l.b16 %v2569
        %v3100 = vunpack.c.h.b16 %v2569
        %v3101 = vunpack.c.l.b16 %v2570
        %v3102 = vunpack.c.h.b16 %v2570
        %v3103 = vunpack.c.l.b16 %v2571
        %v3104 = vunpack.c.l.b16 %v2572
        %v3105 = vunpack.c.h.b16 %v2572
        %v3106 = vunpack.c.l.b16 %v2573
        %v3107 = vunpack.c.h.b16 %v2573
        %v3108 = vunpack.c.l.b16 %v2574
        %v3109 = vunpack.c.h.b16 %v2574
        %v3110 = vunpack.c.l.b16 %v2575
        %v3111 = vunpack.c.h.b16 %v2575
        %v3112 = vunpack.c.l.b16 %v2576
        %v3113 = vunpack.c.l.b16 %v2577
        %v3114 = vunpack.c.h.b16 %v2577
        %v3115 = vunpack.c.l.b16 %v2578
        %v3116 = vunpack.c.h.b16 %v2578
        %v3117 = vunpack.c.l.b16 %v2579
        %v3118 = vunpack.c.h.b16 %v2579
        %v3119 = vunpack.c.l.b16 %v2580
        %v3120 = vunpack.c.h.b16 %v2580
        %v3121 = vunpack.c.l.b16 %v2581
        %v3122 = vunpack.c.l.b16 %v2582
        %v3123 = vunpack.c.h.b16 %v2582
        %v3124 = vunpack.c.l.b16 %v2583
        %v3125 = vunpack.c.h.b16 %v2583
        %v3126 = vunpack.c.l.b16 %v2584
        %v3127 = vunpack.c.h.b16 %v2584
        %v3128 = vunpack.c.l.b16 %v2585
        %v3129 = vunpack.c.h.b16 %v2585
        %v3130 = vunpack.c.l.b16 %v2586
        %v3131 = vunpack.c.l.b16 %v2587
        %v3132 = vunpack.c.h.b16 %v2587
        %v3133 = vunpack.c.l.b16 %v2588
        %v3134 = vunpack.c.h.b16 %v2588
        %v3135 = vunpack.c.l.b16 %v2589
        %v3136 = vunpack.c.h.b16 %v2589
        %v3137 = vunpack.c.l.b16 %v2590
        %v3138 = vunpack.c.h.b16 %v2590
        %v3139 = vunpack.c.l.b16 %v2591
        %v3140 = vunpack.c.l.b16 %v2592
        %v3141 = vunpack.c.h.b16 %v2592
        %v3142 = vunpack.c.l.b16 %v2593
        %v3143 = vunpack.c.h.b16 %v2593
        %v3144 = vunpack.c.l.b16 %v2594
        %v3145 = vunpack.c.h.b16 %v2594
        %v3146 = vunpack.c.l.b16 %v2595
        %v3147 = vunpack.c.h.b16 %v2595
        %v3148 = vunpack.c.l.b16 %v2596
        %v3149 = vunpack.c.l.b16 %v2597
        %v3150 = vunpack.c.h.b16 %v2597
        %v3151 = vunpack.c.l.b16 %v2598
        %v3152 = vunpack.c.h.b16 %v2598
        %v3153 = vunpack.c.l.b16 %v2599
        %v3154 = vunpack.c.h.b16 %v2599
        %v3155 = vunpack.c.l.b16 %v2600
        %v3156 = vunpack.c.h.b16 %v2600
        %v3157 = vunpack.c.l.b16 %v2601
        %v3158 = vunpack.c.l.b16 %v2602
        %v3159 = vunpack.c.h.b16 %v2602
        %v3160 = vunpack.c.l.b16 %v2603
        %v3161 = vunpack.c.h.b16 %v2603
        %v3162 = vunpack.c.l.b16 %v2604
        %v3163 = vunpack.c.h.b16 %v2604
        %v3164 = vunpack.c.l.b16 %v2605
        %v3165 = vunpack.c.h.b16 %v2605
        %v3166 = vunpack.c.l.b16 %v2606
        %v3167 = vunpack.c.l.b16 %v2607
        %v3168 = vunpack.c.h.b16 %v2607
        %v3169 = vunpack.c.l.b16 %v2608
        %v3170 = vunpack.c.h.b16 %v2608
        %v3171 = vunpack.c.l.b16 %v2609
        %v3172 = vunpack.c.h.b16 %v2609
        %v3173 = vunpack.c.l.b16 %v2610
        %v3174 = vunpack.c.h.b16 %v2610
        %v3175 = vunpack.c.l.b16 %v2611
        %v3176 = vunpack.c.l.b16 %v2612
        %v3177 = vunpack.c.h.b16 %v2612
        %v3178 = vunpack.c.l.b16 %v2613
        %v3179 = vunpack.c.h.b16 %v2613
        %v3180 = vunpack.c.l.b16 %v2614
        %v3181 = vunpack.c.h.b16 %v2614
        %v3182 = vunpack.c.l.b16 %v2615
        %v3183 = vunpack.c.h.b16 %v2615
        %v3184 = vunpack.c.l.b16 %v2616
        %v3185 = vunpack.c.l.b16 %v2617
        %v3186 = vunpack.c.h.b16 %v2617
        %v3187 = vunpack.c.l.b16 %v2618
        %v3188 = vunpack.c.h.b16 %v2618
        %v3189 = vunpack.c.l.b16 %v2619
        %v3190 = vunpack.c.h.b16 %v2619
        %v3191 = vunpack.c.l.b16 %v2620
        %v3192 = vunpack.c.h.b16 %v2620
        %v3193 = vunpack.c.l.b16 %v2621
        %v3194 = vunpack.c.l.b16 %v2622
        %v3195 = vunpack.c.h.b16 %v2622
        %v3196 = vunpack.c.l.b16 %v2623
        %v3197 = vunpack.c.h.b16 %v2623
        %v3198 = vunpack.c.l.b16 %v2624
        %v3199 = vunpack.c.h.b16 %v2624
        %v3200 = vunpack.c.l.b16 %v2625
        %v3201 = vunpack.c.h.b16 %v2625
        %v3202 = vunpack.c.l.b16 %v2626
        %v3203 = vunpack.c.l.b16 %v2627
        %v3204 = vunpack.c.h.b16 %v2627
        %v3205 = vunpack.c.l.b16 %v2628
        %v3206 = vunpack.c.h.b16 %v2628
        %v3207 = vunpack.c.l.b16 %v2629
        %v3208 = vunpack.c.h.b16 %v2629
        %v3209 = vunpack.c.l.b16 %v2630
        %v3210 = vunpack.c.h.b16 %v2630
        %v3211 = vunpack.c.l.b16 %v2631
        %v3212 = vunpack.c.l.b16 %v2632
        %v3213 = vunpack.c.h.b16 %v2632
        %v3214 = vunpack.c.l.b16 %v2633
        %v3215 = vunpack.c.h.b16 %v2633
        %v3216 = vunpack.c.l.b16 %v2634
        %v3217 = vunpack.c.h.b16 %v2634
        %v3218 = vunpack.c.l.b16 %v2635
        %v3219 = vunpack.c.h.b16 %v2635
        %v3220 = vunpack.c.l.b16 %v2636
        %v3221 = vunpack.c.l.b16 %v2637
        %v3222 = vunpack.c.h.b16 %v2637
        %v3223 = vunpack.c.l.b16 %v2638
        %v3224 = vunpack.c.h.b16 %v2638
        %v3225 = vunpack.c.l.b16 %v2639
        %v3226 = vunpack.c.h.b16 %v2639
        %v3227 = vunpack.c.l.b16 %v2640
        %v3228 = vunpack.c.h.b16 %v2640
        %v3229 = vunpack.c.l.b16 %v2641
        %v3230 = vunpack.c.l.b16 %v2642
        %v3231 = vunpack.c.h.b16 %v2642
        %v3232 = vunpack.c.l.b16 %v2643
        %v3233 = vunpack.c.h.b16 %v2643
        %v3234 = vunpack.c.l.b16 %v2644
        %v3235 = vunpack.c.h.b16 %v2644
        %v3236 = vunpack.c.l.b16 %v2645
        %v3237 = vunpack.c.h.b16 %v2645
        %v3238 = vunpack.c.l.b16 %v2646
        %v3239 = vpack.c.b16 %v2960, %v2951
        %v3240 = vpack.c.b16 %v2961, %v2952
        %v3241 = vpack.c.b16 %v2962, %v2953
        %v3242 = vpack.c.b16 %v2963, %v2954
        %v3243 = vpack.c.b16 %v2964, %v2955
        %v3244 = vpack.c.b16 %v2965, %v2956
        %v3245 = vpack.c.b16 %v2966, %v2957
        %v3246 = vpack.c.b16 %v2967, %v2958
        %v3247 = vpack.c.b16 %v2968, %v2959
        %v3248 = vpack.c.b16 %v2978, %v2969
        %v3249 = vpack.c.b16 %v2979, %v2970
        %v3250 = vpack.c.b16 %v2980, %v2971
        %v3251 = vpack.c.b16 %v2981, %v2972
        %v3252 = vpack.c.b16 %v2982, %v2973
        %v3253 = vpack.c.b16 %v2983, %v2974
        %v3254 = vpack.c.b16 %v2984, %v2975
        %v3255 = vpack.c.b16 %v2985, %v2976
        %v3256 = vpack.c.b16 %v2986, %v2977
        %v3257 = vpack.c.b16 %v2996, %v2987
        %v3258 = vpack.c.b16 %v2997, %v2988
        %v3259 = vpack.c.b16 %v2998, %v2989
        %v3260 = vpack.c.b16 %v2999, %v2990
        %v3261 = vpack.c.b16 %v3000, %v2991
        %v3262 = vpack.c.b16 %v3001, %v2992
        %v3263 = vpack.c.b16 %v3002, %v2993
        %v3264 = vpack.c.b16 %v3003, %v2994
        %v3265 = vpack.c.b16 %v3004, %v2995
        %v3266 = vpack.c.b16 %v3014, %v3005
        %v3267 = vpack.c.b16 %v3015, %v3006
        %v3268 = vpack.c.b16 %v3016, %v3007
        %v3269 = vpack.c.b16 %v3017, %v3008
        %v3270 = vpack.c.b16 %v3018, %v3009
        %v3271 = vpack.c.b16 %v3019, %v3010
        %v3272 = vpack.c.b16 %v3020, %v3011
        %v3273 = vpack.c.b16 %v3021, %v3012
        %v3274 = vpack.c.b16 %v3022, %v3013
        %v3275 = vpack.c.b16 %v3032, %v3023
        %v3276 = vpack.c.b16 %v3033, %v3024
        %v3277 = vpack.c.b16 %v3034, %v3025
        %v3278 = vpack.c.b16 %v3035, %v3026
        %v3279 = vpack.c.b16 %v3036, %v3027
        %v3280 = vpack.c.b16 %v3037, %v3028
        %v3281 = vpack.c.b16 %v3038, %v3029
        %v3282 = vpack.c.b16 %v3039, %v3030
        %v3283 = vpack.c.b16 %v3040, %v3031
        %v3284 = vpack.c.b16 %v3050, %v3041
        %v3285 = vpack.c.b16 %v3051, %v3042
        %v3286 = vpack.c.b16 %v3052, %v3043
        %v3287 = vpack.c.b16 %v3053, %v3044
        %v3288 = vpack.c.b16 %v3054, %v3045
        %v3289 = vpack.c.b16 %v3055, %v3046
        %v3290 = vpack.c.b16 %v3056, %v3047
        %v3291 = vpack.c.b16 %v3057, %v3048
        %v3292 = vpack.c.b16 %v3058, %v3049
        %v3293 = vpack.c.b16 %v3068, %v3059
        %v3294 = vpack.c.b16 %v3069, %v3060
        %v3295 = vpack.c.b16 %v3070, %v3061
        %v3296 = vpack.c.b16 %v3071, %v3062
        %v3297 = vpack.c.b16 %v3072, %v3063
        %v3298 = vpack.c.b16 %v3073, %v3064
        %v3299 = vpack.c.b16 %v3074, %v3065
        %v3300 = vpack.c.b16 %v3075, %v3066
        %v3301 = vpack.c.b16 %v3076, %v3067
        %v3302 = vpack.c.b16 %v3086, %v3077
        %v3303 = vpack.c.b16 %v3087, %v3078
        %v3304 = vpack.c.b16 %v3088, %v3079
        %v3305 = vpack.c.b16 %v3089, %v3080
        %v3306 = vpack.c.b16 %v3090, %v3081
        %v3307 = vpack.c.b16 %v3091, %v3082
        %v3308 = vpack.c.b16 %v3092, %v3083
        %v3309 = vpack.c.b16 %v3093, %v3084
        %v3310 = vpack.c.b16 %v3094, %v3085
        %v3311 = vpack.c.b16 %v3104, %v3095
        %v3312 = vpack.c.b16 %v3105, %v3096
        %v3313 = vpack.c.b16 %v3106, %v3097
        %v3314 = vpack.c.b16 %v3107, %v3098
        %v3315 = vpack.c.b16 %v3108, %v3099
        %v3316 = vpack.c.b16 %v3109, %v3100
        %v3317 = vpack.c.b16 %v3110, %v3101
        %v3318 = vpack.c.b16 %v3111, %v3102
        %v3319 = vpack.c.b16 %v3112, %v3103
        %v3320 = vpack.c.b16 %v3122, %v3113
        %v3321 = vpack.c.b16 %v3123, %v3114
        %v3322 = vpack.c.b16 %v3124, %v3115
        %v3323 = vpack.c.b16 %v3125, %v3116
        %v3324 = vpack.c.b16 %v3126, %v3117
        %v3325 = vpack.c.b16 %v3127, %v3118
        %v3326 = vpack.c.b16 %v3128, %v3119
        %v3327 = vpack.c.b16 %v3129, %v3120
        %v3328 = vpack.c.b16 %v3130, %v3121
        %v3329 = vpack.c.b16 %v3140, %v3131
        %v3330 = vpack.c.b16 %v3141, %v3132
        %v3331 = vpack.c.b16 %v3142, %v3133
        %v3332 = vpack.c.b16 %v3143, %v3134
        %v3333 = vpack.c.b16 %v3144, %v3135
        %v3334 = vpack.c.b16 %v3145, %v3136
        %v3335 = vpack.c.b16 %v3146, %v3137
        %v3336 = vpack.c.b16 %v3147, %v3138
        %v3337 = vpack.c.b16 %v3148, %v3139
        %v3338 = vpack.c.b16 %v3158, %v3149
        %v3339 = vpack.c.b16 %v3159, %v3150
        %v3340 = vpack.c.b16 %v3160, %v3151
        %v3341 = vpack.c.b16 %v3161, %v3152
        %v3342 = vpack.c.b16 %v3162, %v3153
        %v3343 = vpack.c.b16 %v3163, %v3154
        %v3344 = vpack.c.b16 %v3164, %v3155
        %v3345 = vpack.c.b16 %v3165, %v3156
        %v3346 = vpack.c.b16 %v3166, %v3157
        %v3347 = vpack.c.b16 %v3176, %v3167
        %v3348 = vpack.c.b16 %v3177, %v3168
        %v3349 = vpack.c.b16 %v3178, %v3169
        %v3350 = vpack.c.b16 %v3179, %v3170
        %v3351 = vpack.c.b16 %v3180, %v3171
        %v3352 = vpack.c.b16 %v3181, %v3172
        %v3353 = vpack.c.b16 %v3182, %v3173
        %v3354 = vpack.c.b16 %v3183, %v3174
        %v3355 = vpack.c.b16 %v3184, %v3175
        %v3356 = vpack.c.b16 %v3194, %v3185
        %v3357 = vpack.c.b16 %v3195, %v3186
        %v3358 = vpack.c.b16 %v3196, %v3187
        %v3359 = vpack.c.b16 %v3197, %v3188
        %v3360 = vpack.c.b16 %v3198, %v3189
        %v3361 = vpack.c.b16 %v3199, %v3190
        %v3362 = vpack.c.b16 %v3200, %v3191
        %v3363 = vpack.c.b16 %v3201, %v3192
        %v3364 = vpack.c.b16 %v3202, %v3193
        %v3365 = vpack.c.b16 %v3212, %v3203
        %v3366 = vpack.c.b16 %v3213, %v3204
        %v3367 = vpack.c.b16 %v3214, %v3205
        %v3368 = vpack.c.b16 %v3215, %v3206
        %v3369 = vpack.c.b16 %v3216, %v3207
        %v3370 = vpack.c.b16 %v3217, %v3208
        %v3371 = vpack.c.b16 %v3218, %v3209
        %v3372 = vpack.c.b16 %v3219, %v3210
        %v3373 = vpack.c.b16 %v3220, %v3211
        %v3374 = vpack.c.b16 %v3230, %v3221
        %v3375 = vpack.c.b16 %v3231, %v3222
        %v3376 = vpack.c.b16 %v3232, %v3223
        %v3377 = vpack.c.b16 %v3233, %v3224
        %v3378 = vpack.c.b16 %v3234, %v3225
        %v3379 = vpack.c.b16 %v3235, %v3226
        %v3380 = vpack.c.b16 %v3236, %v3227
        %v3381 = vpack.c.b16 %v3237, %v3228
        %v3382 = vpack.c.b16 %v3238, %v3229
        %v3671 = vunpack.c.l.b16 %v2647
        %v3672 = vunpack.c.l.b16 %v2648
        %v3673 = vunpack.c.l.b16 %v2649
        %v3674 = vunpack.c.l.b16 %v2650
        %v3675 = vunpack.c.l.b16 %v2651
        %v3676 = vunpack.c.l.b16 %v2652
        %v3677 = vunpack.c.l.b16 %v2653
        %v3678 = vunpack.c.l.b16 %v2654
        %v3679 = vunpack.c.l.b16 %v2655
        %v3680 = vunpack.c.l.b16 %v2656
        %v3681 = vunpack.c.l.b16 %v2657
        %v3682 = vunpack.c.l.b16 %v2658
        %v3683 = vunpack.c.l.b16 %v2659
        %v3684 = vunpack.c.l.b16 %v2660
        %v3685 = vunpack.c.l.b16 %v2661
        %v3686 = vunpack.c.l.b16 %v2662
        %v3687 = vunpack.c.l.b16 %v2663
        %v3688 = vunpack.c.l.b16 %v2664
        %v3689 = vunpack.c.l.b16 %v2665
        %v3690 = vunpack.c.l.b16 %v2666
        %v3691 = vunpack.c.l.b16 %v2667
        %v3692 = vunpack.c.l.b16 %v2668
        %v3693 = vunpack.c.l.b16 %v2669
        %v3694 = vunpack.c.l.b16 %v2670
        %v3695 = vunpack.c.l.b16 %v2671
        %v3696 = vunpack.c.l.b16 %v2672
        %v3697 = vunpack.c.l.b16 %v2673
        %v3698 = vunpack.c.l.b16 %v2674
        %v3699 = vunpack.c.l.b16 %v2675
        %v3700 = vunpack.c.l.b16 %v2676
        %v3701 = vunpack.c.l.b16 %v2677
        %v3702 = vunpack.c.l.b16 %v2678
        %v3703 = vunpack.c.l.b16 %v2679
        %v3704 = vunpack.c.l.b16 %v2680
        %v3705 = vunpack.c.l.b16 %v2681
        %v3706 = vunpack.c.l.b16 %v2682
        %v3707 = vunpack.c.l.b16 %v2683
        %v3708 = vunpack.c.l.b16 %v2684
        %v3709 = vunpack.c.l.b16 %v2685
        %v3710 = vunpack.c.l.b16 %v2686
        %v3711 = vunpack.c.l.b16 %v2687
        %v3712 = vunpack.c.l.b16 %v2688
        %v3713 = vunpack.c.l.b16 %v2689
        %v3714 = vunpack.c.l.b16 %v2690
        %v3715 = vunpack.c.l.b16 %v2691
        %v3716 = vunpack.c.l.b16 %v2692
        %v3717 = vunpack.c.l.b16 %v2693
        %v3718 = vunpack.c.l.b16 %v2694
        %v3719 = vunpack.c.l.b16 %v2695
        %v3720 = vunpack.c.l.b16 %v2696
        %v3721 = vunpack.c.l.b16 %v2697
        %v3722 = vunpack.c.l.b16 %v2698
        %v3723 = vunpack.c.l.b16 %v2699
        %v3724 = vunpack.c.l.b16 %v2700
        %v3725 = vunpack.c.l.b16 %v2701
        %v3726 = vunpack.c.l.b16 %v2702
        %v3727 = vunpack.c.l.b16 %v2703
        %v3728 = vunpack.c.l.b16 %v2704
        %v3729 = vunpack.c.l.b16 %v2705
        %v3730 = vunpack.c.l.b16 %v2706
        %v3731 = vunpack.c.l.b16 %v2707
        %v3732 = vunpack.c.l.b16 %v2708
        %v3733 = vunpack.c.l.b16 %v2709
        %v3734 = vunpack.c.l.b16 %v2710
        %v3735 = vunpack.c.l.b16 %v2711
        %v3736 = vunpack.c.l.b16 %v2712
        %v3737 = vunpack.c.l.b16 %v2713
        %v3738 = vunpack.c.l.b16 %v2714
        %v3739 = vunpack.c.l.b16 %v2715
        %v3740 = vunpack.c.l.b16 %v2716
        %v3741 = vunpack.c.l.b16 %v2717
        %v3742 = vunpack.c.l.b16 %v2718
        %v3743 = vunpack.c.l.b16 %v2719
        %v3744 = vunpack.c.l.b16 %v2720
        %v3745 = vunpack.c.l.b16 %v2721
        %v3746 = vunpack.c.l.b16 %v2722
        %v3747 = vunpack.c.l.b16 %v2723
        %v3748 = vunpack.c.l.b16 %v2724
        %v3749 = vunpack.c.l.b16 %v2725
        %v3750 = vunpack.c.l.b16 %v2726
        %v3751 = vunpack.c.l.b16 %v2727
        %v3752 = vunpack.c.l.b16 %v2728
        %v3753 = vunpack.c.l.b16 %v2729
        %v3754 = vunpack.c.l.b16 %v2730
        %v3755 = vunpack.c.l.b16 %v2731
        %v3756 = vunpack.c.l.b16 %v2732
        %v3757 = vunpack.c.l.b16 %v2733
        %v3758 = vunpack.c.l.b16 %v2734
        %v3759 = vunpack.c.l.b16 %v2735
        %v3760 = vunpack.c.l.b16 %v2736
        %v3761 = vunpack.c.l.b16 %v2737
        %v3762 = vunpack.c.l.b16 %v2738
        %v3763 = vunpack.c.l.b16 %v2739
        %v3764 = vunpack.c.l.b16 %v2740
        %v3765 = vunpack.c.l.b16 %v2741
        %v3766 = vunpack.c.l.b16 %v2742
        %v3767 = vunpack.c.l.b16 %v2743
        %v3768 = vunpack.c.l.b16 %v2744
        %v3769 = vunpack.c.l.b16 %v2745
        %v3770 = vunpack.c.l.b16 %v2746
        %v3771 = vunpack.c.l.b16 %v2747
        %v3772 = vunpack.c.l.b16 %v2748
        %v3773 = vunpack.c.l.b16 %v2749
        %v3774 = vunpack.c.l.b16 %v2750
        %v3775 = vunpack.c.l.b16 %v2751
        %v3776 = vunpack.c.l.b16 %v2752
        %v3777 = vunpack.c.l.b16 %v2753
        %v3778 = vunpack.c.l.b16 %v2754
        %v3779 = vunpack.c.l.b16 %v2755
        %v3780 = vunpack.c.l.b16 %v2756
        %v3781 = vunpack.c.l.b16 %v2757
        %v3782 = vunpack.c.l.b16 %v2758
        %v3783 = vunpack.c.l.b16 %v2759
        %v3784 = vunpack.c.l.b16 %v2760
        %v3785 = vunpack.c.l.b16 %v2761
        %v3786 = vunpack.c.l.b16 %v2762
        %v3787 = vunpack.c.l.b16 %v2763
        %v3788 = vunpack.c.l.b16 %v2764
        %v3789 = vunpack.c.l.b16 %v2765
        %v3790 = vunpack.c.l.b16 %v2766
        %v3791 = vunpack.c.l.b16 %v2767
        %v3792 = vunpack.c.l.b16 %v2768
        %v3793 = vunpack.c.l.b16 %v2769
        %v3794 = vunpack.c.l.b16 %v2770
        %v3795 = vunpack.c.l.b16 %v2771
        %v3796 = vunpack.c.l.b16 %v2772
        %v3797 = vunpack.c.l.b16 %v2773
        %v3798 = vunpack.c.l.b16 %v2774
        %v3799 = vunpack.c.l.b16 %v2775
        %v3800 = vunpack.c.l.b16 %v2776
        %v3801 = vunpack.c.l.b16 %v2777
        %v3802 = vunpack.c.l.b16 %v2778
        %v3803 = vunpack.c.l.b16 %v2779
        %v3804 = vunpack.c.l.b16 %v2780
        %v3805 = vunpack.c.l.b16 %v2781
        %v3806 = vunpack.c.l.b16 %v2782
        %v3807 = vunpack.c.l.b16 %v2783
        %v3808 = vunpack.c.l.b16 %v2784
        %v3809 = vunpack.c.l.b16 %v2785
        %v3810 = vunpack.c.l.b16 %v2786
        %v3811 = vunpack.c.l.b16 %v2787
        %v3812 = vunpack.c.l.b16 %v2788
        %v3813 = vunpack.c.l.b16 %v2789
        %v3814 = vunpack.c.l.b16 %v2790
        %v3815 = vpack.c.b16 %v3672, %v3671
        %v3816 = vpack.c.b16 %v3674, %v3673
        %v3817 = vpack.c.b16 %v3676, %v3675
        %v3818 = vpack.c.b16 %v3678, %v3677
        %v3819 = vpack.c.b16 %v3680, %v3679
        %v3820 = vpack.c.b16 %v3682, %v3681
        %v3821 = vpack.c.b16 %v3684, %v3683
        %v3822 = vpack.c.b16 %v3686, %v3685
        %v3823 = vpack.c.b16 %v3688, %v3687
        %v3824 = vpack.c.b16 %v3690, %v3689
        %v3825 = vpack.c.b16 %v3692, %v3691
        %v3826 = vpack.c.b16 %v3694, %v3693
        %v3827 = vpack.c.b16 %v3696, %v3695
        %v3828 = vpack.c.b16 %v3698, %v3697
        %v3829 = vpack.c.b16 %v3700, %v3699
        %v3830 = vpack.c.b16 %v3702, %v3701
        %v3831 = vpack.c.b16 %v3704, %v3703
        %v3832 = vpack.c.b16 %v3706, %v3705
        %v3833 = vpack.c.b16 %v3708, %v3707
        %v3834 = vpack.c.b16 %v3710, %v3709
        %v3835 = vpack.c.b16 %v3712, %v3711
        %v3836 = vpack.c.b16 %v3714, %v3713
        %v3837 = vpack.c.b16 %v3716, %v3715
        %v3838 = vpack.c.b16 %v3718, %v3717
        %v3839 = vpack.c.b16 %v3720, %v3719
        %v3840 = vpack.c.b16 %v3722, %v3721
        %v3841 = vpack.c.b16 %v3724, %v3723
        %v3842 = vpack.c.b16 %v3726, %v3725
        %v3843 = vpack.c.b16 %v3728, %v3727
        %v3844 = vpack.c.b16 %v3730, %v3729
        %v3845 = vpack.c.b16 %v3732, %v3731
        %v3846 = vpack.c.b16 %v3734, %v3733
        %v3847 = vpack.c.b16 %v3736, %v3735
        %v3848 = vpack.c.b16 %v3738, %v3737
        %v3849 = vpack.c.b16 %v3740, %v3739
        %v3850 = vpack.c.b16 %v3742, %v3741
        %v3851 = vpack.c.b16 %v3744, %v3743
        %v3852 = vpack.c.b16 %v3746, %v3745
        %v3853 = vpack.c.b16 %v3748, %v3747
        %v3854 = vpack.c.b16 %v3750, %v3749
        %v3855 = vpack.c.b16 %v3752, %v3751
        %v3856 = vpack.c.b16 %v3754, %v3753
        %v3857 = vpack.c.b16 %v3756, %v3755
        %v3858 = vpack.c.b16 %v3758, %v3757
        %v3859 = vpack.c.b16 %v3760, %v3759
        %v3860 = vpack.c.b16 %v3762, %v3761
        %v3861 = vpack.c.b16 %v3764, %v3763
        %v3862 = vpack.c.b16 %v3766, %v3765
        %v3863 = vpack.c.b16 %v3768, %v3767
        %v3864 = vpack.c.b16 %v3770, %v3769
        %v3865 = vpack.c.b16 %v3772, %v3771
        %v3866 = vpack.c.b16 %v3774, %v3773
        %v3867 = vpack.c.b16 %v3776, %v3775
        %v3868 = vpack.c.b16 %v3778, %v3777
        %v3869 = vpack.c.b16 %v3780, %v3779
        %v3870 = vpack.c.b16 %v3782, %v3781
        %v3871 = vpack.c.b16 %v3784, %v3783
        %v3872 = vpack.c.b16 %v3786, %v3785
        %v3873 = vpack.c.b16 %v3788, %v3787
        %v3874 = vpack.c.b16 %v3790, %v3789
        %v3875 = vpack.c.b16 %v3792, %v3791
        %v3876 = vpack.c.b16 %v3794, %v3793
        %v3877 = vpack.c.b16 %v3796, %v3795
        %v3878 = vpack.c.b16 %v3798, %v3797
        %v3879 = vpack.c.b16 %v3800, %v3799
        %v3880 = vpack.c.b16 %v3802, %v3801
        %v3881 = vpack.c.b16 %v3804, %v3803
        %v3882 = vpack.c.b16 %v3806, %v3805
        %v3883 = vpack.c.b16 %v3808, %v3807
        %v3884 = vpack.c.b16 %v3810, %v3809
        %v3885 = vpack.c.b16 %v3812, %v3811
        %v3886 = vpack.c.b16 %v3814, %v3813
        %3959 = vmatprep.subr.bf16.mxu0 0
        %3960 = vmatpush1.bf16.msra.mxu0 %v3822
        %3961 = vmatprep.subr.bf16.mxu0 0
        %3962 = vmatpush1.bf16.msra.mxu0 %v3821
        %3963 = vmatprep.subr.bf16.mxu0 0
        %3964 = vmatpush1.bf16.msra.mxu0 %v3820
        %3965 = vmatprep.subr.bf16.mxu0 0
        %3966 = vmatpush1.bf16.msra.mxu0 %v3819
        %3967 = vmatprep.subr.bf16.mxu0 0
        %3968 = vmatpush1.bf16.msra.mxu0 %v3818
        %3969 = vmatprep.subr.bf16.mxu0 0
        %3970 = vmatpush1.bf16.msra.mxu0 %v3817
        %3971 = vmatprep.subr.bf16.mxu0 0
        %3972 = vmatpush1.bf16.msra.mxu0 %v3816
        %3973 = vmatprep.subr.bf16.mxu0 0
        %3974 = vmatpush1.bf16.msra.mxu0 %v3815
        %3975 = vmatprep.subr.bf16.mxu0 0
        %3976 = vmatpush2.bf16.msra.mxu0 %v3830
        %3977 = vmatprep.subr.bf16.mxu0 0
        %3978 = vmatpush2.bf16.msra.mxu0 %v3829
        %3979 = vmatprep.subr.bf16.mxu0 0
        %3980 = vmatpush2.bf16.msra.mxu0 %v3828
        %3981 = vmatprep.subr.bf16.mxu0 0
        %3982 = vmatpush2.bf16.msra.mxu0 %v3827
        %3983 = vmatprep.subr.bf16.mxu0 0
        %3984 = vmatpush2.bf16.msra.mxu0 %v3826
        %3985 = vmatprep.subr.bf16.mxu0 0
        %3986 = vmatpush2.bf16.msra.mxu0 %v3825
        %3987 = vmatprep.subr.bf16.mxu0 0
        %3988 = vmatpush2.bf16.msra.mxu0 %v3824
        %3989 = vmatprep.subr.bf16.mxu0 0
        %3990 = vmatpush2.bf16.msra.mxu0 %v3823
        %3991 = vmatprep.mubr.bf16.mxu0 %v3240
        %3992 = vmatmul.mubr.bf16.gmra.mxu0 %v3239
        %v3993 = vpop.f32.mrf.mxu0
        %v3994 = vadd.f32 0.0, %v3993
        %v3995 = vpop.f32.mrf.mxu0
        %v3996 = vpop.f32.mrf.mxu0
        %v3997 = vadd.f32 0.0, %v3996
        %v3998 = vpop.f32.mrf.mxu0
        %3999 = vmatprep.mubr.bf16.mxu0 %v3249
        %4000 = vmatmul.mubr.bf16.gmra.mxu0 %v3248
        %v4001 = vpop.f32.mrf.mxu0
        %v4002 = vadd.f32 0.0, %v4001
        %v4003 = vpop.f32.mrf.mxu0
        %v4004 = vpop.f32.mrf.mxu0
        %v4005 = vadd.f32 0.0, %v4004
        %v4006 = vpop.f32.mrf.mxu0
        %4007 = vmatprep.mubr.bf16.mxu0 %v3258
        %4008 = vmatmul.mubr.bf16.gmra.mxu0 %v3257
        %v4009 = vpop.f32.mrf.mxu0
        %v4010 = vadd.f32 0.0, %v4009
        %v4011 = vpop.f32.mrf.mxu0
        %v4012 = vpop.f32.mrf.mxu0
        %v4013 = vadd.f32 0.0, %v4012
        %v4014 = vpop.f32.mrf.mxu0
        %4015 = vmatprep.mubr.bf16.mxu0 %v3267
        %4016 = vmatmul.mubr.bf16.gmra.mxu0 %v3266
        %v4017 = vpop.f32.mrf.mxu0
        %v4018 = vadd.f32 0.0, %v4017
        %v4019 = vpop.f32.mrf.mxu0
        %v4020 = vpop.f32.mrf.mxu0
        %v4021 = vadd.f32 0.0, %v4020
        %v4022 = vpop.f32.mrf.mxu0
        %4023 = vmatprep.mubr.bf16.mxu0 %v3276
        %4024 = vmatmul.mubr.bf16.gmra.mxu0 %v3275
        %v4025 = vpop.f32.mrf.mxu0
        %v4026 = vadd.f32 0.0, %v4025
        %v4027 = vpop.f32.mrf.mxu0
        %v4028 = vpop.f32.mrf.mxu0
        %v4029 = vadd.f32 0.0, %v4028
        %v4030 = vpop.f32.mrf.mxu0
        %4031 = vmatprep.mubr.bf16.mxu0 %v3285
        %4032 = vmatmul.mubr.bf16.gmra.mxu0 %v3284
        %v4033 = vpop.f32.mrf.mxu0
        %v4034 = vadd.f32 0.0, %v4033
        %v4035 = vpop.f32.mrf.mxu0
        %v4036 = vpop.f32.mrf.mxu0
        %v4037 = vadd.f32 0.0, %v4036
        %v4038 = vpop.f32.mrf.mxu0
        %4039 = vmatprep.mubr.bf16.mxu0 %v3294
        %4040 = vmatmul.mubr.bf16.gmra.mxu0 %v3293
        %v4041 = vpop.f32.mrf.mxu0
        %v4042 = vadd.f32 0.0, %v4041
        %v4043 = vpop.f32.mrf.mxu0
        %v4044 = vpop.f32.mrf.mxu0
        %v4045 = vadd.f32 0.0, %v4044
        %v4046 = vpop.f32.mrf.mxu0
        %4047 = vmatprep.mubr.bf16.mxu0 %v3303
        %4048 = vmatmul.mubr.bf16.gmra.mxu0 %v3302
        %v4049 = vpop.f32.mrf.mxu0
        %v4050 = vadd.f32 0.0, %v4049
        %v4051 = vpop.f32.mrf.mxu0
        %v4052 = vpop.f32.mrf.mxu0
        %v4053 = vadd.f32 0.0, %v4052
        %v4054 = vpop.f32.mrf.mxu0
        %4055 = vmatprep.mubr.bf16.mxu0 %v3312
        %4056 = vmatmul.mubr.bf16.gmra.mxu0 %v3311
        %v4057 = vpop.f32.mrf.mxu0
        %v4058 = vadd.f32 0.0, %v4057
        %v4059 = vpop.f32.mrf.mxu0
        %v4060 = vpop.f32.mrf.mxu0
        %v4061 = vadd.f32 0.0, %v4060
        %v4062 = vpop.f32.mrf.mxu0
        %4063 = vmatprep.mubr.bf16.mxu0 %v3321
        %4064 = vmatmul.mubr.bf16.gmra.mxu0 %v3320
        %v4065 = vpop.f32.mrf.mxu0
        %v4066 = vadd.f32 0.0, %v4065
        %v4067 = vpop.f32.mrf.mxu0
        %v4068 = vpop.f32.mrf.mxu0
        %v4069 = vadd.f32 0.0, %v4068
        %v4070 = vpop.f32.mrf.mxu0
        %4071 = vmatprep.mubr.bf16.mxu0 %v3330
        %4072 = vmatmul.mubr.bf16.gmra.mxu0 %v3329
        %v4073 = vpop.f32.mrf.mxu0
        %v4074 = vadd.f32 0.0, %v4073
        %v4075 = vpop.f32.mrf.mxu0
        %v4076 = vpop.f32.mrf.mxu0
        %v4077 = vadd.f32 0.0, %v4076
        %v4078 = vpop.f32.mrf.mxu0
        %4079 = vmatprep.mubr.bf16.mxu0 %v3339
        %4080 = vmatmul.mubr.bf16.gmra.mxu0 %v3338
        %v4081 = vpop.f32.mrf.mxu0
        %v4082 = vadd.f32 0.0, %v4081
        %v4083 = vpop.f32.mrf.mxu0
        %v4084 = vpop.f32.mrf.mxu0
        %v4085 = vadd.f32 0.0, %v4084
        %v4086 = vpop.f32.mrf.mxu0
        %4087 = vmatprep.mubr.bf16.mxu0 %v3348
        %4088 = vmatmul.mubr.bf16.gmra.mxu0 %v3347
        %v4089 = vpop.f32.mrf.mxu0
        %v4090 = vadd.f32 0.0, %v4089
        %v4091 = vpop.f32.mrf.mxu0
        %v4092 = vpop.f32.mrf.mxu0
        %v4093 = vadd.f32 0.0, %v4092
        %v4094 = vpop.f32.mrf.mxu0
        %4095 = vmatprep.mubr.bf16.mxu0 %v3357
        %4096 = vmatmul.mubr.bf16.gmra.mxu0 %v3356
        %v4097 = vpop.f32.mrf.mxu0
        %v4098 = vadd.f32 0.0, %v4097
        %v4099 = vpop.f32.mrf.mxu0
        %v4100 = vpop.f32.mrf.mxu0
        %v4101 = vadd.f32 0.0, %v4100
        %v4102 = vpop.f32.mrf.mxu0
        %4103 = vmatprep.mubr.bf16.mxu0 %v3366
        %4104 = vmatmul.mubr.bf16.gmra.mxu0 %v3365
        %v4105 = vpop.f32.mrf.mxu0
        %v4106 = vadd.f32 0.0, %v4105
        %v4107 = vpop.f32.mrf.mxu0
        %v4108 = vpop.f32.mrf.mxu0
        %v4109 = vadd.f32 0.0, %v4108
        %v4110 = vpop.f32.mrf.mxu0
        %4111 = vmatprep.mubr.bf16.mxu0 %v3375
        %4112 = vmatmul.mubr.bf16.gmra.mxu0 %v3374
        %v4113 = vpop.f32.mrf.mxu0
        %v4114 = vadd.f32 0.0, %v4113
        %v4115 = vpop.f32.mrf.mxu0
        %v4116 = vpop.f32.mrf.mxu0
        %v4117 = vadd.f32 0.0, %v4116
        %v4118 = vpop.f32.mrf.mxu0
        %4119 = vdwg.mxu0
        %4120 = vmatprep.subr.bf16.mxu0 0
        %4121 = vmatpush1.bf16.msra.mxu0 %v3838
        %4122 = vmatprep.subr.bf16.mxu0 0
        %4123 = vmatpush1.bf16.msra.mxu0 %v3837
        %4124 = vmatprep.subr.bf16.mxu0 0
        %4125 = vmatpush1.bf16.msra.mxu0 %v3836
        %4126 = vmatprep.subr.bf16.mxu0 0
        %4127 = vmatpush1.bf16.msra.mxu0 %v3835
        %4128 = vmatprep.subr.bf16.mxu0 0
        %4129 = vmatpush1.bf16.msra.mxu0 %v3834
        %4130 = vmatprep.subr.bf16.mxu0 0
        %4131 = vmatpush1.bf16.msra.mxu0 %v3833
        %4132 = vmatprep.subr.bf16.mxu0 0
        %4133 = vmatpush1.bf16.msra.mxu0 %v3832
        %4134 = vmatprep.subr.bf16.mxu0 0
        %4135 = vmatpush1.bf16.msra.mxu0 %v3831
        %4136 = vmatprep.subr.bf16.mxu0 0
        %4137 = vmatpush2.bf16.msra.mxu0 %v3846
        %4138 = vmatprep.subr.bf16.mxu0 0
        %4139 = vmatpush2.bf16.msra.mxu0 %v3845
        %4140 = vmatprep.subr.bf16.mxu0 0
        %4141 = vmatpush2.bf16.msra.mxu0 %v3844
        %4142 = vmatprep.subr.bf16.mxu0 0
        %4143 = vmatpush2.bf16.msra.mxu0 %v3843
        %4144 = vmatprep.subr.bf16.mxu0 0
        %4145 = vmatpush2.bf16.msra.mxu0 %v3842
        %4146 = vmatprep.subr.bf16.mxu0 0
        %4147 = vmatpush2.bf16.msra.mxu0 %v3841
        %4148 = vmatprep.subr.bf16.mxu0 0
        %4149 = vmatpush2.bf16.msra.mxu0 %v3840
        %4150 = vmatprep.subr.bf16.mxu0 0
        %4151 = vmatpush2.bf16.msra.mxu0 %v3839
        %4152 = vmatprep.mubr.bf16.mxu0 %v3242
        %4153 = vmatmul.mubr.bf16.gmra.mxu0 %v3241
        %v4154 = vpop.f32.mrf.mxu0
        %v4155 = vadd.f32 %v3994, %v4154
        %v4156 = vpop.f32.mrf.mxu0
        %v4157 = vpop.f32.mrf.mxu0
        %v4158 = vadd.f32 %v3997, %v4157
        %v4159 = vpop.f32.mrf.mxu0
        %4160 = vmatprep.mubr.bf16.mxu0 %v3251
        %4161 = vmatmul.mubr.bf16.gmra.mxu0 %v3250
        %v4162 = vpop.f32.mrf.mxu0
        %v4163 = vadd.f32 %v4002, %v4162
        %v4164 = vpop.f32.mrf.mxu0
        %v4165 = vpop.f32.mrf.mxu0
        %v4166 = vadd.f32 %v4005, %v4165
        %v4167 = vpop.f32.mrf.mxu0
        %4168 = vmatprep.mubr.bf16.mxu0 %v3260
        %4169 = vmatmul.mubr.bf16.gmra.mxu0 %v3259
        %v4170 = vpop.f32.mrf.mxu0
        %v4171 = vadd.f32 %v4010, %v4170
        %v4172 = vpop.f32.mrf.mxu0
        %v4173 = vpop.f32.mrf.mxu0
        %v4174 = vadd.f32 %v4013, %v4173
        %v4175 = vpop.f32.mrf.mxu0
        %4176 = vmatprep.mubr.bf16.mxu0 %v3269
        %4177 = vmatmul.mubr.bf16.gmra.mxu0 %v3268
        %v4178 = vpop.f32.mrf.mxu0
        %v4179 = vadd.f32 %v4018, %v4178
        %v4180 = vpop.f32.mrf.mxu0
        %v4181 = vpop.f32.mrf.mxu0
        %v4182 = vadd.f32 %v4021, %v4181
        %v4183 = vpop.f32.mrf.mxu0
        %4184 = vmatprep.mubr.bf16.mxu0 %v3278
        %4185 = vmatmul.mubr.bf16.gmra.mxu0 %v3277
        %v4186 = vpop.f32.mrf.mxu0
        %v4187 = vadd.f32 %v4026, %v4186
        %v4188 = vpop.f32.mrf.mxu0
        %v4189 = vpop.f32.mrf.mxu0
        %v4190 = vadd.f32 %v4029, %v4189
        %v4191 = vpop.f32.mrf.mxu0
        %4192 = vmatprep.mubr.bf16.mxu0 %v3287
        %4193 = vmatmul.mubr.bf16.gmra.mxu0 %v3286
        %v4194 = vpop.f32.mrf.mxu0
        %v4195 = vadd.f32 %v4034, %v4194
        %v4196 = vpop.f32.mrf.mxu0
        %v4197 = vpop.f32.mrf.mxu0
        %v4198 = vadd.f32 %v4037, %v4197
        %v4199 = vpop.f32.mrf.mxu0
        %4200 = vmatprep.mubr.bf16.mxu0 %v3296
        %4201 = vmatmul.mubr.bf16.gmra.mxu0 %v3295
        %v4202 = vpop.f32.mrf.mxu0
        %v4203 = vadd.f32 %v4042, %v4202
        %v4204 = vpop.f32.mrf.mxu0
        %v4205 = vpop.f32.mrf.mxu0
        %v4206 = vadd.f32 %v4045, %v4205
        %v4207 = vpop.f32.mrf.mxu0
        %4208 = vmatprep.mubr.bf16.mxu0 %v3305
        %4209 = vmatmul.mubr.bf16.gmra.mxu0 %v3304
        %v4210 = vpop.f32.mrf.mxu0
        %v4211 = vadd.f32 %v4050, %v4210
        %v4212 = vpop.f32.mrf.mxu0
        %v4213 = vpop.f32.mrf.mxu0
        %v4214 = vadd.f32 %v4053, %v4213
        %v4215 = vpop.f32.mrf.mxu0
        %4216 = vmatprep.mubr.bf16.mxu0 %v3314
        %4217 = vmatmul.mubr.bf16.gmra.mxu0 %v3313
        %v4218 = vpop.f32.mrf.mxu0
        %v4219 = vadd.f32 %v4058, %v4218
        %v4220 = vpop.f32.mrf.mxu0
        %v4221 = vpop.f32.mrf.mxu0
        %v4222 = vadd.f32 %v4061, %v4221
        %v4223 = vpop.f32.mrf.mxu0
        %4224 = vmatprep.mubr.bf16.mxu0 %v3323
        %4225 = vmatmul.mubr.bf16.gmra.mxu0 %v3322
        %v4226 = vpop.f32.mrf.mxu0
        %v4227 = vadd.f32 %v4066, %v4226
        %v4228 = vpop.f32.mrf.mxu0
        %v4229 = vpop.f32.mrf.mxu0
        %v4230 = vadd.f32 %v4069, %v4229
        %v4231 = vpop.f32.mrf.mxu0
        %4232 = vmatprep.mubr.bf16.mxu0 %v3332
        %4233 = vmatmul.mubr.bf16.gmra.mxu0 %v3331
        %v4234 = vpop.f32.mrf.mxu0
        %v4235 = vadd.f32 %v4074, %v4234
        %v4236 = vpop.f32.mrf.mxu0
        %v4237 = vpop.f32.mrf.mxu0
        %v4238 = vadd.f32 %v4077, %v4237
        %v4239 = vpop.f32.mrf.mxu0
        %4240 = vmatprep.mubr.bf16.mxu0 %v3341
        %4241 = vmatmul.mubr.bf16.gmra.mxu0 %v3340
        %v4242 = vpop.f32.mrf.mxu0
        %v4243 = vadd.f32 %v4082, %v4242
        %v4244 = vpop.f32.mrf.mxu0
        %v4245 = vpop.f32.mrf.mxu0
        %v4246 = vadd.f32 %v4085, %v4245
        %v4247 = vpop.f32.mrf.mxu0
        %4248 = vmatprep.mubr.bf16.mxu0 %v3350
        %4249 = vmatmul.mubr.bf16.gmra.mxu0 %v3349
        %v4250 = vpop.f32.mrf.mxu0
        %v4251 = vadd.f32 %v4090, %v4250
        %v4252 = vpop.f32.mrf.mxu0
        %v4253 = vpop.f32.mrf.mxu0
        %v4254 = vadd.f32 %v4093, %v4253
        %v4255 = vpop.f32.mrf.mxu0
        %4256 = vmatprep.mubr.bf16.mxu0 %v3359
        %4257 = vmatmul.mubr.bf16.gmra.mxu0 %v3358
        %v4258 = vpop.f32.mrf.mxu0
        %v4259 = vadd.f32 %v4098, %v4258
        %v4260 = vpop.f32.mrf.mxu0
        %v4261 = vpop.f32.mrf.mxu0
        %v4262 = vadd.f32 %v4101, %v4261
        %v4263 = vpop.f32.mrf.mxu0
        %4264 = vmatprep.mubr.bf16.mxu0 %v3368
        %4265 = vmatmul.mubr.bf16.gmra.mxu0 %v3367
        %v4266 = vpop.f32.mrf.mxu0
        %v4267 = vadd.f32 %v4106, %v4266
        %v4268 = vpop.f32.mrf.mxu0
        %v4269 = vpop.f32.mrf.mxu0
        %v4270 = vadd.f32 %v4109, %v4269
        %v4271 = vpop.f32.mrf.mxu0
        %4272 = vmatprep.mubr.bf16.mxu0 %v3377
        %4273 = vmatmul.mubr.bf16.gmra.mxu0 %v3376
        %v4274 = vpop.f32.mrf.mxu0
        %v4275 = vadd.f32 %v4114, %v4274
        %v4276 = vpop.f32.mrf.mxu0
        %v4277 = vpop.f32.mrf.mxu0
        %v4278 = vadd.f32 %v4117, %v4277
        %v4279 = vpop.f32.mrf.mxu0
        %4280 = vdwg.mxu0
        %4281 = vmatprep.subr.bf16.mxu0 0
        %4282 = vmatpush1.bf16.msra.mxu0 %v3854
        %4283 = vmatprep.subr.bf16.mxu0 0
        %4284 = vmatpush1.bf16.msra.mxu0 %v3853
        %4285 = vmatprep.subr.bf16.mxu0 0
        %4286 = vmatpush1.bf16.msra.mxu0 %v3852
        %4287 = vmatprep.subr.bf16.mxu0 0
        %4288 = vmatpush1.bf16.msra.mxu0 %v3851
        %4289 = vmatprep.subr.bf16.mxu0 0
        %4290 = vmatpush1.bf16.msra.mxu0 %v3850
        %4291 = vmatprep.subr.bf16.mxu0 0
        %4292 = vmatpush1.bf16.msra.mxu0 %v3849
        %4293 = vmatprep.subr.bf16.mxu0 0
        %4294 = vmatpush1.bf16.msra.mxu0 %v3848
        %4295 = vmatprep.subr.bf16.mxu0 0
        %4296 = vmatpush1.bf16.msra.mxu0 %v3847
        %4297 = vmatprep.subr.bf16.mxu0 0
        %4298 = vmatpush2.bf16.msra.mxu0 %v3862
        %4299 = vmatprep.subr.bf16.mxu0 0
        %4300 = vmatpush2.bf16.msra.mxu0 %v3861
        %4301 = vmatprep.subr.bf16.mxu0 0
        %4302 = vmatpush2.bf16.msra.mxu0 %v3860
        %4303 = vmatprep.subr.bf16.mxu0 0
        %4304 = vmatpush2.bf16.msra.mxu0 %v3859
        %4305 = vmatprep.subr.bf16.mxu0 0
        %4306 = vmatpush2.bf16.msra.mxu0 %v3858
        %4307 = vmatprep.subr.bf16.mxu0 0
        %4308 = vmatpush2.bf16.msra.mxu0 %v3857
        %4309 = vmatprep.subr.bf16.mxu0 0
        %4310 = vmatpush2.bf16.msra.mxu0 %v3856
        %4311 = vmatprep.subr.bf16.mxu0 0
        %4312 = vmatpush2.bf16.msra.mxu0 %v3855
        %4313 = vmatprep.mubr.bf16.mxu0 %v3244
        %4314 = vmatmul.mubr.bf16.gmra.mxu0 %v3243
        %v4315 = vpop.f32.mrf.mxu0
        %v4316 = vadd.f32 %v4155, %v4315
        %v4317 = vpop.f32.mrf.mxu0
        %v4318 = vpop.f32.mrf.mxu0
        %v4319 = vadd.f32 %v4158, %v4318
        %v4320 = vpop.f32.mrf.mxu0
        %4321 = vmatprep.mubr.bf16.mxu0 %v3253
        %4322 = vmatmul.mubr.bf16.gmra.mxu0 %v3252
        %v4323 = vpop.f32.mrf.mxu0
        %v4324 = vadd.f32 %v4163, %v4323
        %v4325 = vpop.f32.mrf.mxu0
        %v4326 = vpop.f32.mrf.mxu0
        %v4327 = vadd.f32 %v4166, %v4326
        %v4328 = vpop.f32.mrf.mxu0
        %4329 = vmatprep.mubr.bf16.mxu0 %v3262
        %4330 = vmatmul.mubr.bf16.gmra.mxu0 %v3261
        %v4331 = vpop.f32.mrf.mxu0
        %v4332 = vadd.f32 %v4171, %v4331
        %v4333 = vpop.f32.mrf.mxu0
        %v4334 = vpop.f32.mrf.mxu0
        %v4335 = vadd.f32 %v4174, %v4334
        %v4336 = vpop.f32.mrf.mxu0
        %4337 = vmatprep.mubr.bf16.mxu0 %v3271
        %4338 = vmatmul.mubr.bf16.gmra.mxu0 %v3270
        %v4339 = vpop.f32.mrf.mxu0
        %v4340 = vadd.f32 %v4179, %v4339
        %v4341 = vpop.f32.mrf.mxu0
        %v4342 = vpop.f32.mrf.mxu0
        %v4343 = vadd.f32 %v4182, %v4342
        %v4344 = vpop.f32.mrf.mxu0
        %4345 = vmatprep.mubr.bf16.mxu0 %v3280
        %4346 = vmatmul.mubr.bf16.gmra.mxu0 %v3279
        %v4347 = vpop.f32.mrf.mxu0
        %v4348 = vadd.f32 %v4187, %v4347
        %v4349 = vpop.f32.mrf.mxu0
        %v4350 = vpop.f32.mrf.mxu0
        %v4351 = vadd.f32 %v4190, %v4350
        %v4352 = vpop.f32.mrf.mxu0
        %4353 = vmatprep.mubr.bf16.mxu0 %v3289
        %4354 = vmatmul.mubr.bf16.gmra.mxu0 %v3288
        %v4355 = vpop.f32.mrf.mxu0
        %v4356 = vadd.f32 %v4195, %v4355
        %v4357 = vpop.f32.mrf.mxu0
        %v4358 = vpop.f32.mrf.mxu0
        %v4359 = vadd.f32 %v4198, %v4358
        %v4360 = vpop.f32.mrf.mxu0
        %4361 = vmatprep.mubr.bf16.mxu0 %v3298
        %4362 = vmatmul.mubr.bf16.gmra.mxu0 %v3297
        %v4363 = vpop.f32.mrf.mxu0
        %v4364 = vadd.f32 %v4203, %v4363
        %v4365 = vpop.f32.mrf.mxu0
        %v4366 = vpop.f32.mrf.mxu0
        %v4367 = vadd.f32 %v4206, %v4366
        %v4368 = vpop.f32.mrf.mxu0
        %4369 = vmatprep.mubr.bf16.mxu0 %v3307
        %4370 = vmatmul.mubr.bf16.gmra.mxu0 %v3306
        %v4371 = vpop.f32.mrf.mxu0
        %v4372 = vadd.f32 %v4211, %v4371
        %v4373 = vpop.f32.mrf.mxu0
        %v4374 = vpop.f32.mrf.mxu0
        %v4375 = vadd.f32 %v4214, %v4374
        %v4376 = vpop.f32.mrf.mxu0
        %4377 = vmatprep.mubr.bf16.mxu0 %v3316
        %4378 = vmatmul.mubr.bf16.gmra.mxu0 %v3315
        %v4379 = vpop.f32.mrf.mxu0
        %v4380 = vadd.f32 %v4219, %v4379
        %v4381 = vpop.f32.mrf.mxu0
        %v4382 = vpop.f32.mrf.mxu0
        %v4383 = vadd.f32 %v4222, %v4382
        %v4384 = vpop.f32.mrf.mxu0
        %4385 = vmatprep.mubr.bf16.mxu0 %v3325
        %4386 = vmatmul.mubr.bf16.gmra.mxu0 %v3324
        %v4387 = vpop.f32.mrf.mxu0
        %v4388 = vadd.f32 %v4227, %v4387
        %v4389 = vpop.f32.mrf.mxu0
        %v4390 = vpop.f32.mrf.mxu0
        %v4391 = vadd.f32 %v4230, %v4390
        %v4392 = vpop.f32.mrf.mxu0
        %4393 = vmatprep.mubr.bf16.mxu0 %v3334
        %4394 = vmatmul.mubr.bf16.gmra.mxu0 %v3333
        %v4395 = vpop.f32.mrf.mxu0
        %v4396 = vadd.f32 %v4235, %v4395
        %v4397 = vpop.f32.mrf.mxu0
        %v4398 = vpop.f32.mrf.mxu0
        %v4399 = vadd.f32 %v4238, %v4398
        %v4400 = vpop.f32.mrf.mxu0
        %4401 = vmatprep.mubr.bf16.mxu0 %v3343
        %4402 = vmatmul.mubr.bf16.gmra.mxu0 %v3342
        %v4403 = vpop.f32.mrf.mxu0
        %v4404 = vadd.f32 %v4243, %v4403
        %v4405 = vpop.f32.mrf.mxu0
        %v4406 = vpop.f32.mrf.mxu0
        %v4407 = vadd.f32 %v4246, %v4406
        %v4408 = vpop.f32.mrf.mxu0
        %4409 = vmatprep.mubr.bf16.mxu0 %v3352
        %4410 = vmatmul.mubr.bf16.gmra.mxu0 %v3351
        %v4411 = vpop.f32.mrf.mxu0
        %v4412 = vadd.f32 %v4251, %v4411
        %v4413 = vpop.f32.mrf.mxu0
        %v4414 = vpop.f32.mrf.mxu0
        %v4415 = vadd.f32 %v4254, %v4414
        %v4416 = vpop.f32.mrf.mxu0
        %4417 = vmatprep.mubr.bf16.mxu0 %v3361
        %4418 = vmatmul.mubr.bf16.gmra.mxu0 %v3360
        %v4419 = vpop.f32.mrf.mxu0
        %v4420 = vadd.f32 %v4259, %v4419
        %v4421 = vpop.f32.mrf.mxu0
        %v4422 = vpop.f32.mrf.mxu0
        %v4423 = vadd.f32 %v4262, %v4422
        %v4424 = vpop.f32.mrf.mxu0
        %4425 = vmatprep.mubr.bf16.mxu0 %v3370
        %4426 = vmatmul.mubr.bf16.gmra.mxu0 %v3369
        %v4427 = vpop.f32.mrf.mxu0
        %v4428 = vadd.f32 %v4267, %v4427
        %v4429 = vpop.f32.mrf.mxu0
        %v4430 = vpop.f32.mrf.mxu0
        %v4431 = vadd.f32 %v4270, %v4430
        %v4432 = vpop.f32.mrf.mxu0
        %4433 = vmatprep.mubr.bf16.mxu0 %v3379
        %4434 = vmatmul.mubr.bf16.gmra.mxu0 %v3378
        %v4435 = vpop.f32.mrf.mxu0
        %v4436 = vadd.f32 %v4275, %v4435
        %v4437 = vpop.f32.mrf.mxu0
        %v4438 = vpop.f32.mrf.mxu0
        %v4439 = vadd.f32 %v4278, %v4438
        %v4440 = vpop.f32.mrf.mxu0
        %4441 = vdwg.mxu0
        %4442 = vmatprep.subr.bf16.mxu0 0
        %4443 = vmatpush1.bf16.msra.mxu0 %v3870
        %4444 = vmatprep.subr.bf16.mxu0 0
        %4445 = vmatpush1.bf16.msra.mxu0 %v3869
        %4446 = vmatprep.subr.bf16.mxu0 0
        %4447 = vmatpush1.bf16.msra.mxu0 %v3868
        %4448 = vmatprep.subr.bf16.mxu0 0
        %4449 = vmatpush1.bf16.msra.mxu0 %v3867
        %4450 = vmatprep.subr.bf16.mxu0 0
        %4451 = vmatpush1.bf16.msra.mxu0 %v3866
        %4452 = vmatprep.subr.bf16.mxu0 0
        %4453 = vmatpush1.bf16.msra.mxu0 %v3865
        %4454 = vmatprep.subr.bf16.mxu0 0
        %4455 = vmatpush1.bf16.msra.mxu0 %v3864
        %4456 = vmatprep.subr.bf16.mxu0 0
        %4457 = vmatpush1.bf16.msra.mxu0 %v3863
        %4458 = vmatprep.subr.bf16.mxu0 0
        %4459 = vmatpush2.bf16.msra.mxu0 %v3878
        %4460 = vmatprep.subr.bf16.mxu0 0
        %4461 = vmatpush2.bf16.msra.mxu0 %v3877
        %4462 = vmatprep.subr.bf16.mxu0 0
        %4463 = vmatpush2.bf16.msra.mxu0 %v3876
        %4464 = vmatprep.subr.bf16.mxu0 0
        %4465 = vmatpush2.bf16.msra.mxu0 %v3875
        %4466 = vmatprep.subr.bf16.mxu0 0
        %4467 = vmatpush2.bf16.msra.mxu0 %v3874
        %4468 = vmatprep.subr.bf16.mxu0 0
        %4469 = vmatpush2.bf16.msra.mxu0 %v3873
        %4470 = vmatprep.subr.bf16.mxu0 0
        %4471 = vmatpush2.bf16.msra.mxu0 %v3872
        %4472 = vmatprep.subr.bf16.mxu0 0
        %4473 = vmatpush2.bf16.msra.mxu0 %v3871
        %4474 = vmatprep.mubr.bf16.mxu0 %v3246
        %4475 = vmatmul.mubr.bf16.gmra.mxu0 %v3245
        %v4476 = vpop.f32.mrf.mxu0
        %v4477 = vadd.f32 %v4316, %v4476
        %v4478 = vpop.f32.mrf.mxu0
        %v4479 = vpop.f32.mrf.mxu0
        %v4480 = vadd.f32 %v4319, %v4479
        %v4481 = vpop.f32.mrf.mxu0
        %4482 = vmatprep.mubr.bf16.mxu0 %v3255
        %4483 = vmatmul.mubr.bf16.gmra.mxu0 %v3254
        %v4484 = vpop.f32.mrf.mxu0
        %v4485 = vadd.f32 %v4324, %v4484
        %v4486 = vpop.f32.mrf.mxu0
        %v4487 = vpop.f32.mrf.mxu0
        %v4488 = vadd.f32 %v4327, %v4487
        %v4489 = vpop.f32.mrf.mxu0
        %4490 = vmatprep.mubr.bf16.mxu0 %v3264
        %4491 = vmatmul.mubr.bf16.gmra.mxu0 %v3263
        %v4492 = vpop.f32.mrf.mxu0
        %v4493 = vadd.f32 %v4332, %v4492
        %v4494 = vpop.f32.mrf.mxu0
        %v4495 = vpop.f32.mrf.mxu0
        %v4496 = vadd.f32 %v4335, %v4495
        %v4497 = vpop.f32.mrf.mxu0
        %4498 = vmatprep.mubr.bf16.mxu0 %v3273
        %4499 = vmatmul.mubr.bf16.gmra.mxu0 %v3272
        %v4500 = vpop.f32.mrf.mxu0
        %v4501 = vadd.f32 %v4340, %v4500
        %v4502 = vpop.f32.mrf.mxu0
        %v4503 = vpop.f32.mrf.mxu0
        %v4504 = vadd.f32 %v4343, %v4503
        %v4505 = vpop.f32.mrf.mxu0
        %4506 = vmatprep.mubr.bf16.mxu0 %v3282
        %4507 = vmatmul.mubr.bf16.gmra.mxu0 %v3281
        %v4508 = vpop.f32.mrf.mxu0
        %v4509 = vadd.f32 %v4348, %v4508
        %v4510 = vpop.f32.mrf.mxu0
        %v4511 = vpop.f32.mrf.mxu0
        %v4512 = vadd.f32 %v4351, %v4511
        %v4513 = vpop.f32.mrf.mxu0
        %4514 = vmatprep.mubr.bf16.mxu0 %v3291
        %4515 = vmatmul.mubr.bf16.gmra.mxu0 %v3290
        %v4516 = vpop.f32.mrf.mxu0
        %v4517 = vadd.f32 %v4356, %v4516
        %v4518 = vpop.f32.mrf.mxu0
        %v4519 = vpop.f32.mrf.mxu0
        %v4520 = vadd.f32 %v4359, %v4519
        %v4521 = vpop.f32.mrf.mxu0
        %4522 = vmatprep.mubr.bf16.mxu0 %v3300
        %4523 = vmatmul.mubr.bf16.gmra.mxu0 %v3299
        %v4524 = vpop.f32.mrf.mxu0
        %v4525 = vadd.f32 %v4364, %v4524
        %v4526 = vpop.f32.mrf.mxu0
        %v4527 = vpop.f32.mrf.mxu0
        %v4528 = vadd.f32 %v4367, %v4527
        %v4529 = vpop.f32.mrf.mxu0
        %4530 = vmatprep.mubr.bf16.mxu0 %v3309
        %4531 = vmatmul.mubr.bf16.gmra.mxu0 %v3308
        %v4532 = vpop.f32.mrf.mxu0
        %v4533 = vadd.f32 %v4372, %v4532
        %v4534 = vpop.f32.mrf.mxu0
        %v4535 = vpop.f32.mrf.mxu0
        %v4536 = vadd.f32 %v4375, %v4535
        %v4537 = vpop.f32.mrf.mxu0
        %4538 = vmatprep.mubr.bf16.mxu0 %v3318
        %4539 = vmatmul.mubr.bf16.gmra.mxu0 %v3317
        %v4540 = vpop.f32.mrf.mxu0
        %v4541 = vadd.f32 %v4380, %v4540
        %v4542 = vpop.f32.mrf.mxu0
        %v4543 = vpop.f32.mrf.mxu0
        %v4544 = vadd.f32 %v4383, %v4543
        %v4545 = vpop.f32.mrf.mxu0
        %4546 = vmatprep.mubr.bf16.mxu0 %v3327
        %4547 = vmatmul.mubr.bf16.gmra.mxu0 %v3326
        %v4548 = vpop.f32.mrf.mxu0
        %v4549 = vadd.f32 %v4388, %v4548
        %v4550 = vpop.f32.mrf.mxu0
        %v4551 = vpop.f32.mrf.mxu0
        %v4552 = vadd.f32 %v4391, %v4551
        %v4553 = vpop.f32.mrf.mxu0
        %4554 = vmatprep.mubr.bf16.mxu0 %v3336
        %4555 = vmatmul.mubr.bf16.gmra.mxu0 %v3335
        %v4556 = vpop.f32.mrf.mxu0
        %v4557 = vadd.f32 %v4396, %v4556
        %v4558 = vpop.f32.mrf.mxu0
        %v4559 = vpop.f32.mrf.mxu0
        %v4560 = vadd.f32 %v4399, %v4559
        %v4561 = vpop.f32.mrf.mxu0
        %4562 = vmatprep.mubr.bf16.mxu0 %v3345
        %4563 = vmatmul.mubr.bf16.gmra.mxu0 %v3344
        %v4564 = vpop.f32.mrf.mxu0
        %v4565 = vadd.f32 %v4404, %v4564
        %v4566 = vpop.f32.mrf.mxu0
        %v4567 = vpop.f32.mrf.mxu0
        %v4568 = vadd.f32 %v4407, %v4567
        %v4569 = vpop.f32.mrf.mxu0
        %4570 = vmatprep.mubr.bf16.mxu0 %v3354
        %4571 = vmatmul.mubr.bf16.gmra.mxu0 %v3353
        %v4572 = vpop.f32.mrf.mxu0
        %v4573 = vadd.f32 %v4412, %v4572
        %v4574 = vpop.f32.mrf.mxu0
        %v4575 = vpop.f32.mrf.mxu0
        %v4576 = vadd.f32 %v4415, %v4575
        %v4577 = vpop.f32.mrf.mxu0
        %4578 = vmatprep.mubr.bf16.mxu0 %v3363
        %4579 = vmatmul.mubr.bf16.gmra.mxu0 %v3362
        %v4580 = vpop.f32.mrf.mxu0
        %v4581 = vadd.f32 %v4420, %v4580
        %v4582 = vpop.f32.mrf.mxu0
        %v4583 = vpop.f32.mrf.mxu0
        %v4584 = vadd.f32 %v4423, %v4583
        %v4585 = vpop.f32.mrf.mxu0
        %4586 = vmatprep.mubr.bf16.mxu0 %v3372
        %4587 = vmatmul.mubr.bf16.gmra.mxu0 %v3371
        %v4588 = vpop.f32.mrf.mxu0
        %v4589 = vadd.f32 %v4428, %v4588
        %v4590 = vpop.f32.mrf.mxu0
        %v4591 = vpop.f32.mrf.mxu0
        %v4592 = vadd.f32 %v4431, %v4591
        %v4593 = vpop.f32.mrf.mxu0
        %4594 = vmatprep.mubr.bf16.mxu0 %v3381
        %4595 = vmatmul.mubr.bf16.gmra.mxu0 %v3380
        %v4596 = vpop.f32.mrf.mxu0
        %v4597 = vadd.f32 %v4436, %v4596
        %v4598 = vpop.f32.mrf.mxu0
        %v4599 = vpop.f32.mrf.mxu0
        %v4600 = vadd.f32 %v4439, %v4599
        %v4601 = vpop.f32.mrf.mxu0
        %4602 = vdwg.mxu0
        %4603 = vmatprep.subr.bf16.mxu0 0
        %4604 = vmatpush1.bf16.msra.mxu0 %v3886
        %4605 = vmatprep.subr.bf16.mxu0 0
        %4606 = vmatpush1.bf16.msra.mxu0 %v3885
        %4607 = vmatprep.subr.bf16.mxu0 0
        %4608 = vmatpush1.bf16.msra.mxu0 %v3884
        %4609 = vmatprep.subr.bf16.mxu0 0
        %4610 = vmatpush1.bf16.msra.mxu0 %v3883
        %4611 = vmatprep.subr.bf16.mxu0 0
        %4612 = vmatpush1.bf16.msra.mxu0 %v3882
        %4613 = vmatprep.subr.bf16.mxu0 0
        %4614 = vmatpush1.bf16.msra.mxu0 %v3881
        %4615 = vmatprep.subr.bf16.mxu0 0
        %4616 = vmatpush1.bf16.msra.mxu0 %v3880
        %4617 = vmatprep.subr.bf16.mxu0 0
        %4618 = vmatpush1.bf16.msra.mxu0 %v3879
        %4619 = vmatprep.subr.bf16.mxu0 0
        %4620 = vmatpush2.bf16.msra.mxu0 0
        %4621 = vmatprep.subr.bf16.mxu0 0
        %4622 = vmatpush2.bf16.msra.mxu0 0
        %4623 = vmatprep.subr.bf16.mxu0 0
        %4624 = vmatpush2.bf16.msra.mxu0 0
        %4625 = vmatprep.subr.bf16.mxu0 0
        %4626 = vmatpush2.bf16.msra.mxu0 0
        %4627 = vmatprep.subr.bf16.mxu0 0
        %4628 = vmatpush2.bf16.msra.mxu0 0
        %4629 = vmatprep.subr.bf16.mxu0 0
        %4630 = vmatpush2.bf16.msra.mxu0 0
        %4631 = vmatprep.subr.bf16.mxu0 0
        %4632 = vmatpush2.bf16.msra.mxu0 0
        %4633 = vmatprep.subr.bf16.mxu0 0
        %4634 = vmatpush2.bf16.msra.mxu0 0
        %4635 = vmatprep.mubr.bf16.mxu0 0
        %4636 = vmatmul.mubr.bf16.gmra.mxu0 %v3247
        %v4637 = vpop.f32.mrf.mxu0
        %v4638 = vadd.f32 %v4477, %v4637
        %v4639 = vpop.f32.mrf.mxu0
        %v4640 = vpop.f32.mrf.mxu0
        %v4641 = vadd.f32 %v4480, %v4640
        %v4642 = vpop.f32.mrf.mxu0
        %4643 = vmatprep.mubr.bf16.mxu0 0
        %4644 = vmatmul.mubr.bf16.gmra.mxu0 %v3256
        %v4645 = vpop.f32.mrf.mxu0
        %v4646 = vadd.f32 %v4485, %v4645
        %v4647 = vpop.f32.mrf.mxu0
        %v4648 = vpop.f32.mrf.mxu0
        %v4649 = vadd.f32 %v4488, %v4648
        %v4650 = vpop.f32.mrf.mxu0
        %4651 = vmatprep.mubr.bf16.mxu0 0
        %4652 = vmatmul.mubr.bf16.gmra.mxu0 %v3265
        %v4653 = vpop.f32.mrf.mxu0
        %v4654 = vadd.f32 %v4493, %v4653
        %v4655 = vpop.f32.mrf.mxu0
        %v4656 = vpop.f32.mrf.mxu0
        %v4657 = vadd.f32 %v4496, %v4656
        %v4658 = vpop.f32.mrf.mxu0
        %4659 = vmatprep.mubr.bf16.mxu0 0
        %4660 = vmatmul.mubr.bf16.gmra.mxu0 %v3274
        %v4661 = vpop.f32.mrf.mxu0
        %v4662 = vadd.f32 %v4501, %v4661
        %v4663 = vpop.f32.mrf.mxu0
        %v4664 = vpop.f32.mrf.mxu0
        %v4665 = vadd.f32 %v4504, %v4664
        %v4666 = vpop.f32.mrf.mxu0
        %4667 = vmatprep.mubr.bf16.mxu0 0
        %4668 = vmatmul.mubr.bf16.gmra.mxu0 %v3283
        %v4669 = vpop.f32.mrf.mxu0
        %v4670 = vadd.f32 %v4509, %v4669
        %v4671 = vpop.f32.mrf.mxu0
        %v4672 = vpop.f32.mrf.mxu0
        %v4673 = vadd.f32 %v4512, %v4672
        %v4674 = vpop.f32.mrf.mxu0
        %4675 = vmatprep.mubr.bf16.mxu0 0
        %4676 = vmatmul.mubr.bf16.gmra.mxu0 %v3292
        %v4677 = vpop.f32.mrf.mxu0
        %v4678 = vadd.f32 %v4517, %v4677
        %v4679 = vpop.f32.mrf.mxu0
        %v4680 = vpop.f32.mrf.mxu0
        %v4681 = vadd.f32 %v4520, %v4680
        %v4682 = vpop.f32.mrf.mxu0
        %4683 = vmatprep.mubr.bf16.mxu0 0
        %4684 = vmatmul.mubr.bf16.gmra.mxu0 %v3301
        %v4685 = vpop.f32.mrf.mxu0
        %v4686 = vadd.f32 %v4525, %v4685
        %v4687 = vpop.f32.mrf.mxu0
        %v4688 = vpop.f32.mrf.mxu0
        %v4689 = vadd.f32 %v4528, %v4688
        %v4690 = vpop.f32.mrf.mxu0
        %4691 = vmatprep.mubr.bf16.mxu0 0
        %4692 = vmatmul.mubr.bf16.gmra.mxu0 %v3310
        %v4693 = vpop.f32.mrf.mxu0
        %v4694 = vadd.f32 %v4533, %v4693
        %v4695 = vpop.f32.mrf.mxu0
        %v4696 = vpop.f32.mrf.mxu0
        %v4697 = vadd.f32 %v4536, %v4696
        %v4698 = vpop.f32.mrf.mxu0
        %4699 = vmatprep.mubr.bf16.mxu0 0
        %4700 = vmatmul.mubr.bf16.gmra.mxu0 %v3319
        %v4701 = vpop.f32.mrf.mxu0
        %v4702 = vadd.f32 %v4541, %v4701
        %v4703 = vpop.f32.mrf.mxu0
        %v4704 = vpop.f32.mrf.mxu0
        %v4705 = vadd.f32 %v4544, %v4704
        %v4706 = vpop.f32.mrf.mxu0
        %4707 = vmatprep.mubr.bf16.mxu0 0
        %4708 = vmatmul.mubr.bf16.gmra.mxu0 %v3328
        %v4709 = vpop.f32.mrf.mxu0
        %v4710 = vadd.f32 %v4549, %v4709
        %v4711 = vpop.f32.mrf.mxu0
        %v4712 = vpop.f32.mrf.mxu0
        %v4713 = vadd.f32 %v4552, %v4712
        %v4714 = vpop.f32.mrf.mxu0
        %4715 = vmatprep.mubr.bf16.mxu0 0
        %4716 = vmatmul.mubr.bf16.gmra.mxu0 %v3337
        %v4717 = vpop.f32.mrf.mxu0
        %v4718 = vadd.f32 %v4557, %v4717
        %v4719 = vpop.f32.mrf.mxu0
        %v4720 = vpop.f32.mrf.mxu0
        %v4721 = vadd.f32 %v4560, %v4720
        %v4722 = vpop.f32.mrf.mxu0
        %4723 = vmatprep.mubr.bf16.mxu0 0
        %4724 = vmatmul.mubr.bf16.gmra.mxu0 %v3346
        %v4725 = vpop.f32.mrf.mxu0
        %v4726 = vadd.f32 %v4565, %v4725
        %v4727 = vpop.f32.mrf.mxu0
        %v4728 = vpop.f32.mrf.mxu0
        %v4729 = vadd.f32 %v4568, %v4728
        %v4730 = vpop.f32.mrf.mxu0
        %4731 = vmatprep.mubr.bf16.mxu0 0
        %4732 = vmatmul.mubr.bf16.gmra.mxu0 %v3355
        %v4733 = vpop.f32.mrf.mxu0
        %v4734 = vadd.f32 %v4573, %v4733
        %v4735 = vpop.f32.mrf.mxu0
        %v4736 = vpop.f32.mrf.mxu0
        %v4737 = vadd.f32 %v4576, %v4736
        %v4738 = vpop.f32.mrf.mxu0
        %4739 = vmatprep.mubr.bf16.mxu0 0
        %4740 = vmatmul.mubr.bf16.gmra.mxu0 %v3364
        %v4741 = vpop.f32.mrf.mxu0
        %v4742 = vadd.f32 %v4581, %v4741
        %v4743 = vpop.f32.mrf.mxu0
        %v4744 = vpop.f32.mrf.mxu0
        %v4745 = vadd.f32 %v4584, %v4744
        %v4746 = vpop.f32.mrf.mxu0
        %4747 = vmatprep.mubr.bf16.mxu0 0
        %4748 = vmatmul.mubr.bf16.gmra.mxu0 %v3373
        %v4749 = vpop.f32.mrf.mxu0
        %v4750 = vadd.f32 %v4589, %v4749
        %v4751 = vpop.f32.mrf.mxu0
        %v4752 = vpop.f32.mrf.mxu0
        %v4753 = vadd.f32 %v4592, %v4752
        %v4754 = vpop.f32.mrf.mxu0
        %4755 = vmatprep.mubr.bf16.mxu0 0
        %4756 = vmatmul.mubr.bf16.gmra.mxu0 %v3382
        %v4757 = vpop.f32.mrf.mxu0
        %v4758 = vadd.f32 %v4597, %v4757
        %v4759 = vpop.f32.mrf.mxu0
        %v4760 = vpop.f32.mrf.mxu0
        %v4761 = vadd.f32 %v4600, %v4760
        %v4762 = vpop.f32.mrf.mxu0
        %4763 = vdwg.mxu0
        %v4764 = vld [vmem:[%s5] sm:$0x1]
        %v4766 = vlaneseq
        %v4767 = vshrl.u32 %v4766, 7
        %v4768 = vsub.s32 0, %v4767
        %v4769 = vrot.slane %v4764, %v4768
        %v4771 = vmul.f32 %v4638, %v4769
        %v4772 = vmul.f32 %v4641, %v4769
        %v4773 = vmul.f32 %v4646, %v4769
        %v4774 = vmul.f32 %v4649, %v4769
        %v4775 = vmul.f32 %v4654, %v4769
        %v4776 = vmul.f32 %v4657, %v4769
        %v4777 = vmul.f32 %v4662, %v4769
        %v4778 = vmul.f32 %v4665, %v4769
        %v4779 = vmul.f32 %v4670, %v4769
        %v4780 = vmul.f32 %v4673, %v4769
        %v4781 = vmul.f32 %v4678, %v4769
        %v4782 = vmul.f32 %v4681, %v4769
        %v4783 = vmul.f32 %v4686, %v4769
        %v4784 = vmul.f32 %v4689, %v4769
        %v4785 = vmul.f32 %v4694, %v4769
        %v4786 = vmul.f32 %v4697, %v4769
        %v4787 = vmul.f32 %v4702, %v4769
        %v4788 = vmul.f32 %v4705, %v4769
        %v4789 = vmul.f32 %v4710, %v4769
        %v4790 = vmul.f32 %v4713, %v4769
        %v4791 = vmul.f32 %v4718, %v4769
        %v4792 = vmul.f32 %v4721, %v4769
        %v4793 = vmul.f32 %v4726, %v4769
        %v4794 = vmul.f32 %v4729, %v4769
        %v4795 = vmul.f32 %v4734, %v4769
        %v4796 = vmul.f32 %v4737, %v4769
        %v4797 = vmul.f32 %v4742, %v4769
        %v4798 = vmul.f32 %v4745, %v4769
        %v4799 = vmul.f32 %v4750, %v4769
        %v4800 = vmul.f32 %v4753, %v4769
        %v4801 = vmul.f32 %v4758, %v4769
        %v4802 = vmul.f32 %v4761, %v4769
        %v4803 = vld [vmem:[%s6] sm:$0x1]
        %v4805 = vlaneseq
        %v4806 = vshrl.u32 %v4805, 7
        %v4807 = vsub.s32 0, %v4806
        %v4808 = vrot.slane %v4803, %v4807
        %v4810 = vadd.f32 %v4771, %v4808
        %v4811 = vadd.f32 %v4772, %v4808
        %v4812 = vadd.f32 %v4773, %v4808
        %v4813 = vadd.f32 %v4774, %v4808
        %v4814 = vadd.f32 %v4775, %v4808
        %v4815 = vadd.f32 %v4776, %v4808
        %v4816 = vadd.f32 %v4777, %v4808
        %v4817 = vadd.f32 %v4778, %v4808
        %v4818 = vadd.f32 %v4779, %v4808
        %v4819 = vadd.f32 %v4780, %v4808
        %v4820 = vadd.f32 %v4781, %v4808
        %v4821 = vadd.f32 %v4782, %v4808
        %v4822 = vadd.f32 %v4783, %v4808
        %v4823 = vadd.f32 %v4784, %v4808
        %v4824 = vadd.f32 %v4785, %v4808
        %v4825 = vadd.f32 %v4786, %v4808
        %v4826 = vadd.f32 %v4787, %v4808
        %v4827 = vadd.f32 %v4788, %v4808
        %v4828 = vadd.f32 %v4789, %v4808
        %v4829 = vadd.f32 %v4790, %v4808
        %v4830 = vadd.f32 %v4791, %v4808
        %v4831 = vadd.f32 %v4792, %v4808
        %v4832 = vadd.f32 %v4793, %v4808
        %v4833 = vadd.f32 %v4794, %v4808
        %v4834 = vadd.f32 %v4795, %v4808
        %v4835 = vadd.f32 %v4796, %v4808
        %v4836 = vadd.f32 %v4797, %v4808
        %v4837 = vadd.f32 %v4798, %v4808
        %v4838 = vadd.f32 %v4799, %v4808
        %v4839 = vadd.f32 %v4800, %v4808
        %v4840 = vadd.f32 %v4801, %v4808
        %v4841 = vadd.f32 %v4802, %v4808
        %v4842 = vmax.f32 %v4810, 0.0
        %v4843 = vmax.f32 %v4811, 0.0
        %v4844 = vmax.f32 %v4812, 0.0
        %v4845 = vmax.f32 %v4813, 0.0
        %v4846 = vmax.f32 %v4814, 0.0
        %v4847 = vmax.f32 %v4815, 0.0
        %v4848 = vmax.f32 %v4816, 0.0
        %v4849 = vmax.f32 %v4817, 0.0
        %v4850 = vmax.f32 %v4818, 0.0
        %v4851 = vmax.f32 %v4819, 0.0
        %v4852 = vmax.f32 %v4820, 0.0
        %v4853 = vmax.f32 %v4821, 0.0
        %v4854 = vmax.f32 %v4822, 0.0
        %v4855 = vmax.f32 %v4823, 0.0
        %v4856 = vmax.f32 %v4824, 0.0
        %v4857 = vmax.f32 %v4825, 0.0
        %v4858 = vmax.f32 %v4826, 0.0
        %v4859 = vmax.f32 %v4827, 0.0
        %v4860 = vmax.f32 %v4828, 0.0
        %v4861 = vmax.f32 %v4829, 0.0
        %v4862 = vmax.f32 %v4830, 0.0
        %v4863 = vmax.f32 %v4831, 0.0
        %v4864 = vmax.f32 %v4832, 0.0
        %v4865 = vmax.f32 %v4833, 0.0
        %v4866 = vmax.f32 %v4834, 0.0
        %v4867 = vmax.f32 %v4835, 0.0
        %v4868 = vmax.f32 %v4836, 0.0
        %v4869 = vmax.f32 %v4837, 0.0
        %v4870 = vmax.f32 %v4838, 0.0
        %v4871 = vmax.f32 %v4839, 0.0
        %v4872 = vmax.f32 %v4840, 0.0
        %v4873 = vmax.f32 %v4841, 0.0
        %v4874 = vpack.c.bf16 %v4843, %v4842
        %v4875 = vpack.c.bf16 %v4845, %v4844
        %v4876 = vpack.c.bf16 %v4847, %v4846
        %v4877 = vpack.c.bf16 %v4849, %v4848
        %v4878 = vpack.c.bf16 %v4851, %v4850
        %v4879 = vpack.c.bf16 %v4853, %v4852
        %v4880 = vpack.c.bf16 %v4855, %v4854
        %v4881 = vpack.c.bf16 %v4857, %v4856
        %v4882 = vpack.c.bf16 %v4859, %v4858
        %v4883 = vpack.c.bf16 %v4861, %v4860
        %v4884 = vpack.c.bf16 %v4863, %v4862
        %v4885 = vpack.c.bf16 %v4865, %v4864
        %v4886 = vpack.c.bf16 %v4867, %v4866
        %v4887 = vpack.c.bf16 %v4869, %v4868
        %v4888 = vpack.c.bf16 %v4871, %v4870
        %v4889 = vpack.c.bf16 %v4873, %v4872
        %v4906 = vunpack.c.l.b16 %v4874
        %v4907 = vunpack.c.h.b16 %v4874
        %v4908 = vunpack.c.l.b16 %v4875
        %v4909 = vunpack.c.h.b16 %v4875
        %v4910 = vunpack.c.l.b16 %v4876
        %v4911 = vunpack.c.h.b16 %v4876
        %v4912 = vunpack.c.l.b16 %v4877
        %v4913 = vunpack.c.h.b16 %v4877
        %v4914 = vunpack.c.l.b16 %v4878
        %v4915 = vunpack.c.h.b16 %v4878
        %v4916 = vunpack.c.l.b16 %v4879
        %v4917 = vunpack.c.h.b16 %v4879
        %v4918 = vunpack.c.l.b16 %v4880
        %v4919 = vunpack.c.h.b16 %v4880
        %v4920 = vunpack.c.l.b16 %v4881
        %v4921 = vunpack.c.h.b16 %v4881
        %v4922 = vunpack.c.l.b16 %v4882
        %v4923 = vunpack.c.h.b16 %v4882
        %v4924 = vunpack.c.l.b16 %v4883
        %v4925 = vunpack.c.h.b16 %v4883
        %v4926 = vunpack.c.l.b16 %v4884
        %v4927 = vunpack.c.h.b16 %v4884
        %v4928 = vunpack.c.l.b16 %v4885
        %v4929 = vunpack.c.h.b16 %v4885
        %v4930 = vunpack.c.l.b16 %v4886
        %v4931 = vunpack.c.h.b16 %v4886
        %v4932 = vunpack.c.l.b16 %v4887
        %v4933 = vunpack.c.h.b16 %v4887
        %v4934 = vunpack.c.l.b16 %v4888
        %v4935 = vunpack.c.h.b16 %v4888
        %v4936 = vunpack.c.l.b16 %v4889
        %v4937 = vunpack.c.h.b16 %v4889
        %v4938 = vpack.c.b16 %v4906, %v4906
        %v4939 = vpack.c.b16 %v4907, %v4907
        %v4940 = vpack.c.b16 %v4908, %v4908
        %v4941 = vpack.c.b16 %v4909, %v4909
        %v4942 = vpack.c.b16 %v4910, %v4910
        %v4943 = vpack.c.b16 %v4911, %v4911
        %v4944 = vpack.c.b16 %v4912, %v4912
        %v4945 = vpack.c.b16 %v4913, %v4913
        %v4946 = vpack.c.b16 %v4914, %v4914
        %v4947 = vpack.c.b16 %v4915, %v4915
        %v4948 = vpack.c.b16 %v4916, %v4916
        %v4949 = vpack.c.b16 %v4917, %v4917
        %v4950 = vpack.c.b16 %v4918, %v4918
        %v4951 = vpack.c.b16 %v4919, %v4919
        %v4952 = vpack.c.b16 %v4920, %v4920
        %v4953 = vpack.c.b16 %v4921, %v4921
        %v4954 = vpack.c.b16 %v4922, %v4922
        %v4955 = vpack.c.b16 %v4923, %v4923
        %v4956 = vpack.c.b16 %v4924, %v4924
        %v4957 = vpack.c.b16 %v4925, %v4925
        %v4958 = vpack.c.b16 %v4926, %v4926
        %v4959 = vpack.c.b16 %v4927, %v4927
        %v4960 = vpack.c.b16 %v4928, %v4928
        %v4961 = vpack.c.b16 %v4929, %v4929
        %v4962 = vpack.c.b16 %v4930, %v4930
        %v4963 = vpack.c.b16 %v4931, %v4931
        %v4964 = vpack.c.b16 %v4932, %v4932
        %v4965 = vpack.c.b16 %v4933, %v4933
        %v4966 = vpack.c.b16 %v4934, %v4934
        %v4967 = vpack.c.b16 %v4935, %v4935
        %v4968 = vpack.c.b16 %v4936, %v4936
        %v4969 = vpack.c.b16 %v4937, %v4937
        %5002 = vst [vmem:[%s274] sm:$0xf] %v4938
        %5003 = vst [vmem:[%s274 + $0x4] sm:$0xf] %v4939
        %5004 = vst [vmem:[%s274 + $0x8] sm:$0xf] %v4940
        %5005 = vst [vmem:[%s274 + $0xc] sm:$0xf] %v4941
        %5006 = vst [vmem:[%s274 + $0x10] sm:$0xf] %v4942
        %5007 = vst [vmem:[%s274 + $0x14] sm:$0xf] %v4943
        %5008 = vst [vmem:[%s274 + $0x18] sm:$0xf] %v4944
        %5009 = vst [vmem:[%s274 + $0x1c] sm:$0xf] %v4945
        %5010 = vst [vmem:[%s274 + $0x20] sm:$0xf] %v4946
        %5011 = vst [vmem:[%s274 + $0x24] sm:$0xf] %v4947
        %5012 = vst [vmem:[%s274 + $0x28] sm:$0xf] %v4948
        %5013 = vst [vmem:[%s274 + $0x2c] sm:$0xf] %v4949
        %5014 = vst [vmem:[%s274 + $0x30] sm:$0xf] %v4950
        %5015 = vst [vmem:[%s274 + $0x34] sm:$0xf] %v4951
        %5016 = vst [vmem:[%s274 + $0x38] sm:$0xf] %v4952
        %5017 = vst [vmem:[%s274 + $0x3c] sm:$0xf] %v4953
        %5018 = vst [vmem:[%s274 + $0x40] sm:$0xf] %v4954
        %5019 = vst [vmem:[%s274 + $0x44] sm:$0xf] %v4955
        %5020 = vst [vmem:[%s274 + $0x48] sm:$0xf] %v4956
        %5021 = vst [vmem:[%s274 + $0x4c] sm:$0xf] %v4957
        %5022 = vst [vmem:[%s274 + $0x50] sm:$0xf] %v4958
        %5023 = vst [vmem:[%s274 + $0x54] sm:$0xf] %v4959
        %5024 = vst [vmem:[%s274 + $0x58] sm:$0xf] %v4960
        %5025 = vst [vmem:[%s274 + $0x5c] sm:$0xf] %v4961
        %5026 = vst [vmem:[%s274 + $0x60] sm:$0xf] %v4962
        %5027 = vst [vmem:[%s274 + $0x64] sm:$0xf] %v4963
        %5028 = vst [vmem:[%s274 + $0x68] sm:$0xf] %v4964
        %5029 = vst [vmem:[%s274 + $0x6c] sm:$0xf] %v4965
        %5030 = vst [vmem:[%s274 + $0x70] sm:$0xf] %v4966
        %5031 = vst [vmem:[%s274 + $0x74] sm:$0xf] %v4967
        %5032 = vst [vmem:[%s274 + $0x78] sm:$0xf] %v4968
        %5033 = vst [vmem:[%s274 + $0x7c] sm:$0xf] %v4969
        %s5034 = sand.u32 %s171, 1
        %s5035 = scalar_lea.sflag [#allocation8], %s5034
        %s5036 = sand.u32 %s171, 1
        %s5037 = smul.addr %s5036, 128
        %s5038 = scalar_lea.vmem [#allocation11], %s5037
        // Predicated region
        $region77: #{tpu_custom_call.1} parent=43 // pred_check
          %p5039 = pneg %p181
        $region78: #{tpu_custom_call.1} parent=43 // pred_check_branch
          %5041 = sbr.rel (%p5039) target = $region80
        $region79: #{tpu_custom_call.1} parent=43 // pred_region
          %s5042 = smul.u32 16, %s28
          %s5044 = ssub.s32 2048, 2048
          %5045 = vsyncadd %s5035, %s5044
          %s5046 = smul.addr %s5042, 2
          %s5047 = smul.addr %s27, 32
          %s5048 = sadd.s32 %s5046, %s5047
          %s5049 = smul.addr %s5048, 64
          %s5050 = scalar_lea.hbm %s7, %s5049
          %s5051 = sshll.u32 %s5038, 4
          %s5052 = int_to_ptr.vmem [resolvable:$true] %s5051
          %5057 = dma.vmem_to_hbm [thread:$0]  %s5052, 2048, %s5050, %s5035, 64, 64, 4
        $region80: #{tpu_custom_call.1} parent=43 // pred_fallthru
          _
      $region44: #{tpu_custom_call.1} parent=5 // pred_fallthru
        _
      %p5058 = scmp.le.s32.totalorder 2, %s18
      // Predicated region
      $region81: #{tpu_custom_call.1} parent=5 // pred_check
        %p5059 = pneg %p5058
      $region82: #{tpu_custom_call.1} parent=5 // pred_check_branch
        %5061 = sbr.rel (%p5059) target = $region84
      $region83: #{tpu_custom_call.1} parent=5 // pred_region
        %s5062 = ssub.s32 %s18, 2
        // Predicated region
        $region85: #{tpu_custom_call.1} parent=83 // pred_check
          %p5063 = pneg %p187
        $region86: #{tpu_custom_call.1} parent=83 // pred_check_branch
          %5065 = sbr.rel (%p5063) target = $region88
        $region87: #{tpu_custom_call.1} parent=83 // pred_region
          %s5066 = sand.u32 %s172, 1
          %s5067 = scalar_lea.sflag [#allocation8], %s5066
          %s5068 = sand.u32 %s172, 1
          %s5069 = smul.addr %s5068, 128
          %s5070 = scalar_lea.vmem [#allocation11], %s5069
          %5071 = dma.done %s5067, 2048
        $region88: #{tpu_custom_call.1} parent=83 // pred_fallthru
          _
      $region84: #{tpu_custom_call.1} parent=5 // pred_fallthru
        _
    $region6: #{tpu_custom_call.1} parent=1 // loop_footer
      %s22 = sadd.s32 1, %s18
    $region7: #{tpu_custom_call.1} parent=1 // loop_footer_branch
      %17 = sbr.rel target = $region3
    $region8: #{tpu_custom_call.1} parent=1 // loop_exit
      _
    %5072 = vsyncpa [#allocation7], 1
    %s5073 = scalar_lea.sflag [#allocation7], 1
    %5074 = vsyncpa %s5073, 1
    %5075 = vsyncpa [#allocation10], 1
    %5076 = vsyncpa [#allocation8], 1
    %s5077 = scalar_lea.sflag [#allocation8], 1
    %5078 = vsyncpa %s5077, 1
  %5079 = vsyncmov [#allocation5]
  %s5080 = vpop.sfrf %5079
  %p5081 = scmp.eq.s32.totalorder %s5080, 0
  %p5082 = pneg %p5081
  %5084 = shalt.err (%p5082)
  %s5085 = scalar_lea.sflag [#allocation5], 1
  %5086 = vsyncmov %s5085
  %s5087 = vpop.sfrf %5086
  %p5088 = scmp.eq.s32.totalorder %s5087, 0
  %p5089 = pneg %p5088
  %5091 = shalt.err (%p5089)

</llo_original>
